<compile_context>
chip_gen: v6e
topology: v6e:2x2x1
jax: 0.10.0
libtpu: 0.0.40
codegen_flags: <defaults>
</compile_context>

<pallas_src>
import jax
import jax.numpy as jnp
from jax.experimental import pallas as pl
from jax.experimental.pallas import tpu as pltpu


def _cqam_perm_kernel(x_ref, c1_ref, c2_ref, c3_ref):
    # Per grid point (c, hi) the kernel sees (C dim squeezed by the BlockSpecs):
    #   x_ref  : (B, th, W) = x[:, c, hi*th:(hi+1)*th, :]
    #   c1_ref : (B, th, W) = c1[c, :, hi*th:(hi+1)*th, :]
    #   c2_ref : (th, B, W) = c2[hi*th:(hi+1)*th, c, :, :]
    #   c3_ref : (W, th, B) = c3[:, c, hi*th:(hi+1)*th, :]
    th = x_ref.shape[1]

    # c1[c, b, h, w] = x[b, c, h, w]  -> straight full-block copy.
    c1_ref[...] = x_ref[...]

    # c2[h, c, b, w] = x[b, c, h, w]   and   c3[w, c, h, b] = x[b, c, h, w].
    # Statically unrolled loop over the H-tile: each step is a sublane-strided
    # (B, W) load, a (B, W) store, and a 2-D (B, W)->(W, B) XLU transpose
    # feeding a sublane-strided store.  Plenty of slack -- kernel is HBM bound.
    for h in range(th):
        row = x_ref[:, h, :]                           # (B, W) = x[:, c, h, :]
        c2_ref[h] = row                                # c2[h, c, :, :]
        c3_ref[:, h, :] = jnp.transpose(row, (1, 0))   # (W, B) -> c3[:, c, h, :]


def _pick_h_tile(B, H, W, itemsize, vmem_budget_bytes=8 << 20):
    """Largest H-tile keeping 4 double-buffered (B, th, W) blocks in budget."""
    per_row = 4 * B * W * itemsize * 2          # 4 blocks, double-buffered
    max_th = max(1, vmem_budget_bytes // per_row)
    if H <= max_th:
        return H                                 # full H (always layout-legal)
    # Otherwise pick the largest multiple-of-8 divisor of H that fits, so the
    # second-to-last block dims satisfy Mosaic's (8, 128) tiling rule.
    for th in range(min(max_th, H), 0, -1):
        if H % th == 0 and th % 8 == 0:
            return th
    return H


def cqam_permutes(x):
    """Compute the three CQAM permutations in one pallas_call."""
    B, C, H, W = x.shape
    nbytes = x.size * x.dtype.itemsize
    th = _pick_h_tile(B, H, W, x.dtype.itemsize)
    grid = (C, H // th)
    return pl.pallas_call(
        _cqam_perm_kernel,
        grid=grid,
        in_specs=[
            # x[:, c, hi, :] -> kernel view (B, th, W)
            pl.BlockSpec((B, None, th, W), lambda c, hi: (0, c, hi, 0)),
        ],
        out_specs=(
            # c1[c, :, hi, :] -> (B, th, W): contiguous slab per c when th==H.
            pl.BlockSpec((None, B, th, W), lambda c, hi: (c, 0, hi, 0)),
            # c2[hi, c, :, :] -> (th, B, W): contiguous (B, W) slab per h.
            pl.BlockSpec((th, None, B, W), lambda c, hi: (hi, c, 0, 0)),
            # c3[:, c, hi, :] -> (W, th, B): contiguous (th, B) slab per w.
            pl.BlockSpec((W, None, th, B), lambda c, hi: (0, c, hi, 0)),
        ),
        out_shape=(
            jax.ShapeDtypeStruct((C, B, H, W), x.dtype),
            jax.ShapeDtypeStruct((H, C, B, W), x.dtype),
            jax.ShapeDtypeStruct((W, C, H, B), x.dtype),
        ),
        compiler_params=pltpu.CompilerParams(
            dimension_semantics=("parallel", "parallel")),
        # Pure data movement: 1 read + 3 writes of the whole array, 0 flops.
        cost_estimate=pl.CostEstimate(
            flops=0, transcendentals=0, bytes_accessed=4 * nbytes),
    )(x)


class CQAM:
    """JAX/Pallas port of the PyTorch CQAM module.

    forward() matches the reference exactly: it computes the three
    permutations, prints their shapes, and returns None.  None of the layers
    declared in the PyTorch __init__ are used by forward().
    """
    # TODO(synk): pool1..4 / conv1..4 / bn1..4 from the PyTorch __init__ are
    # unused by forward() (and conv2..4 / bn2..4 / pool3..4 are missing
    # required constructor args), so no parameters are materialized here.

    def __init__(self, in_channels: int, mid_channels: int, n_anchor: int):
        self.in_channels = in_channels
        self.mid_channels = mid_channels
        self.n_anchor = n_anchor

    def forward(self, x):
        c1, c2, c3 = cqam_permutes(x)
        print(c1.shape, c2.shape, c3.shape)
        return  # matches the PyTorch module: forward returns None


if __name__ == "__main__":
    key = jax.random.PRNGKey(0)
    B, C, H, W = 2, 4, 16, 16
    x = jax.random.normal(key, (B, C, H, W), dtype=jnp.float32)

    # Module forward (prints shapes, returns None -- like PyTorch).
    m = CQAM(in_channels=C, mid_channels=8, n_anchor=3)
    m.forward(x)

    # Run the Pallas kernel directly, block on it, and verify vs. jnp reference.
    c1, c2, c3 = cqam_permutes(x)
    jax.block_until_ready((c1, c2, c3))

    assert c1.shape == (C, B, H, W)
    assert c2.shape == (H, C, B, W)
    assert c3.shape == (W, C, H, B)
    assert jnp.array_equal(c1, jnp.transpose(x, (1, 0, 2, 3)))
    assert jnp.array_equal(c2, jnp.transpose(x, (2, 1, 0, 3)))
    assert jnp.array_equal(c3, jnp.transpose(x, (3, 1, 2, 0)))

    print("KERNEL_OK")
</pallas_src>

<mosaic_0001>
module attributes {stable_mosaic.version = 11 : i64} {
  func.func @_cqam_perm_kernel(%arg0: i32, %arg1: i32, %arg2: memref<2x1x16x16xf32, #tpu.memory_space<vmem>>, %arg3: memref<1x2x16x16xf32, #tpu.memory_space<vmem>>, %arg4: memref<16x1x2x16xf32, #tpu.memory_space<vmem>>, %arg5: memref<16x1x16x2xf32, #tpu.memory_space<vmem>>) attributes {dimension_semantics = [#tpu.dimension_semantics<parallel>, #tpu.dimension_semantics<parallel>], iteration_bounds = array<i64: 4, 1>, scalar_prefetch = 0 : i64, scratch_operands = 0 : i64, tpu.core_type = #tpu.core_type<tc>, window_params = [{transform_indices = @transform_0, window_bounds = array<i64: 2, 1, 16, 16>}, {transform_indices = @transform_1, window_bounds = array<i64: 1, 2, 16, 16>}, {transform_indices = @transform_2, window_bounds = array<i64: 16, 1, 2, 16>}, {transform_indices = @transform_3, window_bounds = array<i64: 16, 1, 16, 2>}]} {
    %c0 = arith.constant 0 : index
    %c0_0 = arith.constant 0 : index
    %c0_1 = arith.constant 0 : index
    %c0_2 = arith.constant 0 : index
    %0 = vector.load %arg2[%c0, %c0_0, %c0_1, %c0_2] : memref<2x1x16x16xf32, #tpu.memory_space<vmem>>, vector<2x1x16x16xf32>
    %1 = vector.shape_cast %0 : vector<2x1x16x16xf32> to vector<2x16x16xf32>
    %c0_3 = arith.constant 0 : index
    %c0_4 = arith.constant 0 : index
    %c0_5 = arith.constant 0 : index
    %c0_6 = arith.constant 0 : index
    %2 = vector.load %arg3[%c0_3, %c0_4, %c0_5, %c0_6] : memref<1x2x16x16xf32, #tpu.memory_space<vmem>>, vector<1x2x16x16xf32>
    %3 = vector.shape_cast %2 : vector<1x2x16x16xf32> to vector<2x16x16xf32>
    %4 = vector.shape_cast %1 : vector<2x16x16xf32> to vector<1x2x16x16xf32>
    tpu.vector_store %arg3[%c0_3, %c0_4, %c0_5, %c0_6], %4 {strides = array<i32>} : memref<1x2x16x16xf32, #tpu.memory_space<vmem>>, vector<1x2x16x16xf32>,
    %c0_7 = arith.constant 0 : index
    %c0_8 = arith.constant 0 : index
    %c0_9 = arith.constant 0 : index
    %c0_10 = arith.constant 0 : index
    %5 = vector.load %arg2[%c0_7, %c0_8, %c0_9, %c0_10] : memref<2x1x16x16xf32, #tpu.memory_space<vmem>>, vector<2x1x1x16xf32>
    %6 = vector.shape_cast %5 : vector<2x1x1x16xf32> to vector<2x16xf32>
    %c0_11 = arith.constant 0 : index
    %c0_12 = arith.constant 0 : index
    %c0_13 = arith.constant 0 : index
    %c0_14 = arith.constant 0 : index
    %7 = vector.load %arg4[%c0_11, %c0_12, %c0_13, %c0_14] : memref<16x1x2x16xf32, #tpu.memory_space<vmem>>, vector<1x1x2x16xf32>
    %8 = vector.shape_cast %7 : vector<1x1x2x16xf32> to vector<2x16xf32>
    %9 = vector.shape_cast %6 : vector<2x16xf32> to vector<1x1x2x16xf32>
    tpu.vector_store %arg4[%c0_11, %c0_12, %c0_13, %c0_14], %9 {strides = array<i32>} : memref<16x1x2x16xf32, #tpu.memory_space<vmem>>, vector<1x1x2x16xf32>,
    %10 = tpu.transpose %6, [1, 0] : vector<2x16xf32> -> vector<16x2xf32>
    %c0_15 = arith.constant 0 : index
    %c0_16 = arith.constant 0 : index
    %c0_17 = arith.constant 0 : index
    %c0_18 = arith.constant 0 : index
    %11 = vector.load %arg5[%c0_15, %c0_16, %c0_17, %c0_18] : memref<16x1x16x2xf32, #tpu.memory_space<vmem>>, vector<16x1x1x2xf32>
    %12 = vector.shape_cast %11 : vector<16x1x1x2xf32> to vector<16x2xf32>
    %13 = vector.shape_cast %10 : vector<16x2xf32> to vector<16x1x1x2xf32>
    tpu.vector_store %arg5[%c0_15, %c0_16, %c0_17, %c0_18], %13 {strides = array<i32>} : memref<16x1x16x2xf32, #tpu.memory_space<vmem>>, vector<16x1x1x2xf32>,
    %c0_19 = arith.constant 0 : index
    %c0_20 = arith.constant 0 : index
    %c1 = arith.constant 1 : index
    %c0_21 = arith.constant 0 : index
    %14 = vector.load %arg2[%c0_19, %c0_20, %c1, %c0_21] : memref<2x1x16x16xf32, #tpu.memory_space<vmem>>, vector<2x1x1x16xf32>
    %15 = vector.shape_cast %14 : vector<2x1x1x16xf32> to vector<2x16xf32>
    %c1_22 = arith.constant 1 : index
    %c0_23 = arith.constant 0 : index
    %c0_24 = arith.constant 0 : index
    %c0_25 = arith.constant 0 : index
    %16 = vector.load %arg4[%c1_22, %c0_23, %c0_24, %c0_25] : memref<16x1x2x16xf32, #tpu.memory_space<vmem>>, vector<1x1x2x16xf32>
    %17 = vector.shape_cast %16 : vector<1x1x2x16xf32> to vector<2x16xf32>
    %18 = vector.shape_cast %15 : vector<2x16xf32> to vector<1x1x2x16xf32>
    tpu.vector_store %arg4[%c1_22, %c0_23, %c0_24, %c0_25], %18 {strides = array<i32>} : memref<16x1x2x16xf32, #tpu.memory_space<vmem>>, vector<1x1x2x16xf32>,
    %19 = tpu.transpose %15, [1, 0] : vector<2x16xf32> -> vector<16x2xf32>
    %c0_26 = arith.constant 0 : index
    %c0_27 = arith.constant 0 : index
    %c1_28 = arith.constant 1 : index
    %c0_29 = arith.constant 0 : index
    %20 = vector.load %arg5[%c0_26, %c0_27, %c1_28, %c0_29] : memref<16x1x16x2xf32, #tpu.memory_space<vmem>>, vector<16x1x1x2xf32>
    %21 = vector.shape_cast %20 : vector<16x1x1x2xf32> to vector<16x2xf32>
    %22 = vector.shape_cast %19 : vector<16x2xf32> to vector<16x1x1x2xf32>
    tpu.vector_store %arg5[%c0_26, %c0_27, %c1_28, %c0_29], %22 {strides = array<i32>} : memref<16x1x16x2xf32, #tpu.memory_space<vmem>>, vector<16x1x1x2xf32>,
    %c0_30 = arith.constant 0 : index
    %c0_31 = arith.constant 0 : index
    %c2 = arith.constant 2 : index
    %c0_32 = arith.constant 0 : index
    %23 = vector.load %arg2[%c0_30, %c0_31, %c2, %c0_32] : memref<2x1x16x16xf32, #tpu.memory_space<vmem>>, vector<2x1x1x16xf32>
    %24 = vector.shape_cast %23 : vector<2x1x1x16xf32> to vector<2x16xf32>
    %c2_33 = arith.constant 2 : index
    %c0_34 = arith.constant 0 : index
    %c0_35 = arith.constant 0 : index
    %c0_36 = arith.constant 0 : index
    %25 = vector.load %arg4[%c2_33, %c0_34, %c0_35, %c0_36] : memref<16x1x2x16xf32, #tpu.memory_space<vmem>>, vector<1x1x2x16xf32>
    %26 = vector.shape_cast %25 : vector<1x1x2x16xf32> to vector<2x16xf32>
    %27 = vector.shape_cast %24 : vector<2x16xf32> to vector<1x1x2x16xf32>
    tpu.vector_store %arg4[%c2_33, %c0_34, %c0_35, %c0_36], %27 {strides = array<i32>} : memref<16x1x2x16xf32, #tpu.memory_space<vmem>>, vector<1x1x2x16xf32>,
    %28 = tpu.transpose %24, [1, 0] : vector<2x16xf32> -> vector<16x2xf32>
    %c0_37 = arith.constant 0 : index
    %c0_38 = arith.constant 0 : index
    %c2_39 = arith.constant 2 : index
    %c0_40 = arith.constant 0 : index
    %29 = vector.load %arg5[%c0_37, %c0_38, %c2_39, %c0_40] : memref<16x1x16x2xf32, #tpu.memory_space<vmem>>, vector<16x1x1x2xf32>
    %30 = vector.shape_cast %29 : vector<16x1x1x2xf32> to vector<16x2xf32>
    %31 = vector.shape_cast %28 : vector<16x2xf32> to vector<16x1x1x2xf32>
    tpu.vector_store %arg5[%c0_37, %c0_38, %c2_39, %c0_40], %31 {strides = array<i32>} : memref<16x1x16x2xf32, #tpu.memory_space<vmem>>, vector<16x1x1x2xf32>,
    %c0_41 = arith.constant 0 : index
    %c0_42 = arith.constant 0 : index
    %c3 = arith.constant 3 : index
    %c0_43 = arith.constant 0 : index
    %32 = vector.load %arg2[%c0_41, %c0_42, %c3, %c0_43] : memref<2x1x16x16xf32, #tpu.memory_space<vmem>>, vector<2x1x1x16xf32>
    %33 = vector.shape_cast %32 : vector<2x1x1x16xf32> to vector<2x16xf32>
    %c3_44 = arith.constant 3 : index
    %c0_45 = arith.constant 0 : index
    %c0_46 = arith.constant 0 : index
    %c0_47 = arith.constant 0 : index
    %34 = vector.load %arg4[%c3_44, %c0_45, %c0_46, %c0_47] : memref<16x1x2x16xf32, #tpu.memory_space<vmem>>, vector<1x1x2x16xf32>
    %35 = vector.shape_cast %34 : vector<1x1x2x16xf32> to vector<2x16xf32>
    %36 = vector.shape_cast %33 : vector<2x16xf32> to vector<1x1x2x16xf32>
    tpu.vector_store %arg4[%c3_44, %c0_45, %c0_46, %c0_47], %36 {strides = array<i32>} : memref<16x1x2x16xf32, #tpu.memory_space<vmem>>, vector<1x1x2x16xf32>,
    %37 = tpu.transpose %33, [1, 0] : vector<2x16xf32> -> vector<16x2xf32>
    %c0_48 = arith.constant 0 : index
    %c0_49 = arith.constant 0 : index
    %c3_50 = arith.constant 3 : index
    %c0_51 = arith.constant 0 : index
    %38 = vector.load %arg5[%c0_48, %c0_49, %c3_50, %c0_51] : memref<16x1x16x2xf32, #tpu.memory_space<vmem>>, vector<16x1x1x2xf32>
    %39 = vector.shape_cast %38 : vector<16x1x1x2xf32> to vector<16x2xf32>
    %40 = vector.shape_cast %37 : vector<16x2xf32> to vector<16x1x1x2xf32>
    tpu.vector_store %arg5[%c0_48, %c0_49, %c3_50, %c0_51], %40 {strides = array<i32>} : memref<16x1x16x2xf32, #tpu.memory_space<vmem>>, vector<16x1x1x2xf32>,
    %c0_52 = arith.constant 0 : index
    %c0_53 = arith.constant 0 : index
    %c4 = arith.constant 4 : index
    %c0_54 = arith.constant 0 : index
    %41 = vector.load %arg2[%c0_52, %c0_53, %c4, %c0_54] : memref<2x1x16x16xf32, #tpu.memory_space<vmem>>, vector<2x1x1x16xf32>
    %42 = vector.shape_cast %41 : vector<2x1x1x16xf32> to vector<2x16xf32>
    %c4_55 = arith.constant 4 : index
    %c0_56 = arith.constant 0 : index
    %c0_57 = arith.constant 0 : index
    %c0_58 = arith.constant 0 : index
    %43 = vector.load %arg4[%c4_55, %c0_56, %c0_57, %c0_58] : memref<16x1x2x16xf32, #tpu.memory_space<vmem>>, vector<1x1x2x16xf32>
    %44 = vector.shape_cast %43 : vector<1x1x2x16xf32> to vector<2x16xf32>
    %45 = vector.shape_cast %42 : vector<2x16xf32> to vector<1x1x2x16xf32>
    tpu.vector_store %arg4[%c4_55, %c0_56, %c0_57, %c0_58], %45 {strides = array<i32>} : memref<16x1x2x16xf32, #tpu.memory_space<vmem>>, vector<1x1x2x16xf32>,
    %46 = tpu.transpose %42, [1, 0] : vector<2x16xf32> -> vector<16x2xf32>
    %c0_59 = arith.constant 0 : index
    %c0_60 = arith.constant 0 : index
    %c4_61 = arith.constant 4 : index
    %c0_62 = arith.constant 0 : index
    %47 = vector.load %arg5[%c0_59, %c0_60, %c4_61, %c0_62] : memref<16x1x16x2xf32, #tpu.memory_space<vmem>>, vector<16x1x1x2xf32>
    %48 = vector.shape_cast %47 : vector<16x1x1x2xf32> to vector<16x2xf32>
    %49 = vector.shape_cast %46 : vector<16x2xf32> to vector<16x1x1x2xf32>
    tpu.vector_store %arg5[%c0_59, %c0_60, %c4_61, %c0_62], %49 {strides = array<i32>} : memref<16x1x16x2xf32, #tpu.memory_space<vmem>>, vector<16x1x1x2xf32>,
    %c0_63 = arith.constant 0 : index
    %c0_64 = arith.constant 0 : index
    %c5 = arith.constant 5 : index
    %c0_65 = arith.constant 0 : index
    %50 = vector.load %arg2[%c0_63, %c0_64, %c5, %c0_65] : memref<2x1x16x16xf32, #tpu.memory_space<vmem>>, vector<2x1x1x16xf32>
    %51 = vector.shape_cast %50 : vector<2x1x1x16xf32> to vector<2x16xf32>
    %c5_66 = arith.constant 5 : index
    %c0_67 = arith.constant 0 : index
    %c0_68 = arith.constant 0 : index
    %c0_69 = arith.constant 0 : index
    %52 = vector.load %arg4[%c5_66, %c0_67, %c0_68, %c0_69] : memref<16x1x2x16xf32, #tpu.memory_space<vmem>>, vector<1x1x2x16xf32>
    %53 = vector.shape_cast %52 : vector<1x1x2x16xf32> to vector<2x16xf32>
    %54 = vector.shape_cast %51 : vector<2x16xf32> to vector<1x1x2x16xf32>
    tpu.vector_store %arg4[%c5_66, %c0_67, %c0_68, %c0_69], %54 {strides = array<i32>} : memref<16x1x2x16xf32, #tpu.memory_space<vmem>>, vector<1x1x2x16xf32>,
    %55 = tpu.transpose %51, [1, 0] : vector<2x16xf32> -> vector<16x2xf32>
    %c0_70 = arith.constant 0 : index
    %c0_71 = arith.constant 0 : index
    %c5_72 = arith.constant 5 : index
    %c0_73 = arith.constant 0 : index
    %56 = vector.load %arg5[%c0_70, %c0_71, %c5_72, %c0_73] : memref<16x1x16x2xf32, #tpu.memory_space<vmem>>, vector<16x1x1x2xf32>
    %57 = vector.shape_cast %56 : vector<16x1x1x2xf32> to vector<16x2xf32>
    %58 = vector.shape_cast %55 : vector<16x2xf32> to vector<16x1x1x2xf32>
    tpu.vector_store %arg5[%c0_70, %c0_71, %c5_72, %c0_73], %58 {strides = array<i32>} : memref<16x1x16x2xf32, #tpu.memory_space<vmem>>, vector<16x1x1x2xf32>,
    %c0_74 = arith.constant 0 : index
    %c0_75 = arith.constant 0 : index
    %c6 = arith.constant 6 : index
    %c0_76 = arith.constant 0 : index
    %59 = vector.load %arg2[%c0_74, %c0_75, %c6, %c0_76] : memref<2x1x16x16xf32, #tpu.memory_space<vmem>>, vector<2x1x1x16xf32>
    %60 = vector.shape_cast %59 : vector<2x1x1x16xf32> to vector<2x16xf32>
    %c6_77 = arith.constant 6 : index
    %c0_78 = arith.constant 0 : index
    %c0_79 = arith.constant 0 : index
    %c0_80 = arith.constant 0 : index
    %61 = vector.load %arg4[%c6_77, %c0_78, %c0_79, %c0_80] : memref<16x1x2x16xf32, #tpu.memory_space<vmem>>, vector<1x1x2x16xf32>
    %62 = vector.shape_cast %61 : vector<1x1x2x16xf32> to vector<2x16xf32>
    %63 = vector.shape_cast %60 : vector<2x16xf32> to vector<1x1x2x16xf32>
    tpu.vector_store %arg4[%c6_77, %c0_78, %c0_79, %c0_80], %63 {strides = array<i32>} : memref<16x1x2x16xf32, #tpu.memory_space<vmem>>, vector<1x1x2x16xf32>,
    %64 = tpu.transpose %60, [1, 0] : vector<2x16xf32> -> vector<16x2xf32>
    %c0_81 = arith.constant 0 : index
    %c0_82 = arith.constant 0 : index
    %c6_83 = arith.constant 6 : index
    %c0_84 = arith.constant 0 : index
    %65 = vector.load %arg5[%c0_81, %c0_82, %c6_83, %c0_84] : memref<16x1x16x2xf32, #tpu.memory_space<vmem>>, vector<16x1x1x2xf32>
    %66 = vector.shape_cast %65 : vector<16x1x1x2xf32> to vector<16x2xf32>
    %67 = vector.shape_cast %64 : vector<16x2xf32> to vector<16x1x1x2xf32>
    tpu.vector_store %arg5[%c0_81, %c0_82, %c6_83, %c0_84], %67 {strides = array<i32>} : memref<16x1x16x2xf32, #tpu.memory_space<vmem>>, vector<16x1x1x2xf32>,
    %c0_85 = arith.constant 0 : index
    %c0_86 = arith.constant 0 : index
    %c7 = arith.constant 7 : index
    %c0_87 = arith.constant 0 : index
    %68 = vector.load %arg2[%c0_85, %c0_86, %c7, %c0_87] : memref<2x1x16x16xf32, #tpu.memory_space<vmem>>, vector<2x1x1x16xf32>
    %69 = vector.shape_cast %68 : vector<2x1x1x16xf32> to vector<2x16xf32>
    %c7_88 = arith.constant 7 : index
    %c0_89 = arith.constant 0 : index
    %c0_90 = arith.constant 0 : index
    %c0_91 = arith.constant 0 : index
    %70 = vector.load %arg4[%c7_88, %c0_89, %c0_90, %c0_91] : memref<16x1x2x16xf32, #tpu.memory_space<vmem>>, vector<1x1x2x16xf32>
    %71 = vector.shape_cast %70 : vector<1x1x2x16xf32> to vector<2x16xf32>
    %72 = vector.shape_cast %69 : vector<2x16xf32> to vector<1x1x2x16xf32>
    tpu.vector_store %arg4[%c7_88, %c0_89, %c0_90, %c0_91], %72 {strides = array<i32>} : memref<16x1x2x16xf32, #tpu.memory_space<vmem>>, vector<1x1x2x16xf32>,
    %73 = tpu.transpose %69, [1, 0] : vector<2x16xf32> -> vector<16x2xf32>
    %c0_92 = arith.constant 0 : index
    %c0_93 = arith.constant 0 : index
    %c7_94 = arith.constant 7 : index
    %c0_95 = arith.constant 0 : index
    %74 = vector.load %arg5[%c0_92, %c0_93, %c7_94, %c0_95] : memref<16x1x16x2xf32, #tpu.memory_space<vmem>>, vector<16x1x1x2xf32>
    %75 = vector.shape_cast %74 : vector<16x1x1x2xf32> to vector<16x2xf32>
    %76 = vector.shape_cast %73 : vector<16x2xf32> to vector<16x1x1x2xf32>
    tpu.vector_store %arg5[%c0_92, %c0_93, %c7_94, %c0_95], %76 {strides = array<i32>} : memref<16x1x16x2xf32, #tpu.memory_space<vmem>>, vector<16x1x1x2xf32>,
    %c0_96 = arith.constant 0 : index
    %c0_97 = arith.constant 0 : index
    %c8 = arith.constant 8 : index
    %c0_98 = arith.constant 0 : index
    %77 = vector.load %arg2[%c0_96, %c0_97, %c8, %c0_98] : memref<2x1x16x16xf32, #tpu.memory_space<vmem>>, vector<2x1x1x16xf32>
    %78 = vector.shape_cast %77 : vector<2x1x1x16xf32> to vector<2x16xf32>
    %c8_99 = arith.constant 8 : index
    %c0_100 = arith.constant 0 : index
    %c0_101 = arith.constant 0 : index
    %c0_102 = arith.constant 0 : index
    %79 = vector.load %arg4[%c8_99, %c0_100, %c0_101, %c0_102] : memref<16x1x2x16xf32, #tpu.memory_space<vmem>>, vector<1x1x2x16xf32>
    %80 = vector.shape_cast %79 : vector<1x1x2x16xf32> to vector<2x16xf32>
    %81 = vector.shape_cast %78 : vector<2x16xf32> to vector<1x1x2x16xf32>
    tpu.vector_store %arg4[%c8_99, %c0_100, %c0_101, %c0_102], %81 {strides = array<i32>} : memref<16x1x2x16xf32, #tpu.memory_space<vmem>>, vector<1x1x2x16xf32>,
    %82 = tpu.transpose %78, [1, 0] : vector<2x16xf32> -> vector<16x2xf32>
    %c0_103 = arith.constant 0 : index
    %c0_104 = arith.constant 0 : index
    %c8_105 = arith.constant 8 : index
    %c0_106 = arith.constant 0 : index
    %83 = vector.load %arg5[%c0_103, %c0_104, %c8_105, %c0_106] : memref<16x1x16x2xf32, #tpu.memory_space<vmem>>, vector<16x1x1x2xf32>
    %84 = vector.shape_cast %83 : vector<16x1x1x2xf32> to vector<16x2xf32>
    %85 = vector.shape_cast %82 : vector<16x2xf32> to vector<16x1x1x2xf32>
    tpu.vector_store %arg5[%c0_103, %c0_104, %c8_105, %c0_106], %85 {strides = array<i32>} : memref<16x1x16x2xf32, #tpu.memory_space<vmem>>, vector<16x1x1x2xf32>,
    %c0_107 = arith.constant 0 : index
    %c0_108 = arith.constant 0 : index
    %c9 = arith.constant 9 : index
    %c0_109 = arith.constant 0 : index
    %86 = vector.load %arg2[%c0_107, %c0_108, %c9, %c0_109] : memref<2x1x16x16xf32, #tpu.memory_space<vmem>>, vector<2x1x1x16xf32>
    %87 = vector.shape_cast %86 : vector<2x1x1x16xf32> to vector<2x16xf32>
    %c9_110 = arith.constant 9 : index
    %c0_111 = arith.constant 0 : index
    %c0_112 = arith.constant 0 : index
    %c0_113 = arith.constant 0 : index
    %88 = vector.load %arg4[%c9_110, %c0_111, %c0_112, %c0_113] : memref<16x1x2x16xf32, #tpu.memory_space<vmem>>, vector<1x1x2x16xf32>
    %89 = vector.shape_cast %88 : vector<1x1x2x16xf32> to vector<2x16xf32>
    %90 = vector.shape_cast %87 : vector<2x16xf32> to vector<1x1x2x16xf32>
    tpu.vector_store %arg4[%c9_110, %c0_111, %c0_112, %c0_113], %90 {strides = array<i32>} : memref<16x1x2x16xf32, #tpu.memory_space<vmem>>, vector<1x1x2x16xf32>,
    %91 = tpu.transpose %87, [1, 0] : vector<2x16xf32> -> vector<16x2xf32>
    %c0_114 = arith.constant 0 : index
    %c0_115 = arith.constant 0 : index
    %c9_116 = arith.constant 9 : index
    %c0_117 = arith.constant 0 : index
    %92 = vector.load %arg5[%c0_114, %c0_115, %c9_116, %c0_117] : memref<16x1x16x2xf32, #tpu.memory_space<vmem>>, vector<16x1x1x2xf32>
    %93 = vector.shape_cast %92 : vector<16x1x1x2xf32> to vector<16x2xf32>
    %94 = vector.shape_cast %91 : vector<16x2xf32> to vector<16x1x1x2xf32>
    tpu.vector_store %arg5[%c0_114, %c0_115, %c9_116, %c0_117], %94 {strides = array<i32>} : memref<16x1x16x2xf32, #tpu.memory_space<vmem>>, vector<16x1x1x2xf32>,
    %c0_118 = arith.constant 0 : index
    %c0_119 = arith.constant 0 : index
    %c10 = arith.constant 10 : index
    %c0_120 = arith.constant 0 : index
    %95 = vector.load %arg2[%c0_118, %c0_119, %c10, %c0_120] : memref<2x1x16x16xf32, #tpu.memory_space<vmem>>, vector<2x1x1x16xf32>
    %96 = vector.shape_cast %95 : vector<2x1x1x16xf32> to vector<2x16xf32>
    %c10_121 = arith.constant 10 : index
    %c0_122 = arith.constant 0 : index
    %c0_123 = arith.constant 0 : index
    %c0_124 = arith.constant 0 : index
    %97 = vector.load %arg4[%c10_121, %c0_122, %c0_123, %c0_124] : memref<16x1x2x16xf32, #tpu.memory_space<vmem>>, vector<1x1x2x16xf32>
    %98 = vector.shape_cast %97 : vector<1x1x2x16xf32> to vector<2x16xf32>
    %99 = vector.shape_cast %96 : vector<2x16xf32> to vector<1x1x2x16xf32>
    tpu.vector_store %arg4[%c10_121, %c0_122, %c0_123, %c0_124], %99 {strides = array<i32>} : memref<16x1x2x16xf32, #tpu.memory_space<vmem>>, vector<1x1x2x16xf32>,
    %100 = tpu.transpose %96, [1, 0] : vector<2x16xf32> -> vector<16x2xf32>
    %c0_125 = arith.constant 0 : index
    %c0_126 = arith.constant 0 : index
    %c10_127 = arith.constant 10 : index
    %c0_128 = arith.constant 0 : index
    %101 = vector.load %arg5[%c0_125, %c0_126, %c10_127, %c0_128] : memref<16x1x16x2xf32, #tpu.memory_space<vmem>>, vector<16x1x1x2xf32>
    %102 = vector.shape_cast %101 : vector<16x1x1x2xf32> to vector<16x2xf32>
    %103 = vector.shape_cast %100 : vector<16x2xf32> to vector<16x1x1x2xf32>
    tpu.vector_store %arg5[%c0_125, %c0_126, %c10_127, %c0_128], %103 {strides = array<i32>} : memref<16x1x16x2xf32, #tpu.memory_space<vmem>>, vector<16x1x1x2xf32>,
    %c0_129 = arith.constant 0 : index
    %c0_130 = arith.constant 0 : index
    %c11 = arith.constant 11 : index
    %c0_131 = arith.constant 0 : index
    %104 = vector.load %arg2[%c0_129, %c0_130, %c11, %c0_131] : memref<2x1x16x16xf32, #tpu.memory_space<vmem>>, vector<2x1x1x16xf32>
    %105 = vector.shape_cast %104 : vector<2x1x1x16xf32> to vector<2x16xf32>
    %c11_132 = arith.constant 11 : index
    %c0_133 = arith.constant 0 : index
    %c0_134 = arith.constant 0 : index
    %c0_135 = arith.constant 0 : index
    %106 = vector.load %arg4[%c11_132, %c0_133, %c0_134, %c0_135] : memref<16x1x2x16xf32, #tpu.memory_space<vmem>>, vector<1x1x2x16xf32>
    %107 = vector.shape_cast %106 : vector<1x1x2x16xf32> to vector<2x16xf32>
    %108 = vector.shape_cast %105 : vector<2x16xf32> to vector<1x1x2x16xf32>
    tpu.vector_store %arg4[%c11_132, %c0_133, %c0_134, %c0_135], %108 {strides = array<i32>} : memref<16x1x2x16xf32, #tpu.memory_space<vmem>>, vector<1x1x2x16xf32>,
    %109 = tpu.transpose %105, [1, 0] : vector<2x16xf32> -> vector<16x2xf32>
    %c0_136 = arith.constant 0 : index
    %c0_137 = arith.constant 0 : index
    %c11_138 = arith.constant 11 : index
    %c0_139 = arith.constant 0 : index
    %110 = vector.load %arg5[%c0_136, %c0_137, %c11_138, %c0_139] : memref<16x1x16x2xf32, #tpu.memory_space<vmem>>, vector<16x1x1x2xf32>
    %111 = vector.shape_cast %110 : vector<16x1x1x2xf32> to vector<16x2xf32>
    %112 = vector.shape_cast %109 : vector<16x2xf32> to vector<16x1x1x2xf32>
    tpu.vector_store %arg5[%c0_136, %c0_137, %c11_138, %c0_139], %112 {strides = array<i32>} : memref<16x1x16x2xf32, #tpu.memory_space<vmem>>, vector<16x1x1x2xf32>,
    %c0_140 = arith.constant 0 : index
    %c0_141 = arith.constant 0 : index
    %c12 = arith.constant 12 : index
    %c0_142 = arith.constant 0 : index
    %113 = vector.load %arg2[%c0_140, %c0_141, %c12, %c0_142] : memref<2x1x16x16xf32, #tpu.memory_space<vmem>>, vector<2x1x1x16xf32>
    %114 = vector.shape_cast %113 : vector<2x1x1x16xf32> to vector<2x16xf32>
    %c12_143 = arith.constant 12 : index
    %c0_144 = arith.constant 0 : index
    %c0_145 = arith.constant 0 : index
    %c0_146 = arith.constant 0 : index
    %115 = vector.load %arg4[%c12_143, %c0_144, %c0_145, %c0_146] : memref<16x1x2x16xf32, #tpu.memory_space<vmem>>, vector<1x1x2x16xf32>
    %116 = vector.shape_cast %115 : vector<1x1x2x16xf32> to vector<2x16xf32>
    %117 = vector.shape_cast %114 : vector<2x16xf32> to vector<1x1x2x16xf32>
    tpu.vector_store %arg4[%c12_143, %c0_144, %c0_145, %c0_146], %117 {strides = array<i32>} : memref<16x1x2x16xf32, #tpu.memory_space<vmem>>, vector<1x1x2x16xf32>,
    %118 = tpu.transpose %114, [1, 0] : vector<2x16xf32> -> vector<16x2xf32>
    %c0_147 = arith.constant 0 : index
    %c0_148 = arith.constant 0 : index
    %c12_149 = arith.constant 12 : index
    %c0_150 = arith.constant 0 : index
    %119 = vector.load %arg5[%c0_147, %c0_148, %c12_149, %c0_150] : memref<16x1x16x2xf32, #tpu.memory_space<vmem>>, vector<16x1x1x2xf32>
    %120 = vector.shape_cast %119 : vector<16x1x1x2xf32> to vector<16x2xf32>
    %121 = vector.shape_cast %118 : vector<16x2xf32> to vector<16x1x1x2xf32>
    tpu.vector_store %arg5[%c0_147, %c0_148, %c12_149, %c0_150], %121 {strides = array<i32>} : memref<16x1x16x2xf32, #tpu.memory_space<vmem>>, vector<16x1x1x2xf32>,
    %c0_151 = arith.constant 0 : index
    %c0_152 = arith.constant 0 : index
    %c13 = arith.constant 13 : index
    %c0_153 = arith.constant 0 : index
    %122 = vector.load %arg2[%c0_151, %c0_152, %c13, %c0_153] : memref<2x1x16x16xf32, #tpu.memory_space<vmem>>, vector<2x1x1x16xf32>
    %123 = vector.shape_cast %122 : vector<2x1x1x16xf32> to vector<2x16xf32>
    %c13_154 = arith.constant 13 : index
    %c0_155 = arith.constant 0 : index
    %c0_156 = arith.constant 0 : index
    %c0_157 = arith.constant 0 : index
    %124 = vector.load %arg4[%c13_154, %c0_155, %c0_156, %c0_157] : memref<16x1x2x16xf32, #tpu.memory_space<vmem>>, vector<1x1x2x16xf32>
    %125 = vector.shape_cast %124 : vector<1x1x2x16xf32> to vector<2x16xf32>
    %126 = vector.shape_cast %123 : vector<2x16xf32> to vector<1x1x2x16xf32>
    tpu.vector_store %arg4[%c13_154, %c0_155, %c0_156, %c0_157], %126 {strides = array<i32>} : memref<16x1x2x16xf32, #tpu.memory_space<vmem>>, vector<1x1x2x16xf32>,
    %127 = tpu.transpose %123, [1, 0] : vector<2x16xf32> -> vector<16x2xf32>
    %c0_158 = arith.constant 0 : index
    %c0_159 = arith.constant 0 : index
    %c13_160 = arith.constant 13 : index
    %c0_161 = arith.constant 0 : index
    %128 = vector.load %arg5[%c0_158, %c0_159, %c13_160, %c0_161] : memref<16x1x16x2xf32, #tpu.memory_space<vmem>>, vector<16x1x1x2xf32>
    %129 = vector.shape_cast %128 : vector<16x1x1x2xf32> to vector<16x2xf32>
    %130 = vector.shape_cast %127 : vector<16x2xf32> to vector<16x1x1x2xf32>
    tpu.vector_store %arg5[%c0_158, %c0_159, %c13_160, %c0_161], %130 {strides = array<i32>} : memref<16x1x16x2xf32, #tpu.memory_space<vmem>>, vector<16x1x1x2xf32>,
    %c0_162 = arith.constant 0 : index
    %c0_163 = arith.constant 0 : index
    %c14 = arith.constant 14 : index
    %c0_164 = arith.constant 0 : index
    %131 = vector.load %arg2[%c0_162, %c0_163, %c14, %c0_164] : memref<2x1x16x16xf32, #tpu.memory_space<vmem>>, vector<2x1x1x16xf32>
    %132 = vector.shape_cast %131 : vector<2x1x1x16xf32> to vector<2x16xf32>
    %c14_165 = arith.constant 14 : index
    %c0_166 = arith.constant 0 : index
    %c0_167 = arith.constant 0 : index
    %c0_168 = arith.constant 0 : index
    %133 = vector.load %arg4[%c14_165, %c0_166, %c0_167, %c0_168] : memref<16x1x2x16xf32, #tpu.memory_space<vmem>>, vector<1x1x2x16xf32>
    %134 = vector.shape_cast %133 : vector<1x1x2x16xf32> to vector<2x16xf32>
    %135 = vector.shape_cast %132 : vector<2x16xf32> to vector<1x1x2x16xf32>
    tpu.vector_store %arg4[%c14_165, %c0_166, %c0_167, %c0_168], %135 {strides = array<i32>} : memref<16x1x2x16xf32, #tpu.memory_space<vmem>>, vector<1x1x2x16xf32>,
    %136 = tpu.transpose %132, [1, 0] : vector<2x16xf32> -> vector<16x2xf32>
    %c0_169 = arith.constant 0 : index
    %c0_170 = arith.constant 0 : index
    %c14_171 = arith.constant 14 : index
    %c0_172 = arith.constant 0 : index
    %137 = vector.load %arg5[%c0_169, %c0_170, %c14_171, %c0_172] : memref<16x1x16x2xf32, #tpu.memory_space<vmem>>, vector<16x1x1x2xf32>
    %138 = vector.shape_cast %137 : vector<16x1x1x2xf32> to vector<16x2xf32>
    %139 = vector.shape_cast %136 : vector<16x2xf32> to vector<16x1x1x2xf32>
    tpu.vector_store %arg5[%c0_169, %c0_170, %c14_171, %c0_172], %139 {strides = array<i32>} : memref<16x1x16x2xf32, #tpu.memory_space<vmem>>, vector<16x1x1x2xf32>,
    %c0_173 = arith.constant 0 : index
    %c0_174 = arith.constant 0 : index
    %c15 = arith.constant 15 : index
    %c0_175 = arith.constant 0 : index
    %140 = vector.load %arg2[%c0_173, %c0_174, %c15, %c0_175] : memref<2x1x16x16xf32, #tpu.memory_space<vmem>>, vector<2x1x1x16xf32>
    %141 = vector.shape_cast %140 : vector<2x1x1x16xf32> to vector<2x16xf32>
    %c15_176 = arith.constant 15 : index
    %c0_177 = arith.constant 0 : index
    %c0_178 = arith.constant 0 : index
    %c0_179 = arith.constant 0 : index
    %142 = vector.load %arg4[%c15_176, %c0_177, %c0_178, %c0_179] : memref<16x1x2x16xf32, #tpu.memory_space<vmem>>, vector<1x1x2x16xf32>
    %143 = vector.shape_cast %142 : vector<1x1x2x16xf32> to vector<2x16xf32>
    %144 = vector.shape_cast %141 : vector<2x16xf32> to vector<1x1x2x16xf32>
    tpu.vector_store %arg4[%c15_176, %c0_177, %c0_178, %c0_179], %144 {strides = array<i32>} : memref<16x1x2x16xf32, #tpu.memory_space<vmem>>, vector<1x1x2x16xf32>,
    %145 = tpu.transpose %141, [1, 0] : vector<2x16xf32> -> vector<16x2xf32>
    %c0_180 = arith.constant 0 : index
    %c0_181 = arith.constant 0 : index
    %c15_182 = arith.constant 15 : index
    %c0_183 = arith.constant 0 : index
    %146 = vector.load %arg5[%c0_180, %c0_181, %c15_182, %c0_183] : memref<16x1x16x2xf32, #tpu.memory_space<vmem>>, vector<16x1x1x2xf32>
    %147 = vector.shape_cast %146 : vector<16x1x1x2xf32> to vector<16x2xf32>
    %148 = vector.shape_cast %145 : vector<16x2xf32> to vector<16x1x1x2xf32>
    tpu.vector_store %arg5[%c0_180, %c0_181, %c15_182, %c0_183], %148 {strides = array<i32>} : memref<16x1x16x2xf32, #tpu.memory_space<vmem>>, vector<16x1x1x2xf32>,
    return
  }
  func.func @transform_0(%arg0: i32, %arg1: i32) -> (i32, i32, i32, i32) {
    %c0_i32 = arith.constant 0 : i32
    %c0_i32_0 = arith.constant 0 : i32
    %c0_i32_1 = arith.constant 0 : i32
    return %c0_i32, %arg0, %arg1, %c0_i32_0 : i32, i32, i32, i32
  }
  func.func @transform_1(%arg0: i32, %arg1: i32) -> (i32, i32, i32, i32) {
    %c0_i32 = arith.constant 0 : i32
    %c0_i32_0 = arith.constant 0 : i32
    %c0_i32_1 = arith.constant 0 : i32
    return %arg0, %c0_i32, %arg1, %c0_i32_0 : i32, i32, i32, i32
  }
  func.func @transform_2(%arg0: i32, %arg1: i32) -> (i32, i32, i32, i32) {
    %c0_i32 = arith.constant 0 : i32
    %c0_i32_0 = arith.constant 0 : i32
    %c0_i32_1 = arith.constant 0 : i32
    return %arg1, %arg0, %c0_i32, %c0_i32_0 : i32, i32, i32, i32
  }
  func.func @transform_3(%arg0: i32, %arg1: i32) -> (i32, i32, i32, i32) {
    %c0_i32 = arith.constant 0 : i32
    %c0_i32_0 = arith.constant 0 : i32
    %c0_i32_1 = arith.constant 0 : i32
    return %c0_i32, %arg0, %arg1, %c0_i32_0 : i32, i32, i32, i32
  }
}

</mosaic_0001>

<llo_original>
// kernel: tpu_custom_call.1
$region0: #{tpu_custom_call.1}
  #allocation0 [shape = 'u32[]', space=smem, size = 0x4, offset = 0x4, fixed_abs, tag = 'smem constant byte address 0x4 - core index']
  #allocation1 [shape = 'u32[144,128]{1,0:T(1,128)}', space=vmem, size = 0x12000, scoped, tag = 'internal scratch']
  #allocation9 [shape = 's32[]', space=sflag, size = 0x4, offset = 0, fixed_abs, tag = 'sflag constant byte address 0x0 - dummy sync flag']
  %s0 = inlined_call_operand.hbm [shape: f32[2,4,16,16], index: 0, kind: input, shape index: {}]
  %s1 = inlined_call_operand.hbm [shape: f32[4,2,16,16], index: 1, kind: output, shape index: {0}]
  %s2 = inlined_call_operand.hbm [shape: f32[16,4,2,16], index: 2, kind: output, shape index: {1}]
  %s3 = inlined_call_operand.vmem [shape: f32[16,4,16,2], index: 3, kind: output, shape index: {2}]
  %4 = xla_tuple %s1, %s2, %s3
  %s5 = sld [smem:[#allocation0]]
  $region91: #{tpu_custom_call.1} parent=0
    _
  %s7 = ssub.s32 1, %s5
  %s8 = scalar_select 0, %s7, %s5
  $region1: #{tpu_custom_call.1} parent=0
    #allocation2 [shape = 'u8[32768]{0}', space=vmem, size = 0x8000, scoped, tag = 'input window, operand 0']
    #allocation3 [shape = 's32[2]{0}', space=sflag, size = 0x8, scoped, tag = 'scoped memory for tpu_custom_call.1']
    #allocation4 [shape = 's32[2]{0}', space=sflag, size = 0x8, scoped, tag = 'scoped memory for tpu_custom_call.1']
    #allocation5 [shape = 'u8[32768]{0}', space=vmem, size = 0x8000, scoped, tag = 'output window, operand 0']
    #allocation6 [shape = 'u8[32768]{0}', space=vmem, size = 0x8000, scoped, tag = 'output window, operand 1']
    #allocation7 [shape = 's32[2]{0}', space=sflag, size = 0x8, scoped, tag = 'scoped memory for tpu_custom_call.1']
    #allocation8 [shape = 'u8[262144]{0}', space=vmem, size = 0x40000, scoped, tag = 'output window, operand 2']
    %9 = vsyncpa [#allocation3], 0
    %s10 = scalar_lea.sflag [#allocation3], 1
    %11 = vsyncpa %s10, 0
    %12 = vsyncpa [#allocation4], 0
    %s13 = scalar_lea.sflag [#allocation4], 1
    %14 = vsyncpa %s13, 0
    %15 = vsyncpa [#allocation7], 0
    %s16 = scalar_lea.sflag [#allocation7], 1
    %17 = vsyncpa %s16, 0
    loop: start=0, step=1, limit=6
    $region2: #{tpu_custom_call.1} parent=1 // loop_pre_header
      _
    $region3: #{tpu_custom_call.1} parent=1 // loop_header
      %s19 = sphi 0, %s23
      %p20 = scmp.ge.s32.totalorder %s19, 6
      %s26 = sphi 0, %s38
      %s27 = sphi 0, %s34
      %s28 = sphi 0, %s26
      %s29 = sphi 0, %s27
      %s30 = sphi 0, %s28
      %s31 = sphi 0, %s29
      %s43 = sphi 0, %s45
      %s46 = sphi 0, %s43
      %s47 = sphi 0, %s46
      %s63 = sphi 0, %s47
      %s71 = sphi 0, %s73
      %s74 = sphi 0, %s71
      %s75 = sphi 0, %s74
      %s91 = sphi 0, %s75
      %s99 = sphi 0, %s101
      %s102 = sphi 0, %s99
      %s103 = sphi 0, %s102
      %s119 = sphi 0, %s103
      %s127 = sphi 0, %s129
      %s130 = sphi 0, %s127
      %s131 = sphi 0, %s130
      %s147 = sphi 0, %s131
    $region4: #{tpu_custom_call.1} parent=1 // loop_header_branch
      %22 = sbr.rel (%p20) target = $region8
    $region5: #{tpu_custom_call.1} parent=1 // loop_body
      %s24 = ssub.s32 %s19, 1
      %s25 = ssub.s32 %s19, 2
      %s32 = sadd.s32 1, %s27
      %p33 = scmp.ge.s32.totalorder %s32, 1
      %s34 = scalar_select %p33, 0, %s32
      %s35 = sadd.s32 1, %s26
      %s36 = scalar_select %p33, %s35, %s26
      %p37 = scmp.ge.s32.totalorder %s36, 4
      %s38 = scalar_select %p37, 0, %s36
      %s39 = ssub.s32 %s26, %s38
      %s40 = ssub.s32 %s27, %s34
      %s41 = sor.u32 %s39, %s40
      %p42 = scmp.eq.s32.totalorder %s41, 0
      %s44 = sadd.s32 %s43, 1
      %s45 = scalar_select %p42, %s43, %s44
      %p48 = pneg %p42
      %p49 = scmp.eq.s32.totalorder %s19, 3
      %p50 = por %p48, %p49
      %p51 = scmp.ne.s32.totalorder %s43, %s46
      %p52 = scmp.eq.s32.totalorder %s19, 0
      %p53 = por %p51, %p52
      %p54 = scmp.ne.s32.totalorder %s43, %s46
      %p55 = scmp.eq.s32.totalorder %s24, 3
      %p56 = por %p54, %p55
      %p57 = scmp.ne.s32.totalorder %s46, %s47
      %p58 = scmp.eq.s32.totalorder %s24, 0
      %p59 = por %p57, %p58
      %p60 = scmp.ne.s32.totalorder %s46, %s47
      %p61 = scmp.eq.s32.totalorder %s25, 3
      %p62 = por %p60, %p61
      %p64 = scmp.ne.s32.totalorder %s47, %s63
      %p65 = scmp.eq.s32.totalorder %s25, 0
      %p66 = por %p64, %p65
      %s67 = ssub.s32 %s26, %s38
      %s68 = ssub.s32 %s27, %s34
      %s69 = sor.u32 %s67, %s68
      %p70 = scmp.eq.s32.totalorder %s69, 0
      %s72 = sadd.s32 %s71, 1
      %s73 = scalar_select %p70, %s71, %s72
      %p76 = pneg %p70
      %p77 = scmp.eq.s32.totalorder %s19, 3
      %p78 = por %p76, %p77
      %p79 = scmp.ne.s32.totalorder %s71, %s74
      %p80 = scmp.eq.s32.totalorder %s19, 0
      %p81 = por %p79, %p80
      %p82 = scmp.ne.s32.totalorder %s71, %s74
      %p83 = scmp.eq.s32.totalorder %s24, 3
      %p84 = por %p82, %p83
      %p85 = scmp.ne.s32.totalorder %s74, %s75
      %p86 = scmp.eq.s32.totalorder %s24, 0
      %p87 = por %p85, %p86
      %p88 = scmp.ne.s32.totalorder %s74, %s75
      %p89 = scmp.eq.s32.totalorder %s25, 3
      %p90 = por %p88, %p89
      %p92 = scmp.ne.s32.totalorder %s75, %s91
      %p93 = scmp.eq.s32.totalorder %s25, 0
      %p94 = por %p92, %p93
      %s95 = ssub.s32 %s27, %s34
      %s96 = ssub.s32 %s26, %s38
      %s97 = sor.u32 %s95, %s96
      %p98 = scmp.eq.s32.totalorder %s97, 0
      %s100 = sadd.s32 %s99, 1
      %s101 = scalar_select %p98, %s99, %s100
      %p104 = pneg %p98
      %p105 = scmp.eq.s32.totalorder %s19, 3
      %p106 = por %p104, %p105
      %p107 = scmp.ne.s32.totalorder %s99, %s102
      %p108 = scmp.eq.s32.totalorder %s19, 0
      %p109 = por %p107, %p108
      %p110 = scmp.ne.s32.totalorder %s99, %s102
      %p111 = scmp.eq.s32.totalorder %s24, 3
      %p112 = por %p110, %p111
      %p113 = scmp.ne.s32.totalorder %s102, %s103
      %p114 = scmp.eq.s32.totalorder %s24, 0
      %p115 = por %p113, %p114
      %p116 = scmp.ne.s32.totalorder %s102, %s103
      %p117 = scmp.eq.s32.totalorder %s25, 3
      %p118 = por %p116, %p117
      %p120 = scmp.ne.s32.totalorder %s103, %s119
      %p121 = scmp.eq.s32.totalorder %s25, 0
      %p122 = por %p120, %p121
      %s123 = ssub.s32 %s26, %s38
      %s124 = ssub.s32 %s27, %s34
      %s125 = sor.u32 %s123, %s124
      %p126 = scmp.eq.s32.totalorder %s125, 0
      %s128 = sadd.s32 %s127, 1
      %s129 = scalar_select %p126, %s127, %s128
      %p132 = pneg %p126
      %p133 = scmp.eq.s32.totalorder %s19, 3
      %p134 = por %p132, %p133
      %p135 = scmp.ne.s32.totalorder %s127, %s130
      %p136 = scmp.eq.s32.totalorder %s19, 0
      %p137 = por %p135, %p136
      %p138 = scmp.ne.s32.totalorder %s127, %s130
      %p139 = scmp.eq.s32.totalorder %s24, 3
      %p140 = por %p138, %p139
      %p141 = scmp.ne.s32.totalorder %s130, %s131
      %p142 = scmp.eq.s32.totalorder %s24, 0
      %p143 = por %p141, %p142
      %p144 = scmp.ne.s32.totalorder %s130, %s131
      %p145 = scmp.eq.s32.totalorder %s25, 3
      %p146 = por %p144, %p145
      %p148 = scmp.ne.s32.totalorder %s131, %s147
      %p149 = scmp.eq.s32.totalorder %s25, 0
      %p150 = por %p148, %p149
      %p151 = scmp.le.s32.totalorder 1, %s19
      %p152 = scmp.lt.s32.totalorder %s19, 5
      %p153 = pnand %p151, %p152
      %p154 = pneg %p153
      // Predicated region
      $region9: #{tpu_custom_call.1} parent=5 // pred_check
        _
      $region10: #{tpu_custom_call.1} parent=5 // pred_check_branch
        %156 = sbr.rel (%p153) target = $region12
      $region11: #{tpu_custom_call.1} parent=5 // pred_region
        %s157 = ssub.s32 %s19, 1
      $region12: #{tpu_custom_call.1} parent=5 // pred_fallthru
        _
      %p158 = scmp.lt.s32.totalorder %s19, 4
      // Predicated region
      $region13: #{tpu_custom_call.1} parent=5 // pred_check
        %p159 = pneg %p158
      $region14: #{tpu_custom_call.1} parent=5 // pred_check_branch
        %161 = sbr.rel (%p159) target = $region16
      $region15: #{tpu_custom_call.1} parent=5 // pred_region
        // Predicated region
        $region17: #{tpu_custom_call.1} parent=15 // pred_check
          %p162 = pneg %p53
        $region18: #{tpu_custom_call.1} parent=15 // pred_check_branch
          %164 = sbr.rel (%p162) target = $region20
        $region19: #{tpu_custom_call.1} parent=15 // pred_region
          #allocation10 [shape = 'u32[6]{0}', space=smem, size = 0x18, scoped, tag = 'DMA stride descriptor']
          %s165 = sand.u32 %s43, 1
          %s166 = scalar_lea.sflag [#allocation3], %s165
          %s167 = sand.u32 %s43, 1
          %s168 = smul.addr %s167, 32
          %s169 = scalar_lea.vmem [#allocation2], %s168
          %s170 = smul.u32 2, %s27
          %s172 = ssub.s32 512, 512
          %173 = vsyncadd %s166, %s172
          %s174 = smul.addr %s26, 2
          %s175 = sadd.s32 %s170, %s174
          %s176 = smul.addr %s175, 128
          %s177 = scalar_lea.hbm %s0, %s176
          %s179 = sshll.u32 1, 14
          %s180 = sxor.u32 4294967295, %s179
          %s182 = sld [smem:[#allocation0]]
          %s183 = sadd.s32 2, %s182
          %s185 = sshll.u32 7, 26
          %s186 = sxor.u32 4294967295, %s185
          %s187 = sand.u32 0, %s186
          %s188 = sshll.u32 %s183, 26
          %s189 = sor.u32 %s187, %s188
          %s190 = sshll.u32 %s169, 4
          %s191 = int_to_ptr.vmem [resolvable:$true] %s190
          %197 = sst [smem:[#allocation10]] 1024
          %s198 = scalar_lea.smem [#allocation10], 1
          %199 = sst [smem:[%s198]] 256
          %s200 = scalar_lea.smem [#allocation10], 2
          %201 = sst [smem:[%s200]] 2
          %s202 = scalar_lea.smem [#allocation10], 3
          %203 = sst [smem:[%s202]] 128
          %s204 = scalar_lea.smem [#allocation10], 4
          %205 = sst [smem:[%s204]] 128
          %s206 = scalar_lea.smem [#allocation10], 5
          %207 = sst [smem:[%s206]] 8
          %209 = dma.general %s177, 512, %s191, %s166, 131072, [#allocation10], %s189, 0
        $region20: #{tpu_custom_call.1} parent=15 // pred_fallthru
          _
      $region16: #{tpu_custom_call.1} parent=5 // pred_fallthru
        _
      %p210 = scmp.le.s32.totalorder 1, %s19
      %p211 = scmp.lt.s32.totalorder %s19, 5
      %p212 = pnand %p210, %p211
      %p213 = pneg %p212
      // Predicated region
      $region21: #{tpu_custom_call.1} parent=5 // pred_check
        _
      $region22: #{tpu_custom_call.1} parent=5 // pred_check_branch
        %215 = sbr.rel (%p212) target = $region24
      $region23: #{tpu_custom_call.1} parent=5 // pred_region
        %s216 = ssub.s32 %s19, 1
        %s217 = sand.u32 %s46, 1
        %s218 = scalar_lea.sflag [#allocation3], %s217
        %s219 = sand.u32 %s46, 1
        %s220 = smul.addr %s219, 32
        %s221 = scalar_lea.vmem [#allocation2], %s220
        // Predicated region
        $region25: #{tpu_custom_call.1} parent=23 // pred_check
          %p222 = pneg %p59
        $region26: #{tpu_custom_call.1} parent=23 // pred_check_branch
          %224 = sbr.rel (%p222) target = $region28
        $region27: #{tpu_custom_call.1} parent=23 // pred_region
          %225 = dma.done %s218, 512
        $region28: #{tpu_custom_call.1} parent=23 // pred_fallthru
          _
        %s226 = sand.u32 %s46, 1
        %s227 = scalar_lea.sflag [#allocation3], %s226
        %s228 = sand.u32 %s46, 1
        %s229 = smul.addr %s228, 32
        %s230 = scalar_lea.vmem [#allocation2], %s229
        %p231 = pneg %p59
        %p232 = pneg %p56
        %p233 = pneg %p87
        %p234 = pneg %p84
        %s235 = sand.u32 %s74, 1
        %s236 = scalar_lea.sflag [#allocation4], %s235
        %s237 = sand.u32 %s74, 1
        %s238 = smul.addr %s237, 32
        %s239 = scalar_lea.vmem [#allocation5], %s238
        %p240 = pneg %p115
        %p241 = pneg %p112
        %s242 = sand.u32 %s102, 1
        %s243 = scalar_lea.sflag [#allocation7], %s242
        %s244 = sand.u32 %s102, 1
        %s245 = smul.addr %s244, 32
        %s246 = scalar_lea.vmem [#allocation6], %s245
        %p247 = pneg %p143
        %p248 = pneg %p140
        %s249 = sand.u32 %s130, 1
        %s250 = sand.u32 %s130, 1
        %s251 = smul.addr %s250, 256
        %s252 = scalar_lea.vmem [#allocation8], %s251
        %s253 = smul.u32 2, %s29
        %s254 = smul.u32 2, %s29
        %s255 = smul.u32 16, %s29
        %s256 = smul.u32 2, %s29
        %v257 = vld [vmem:[%s221] sm:$0xff]
        %v258 = vld [vmem:[%s221 + $0x8] sm:$0xff]
        %v259 = vld [vmem:[%s221 + $0x10] sm:$0xff]
        %v260 = vld [vmem:[%s221 + $0x18] sm:$0xff]
        %vm261 = vcmask 130048
        %262 = vst.msk [vmem:[%s239] sm:$0xff] %vm261, %v257
        %263 = vst.msk [vmem:[%s239 + $0x8] sm:$0xff] %vm261, %v258
        %264 = vst.msk [vmem:[%s239 + $0x10] sm:$0xff] %vm261, %v259
        %265 = vst.msk [vmem:[%s239 + $0x18] sm:$0xff] %vm261, %v260
        %v266 = vld [vmem:[%s221] sm:$0x1]
        %v267 = vld [vmem:[%s221 + $0x10] sm:$0x1]
        %v270 = vrot.slane %v267, 7
        %vm271 = vcmask 1041409
        %v272 = vsel %vm271, %v270, %v266
        %vm274 = vcmask 123904
        %275 = vst.msk [vmem:[%s246] sm:$0x3] %vm274, %v272
        %276 = vxpose.xlu0.b32.start [1/16] %v272, 128
        %277 = vxpose.xlu0.b32.cont [2/16] 0.0, 128
        %278 = vxpose.xlu0.b32.cont [3/16] 0.0, 128
        %279 = vxpose.xlu0.b32.cont [4/16] 0.0, 128
        %280 = vxpose.xlu0.b32.cont [5/16] 0.0, 128
        %281 = vxpose.xlu0.b32.cont [6/16] 0.0, 128
        %282 = vxpose.xlu0.b32.cont [7/16] 0.0, 128
        %283 = vxpose.xlu0.b32.cont [8/16] 0.0, 128
        %284 = vxpose.xlu0.b32.cont [9/16] 0.0, 128
        %285 = vxpose.xlu0.b32.cont [10/16] 0.0, 128
        %286 = vxpose.xlu0.b32.cont [11/16] 0.0, 128
        %287 = vxpose.xlu0.b32.cont [12/16] 0.0, 128
        %288 = vxpose.xlu0.b32.cont [13/16] 0.0, 128
        %289 = vxpose.xlu0.b32.cont [14/16] 0.0, 128
        %290 = vxpose.xlu0.b32.cont [15/16] 0.0, 128
        %291 = vxpose.xlu0.b32.end [16/16] 0.0, 128
        %v292 = vpop.trf.xlu0
        %v293 = vpop.trf.xlu0
        %v294 = vpop.trf.xlu0
        %v295 = vpop.trf.xlu0
        %v296 = vpop.trf.xlu0
        %v297 = vpop.trf.xlu0
        %v298 = vpop.trf.xlu0
        %v299 = vpop.trf.xlu0
        %v300 = vpop.trf.xlu0
        %v301 = vpop.trf.xlu0
        %v302 = vpop.trf.xlu0
        %v303 = vpop.trf.xlu0
        %v304 = vpop.trf.xlu0
        %v305 = vpop.trf.xlu0
        %v306 = vpop.trf.xlu0
        %v307 = vpop.trf.xlu0
        %v310 = vcombine.high %v292, %v292
        %v312 = vunpack.c.l.s4 1966171168
        %v313 = vunpack.c.0.s8 %v312
        %v314 = vlaneseq
        %v315 = vshrl.u32 %v314, 7
        %v316 = vsub.s32 %v313, %v315
        %v317 = vrot.slane %v292, %v316
        %v319 = vunpack.c.l.s4 1966171168
        %v320 = vunpack.c.0.s8 %v319
        %v321 = vlaneseq
        %v322 = vshrl.u32 %v321, 7
        %v323 = vsub.s32 %v320, %v322
        %v324 = vrot.slane %v310, %v323
        %v325 = vcombine.high %v317, %v317
        %v326 = vcombine.high %v324, %v324
        %v328 = vunpack.c.l.s4 1966171168
        %v329 = vunpack.c.0.s8 %v328
        %v330 = vlaneseq
        %v331 = vshrl.u32 %v330, 7
        %v332 = vsub.s32 %v329, %v331
        %v333 = vrot.slane %v317, %v332
        %v335 = vunpack.c.l.s4 1966171168
        %v336 = vunpack.c.0.s8 %v335
        %v337 = vlaneseq
        %v338 = vshrl.u32 %v337, 7
        %v339 = vsub.s32 %v336, %v338
        %v340 = vrot.slane %v324, %v339
        %v342 = vunpack.c.l.s4 1966171168
        %v343 = vunpack.c.0.s8 %v342
        %v344 = vlaneseq
        %v345 = vshrl.u32 %v344, 7
        %v346 = vsub.s32 %v343, %v345
        %v347 = vrot.slane %v325, %v346
        %v349 = vunpack.c.l.s4 1966171168
        %v350 = vunpack.c.0.s8 %v349
        %v351 = vlaneseq
        %v352 = vshrl.u32 %v351, 7
        %v353 = vsub.s32 %v350, %v352
        %v354 = vrot.slane %v326, %v353
        %v355 = vcombine.high %v333, %v333
        %v356 = vcombine.high %v340, %v340
        %v357 = vcombine.high %v347, %v347
        %v358 = vcombine.high %v354, %v354
        %v359 = vcombine.high %v293, %v293
        %v361 = vunpack.c.l.s4 1966171168
        %v362 = vunpack.c.0.s8 %v361
        %v363 = vlaneseq
        %v364 = vshrl.u32 %v363, 7
        %v365 = vsub.s32 %v362, %v364
        %v366 = vrot.slane %v293, %v365
        %v368 = vunpack.c.l.s4 1966171168
        %v369 = vunpack.c.0.s8 %v368
        %v370 = vlaneseq
        %v371 = vshrl.u32 %v370, 7
        %v372 = vsub.s32 %v369, %v371
        %v373 = vrot.slane %v359, %v372
        %v374 = vcombine.high %v366, %v366
        %v375 = vcombine.high %v373, %v373
        %v377 = vunpack.c.l.s4 1966171168
        %v378 = vunpack.c.0.s8 %v377
        %v379 = vlaneseq
        %v380 = vshrl.u32 %v379, 7
        %v381 = vsub.s32 %v378, %v380
        %v382 = vrot.slane %v366, %v381
        %v384 = vunpack.c.l.s4 1966171168
        %v385 = vunpack.c.0.s8 %v384
        %v386 = vlaneseq
        %v387 = vshrl.u32 %v386, 7
        %v388 = vsub.s32 %v385, %v387
        %v389 = vrot.slane %v373, %v388
        %v391 = vunpack.c.l.s4 1966171168
        %v392 = vunpack.c.0.s8 %v391
        %v393 = vlaneseq
        %v394 = vshrl.u32 %v393, 7
        %v395 = vsub.s32 %v392, %v394
        %v396 = vrot.slane %v374, %v395
        %v398 = vunpack.c.l.s4 1966171168
        %v399 = vunpack.c.0.s8 %v398
        %v400 = vlaneseq
        %v401 = vshrl.u32 %v400, 7
        %v402 = vsub.s32 %v399, %v401
        %v403 = vrot.slane %v375, %v402
        %v404 = vcombine.high %v382, %v382
        %v405 = vcombine.high %v389, %v389
        %v406 = vcombine.high %v396, %v396
        %v407 = vcombine.high %v403, %v403
        %vm424 = vcmask 8192
        %425 = vst.msk [vmem:[%s252] sm:$0x1] %vm424, %v333
        %426 = vst.msk [vmem:[%s252 + $0x10] sm:$0x1] %vm424, %v347
        %427 = vst.msk [vmem:[%s252 + $0x20] sm:$0x1] %vm424, %v355
        %428 = vst.msk [vmem:[%s252 + $0x30] sm:$0x1] %vm424, %v357
        %429 = vst.msk [vmem:[%s252 + $0x40] sm:$0x1] %vm424, %v340
        %430 = vst.msk [vmem:[%s252 + $0x50] sm:$0x1] %vm424, %v354
        %431 = vst.msk [vmem:[%s252 + $0x60] sm:$0x1] %vm424, %v356
        %432 = vst.msk [vmem:[%s252 + $0x70] sm:$0x1] %vm424, %v358
        %433 = vst.msk [vmem:[%s252 + $0x80] sm:$0x1] %vm424, %v382
        %434 = vst.msk [vmem:[%s252 + $0x90] sm:$0x1] %vm424, %v396
        %435 = vst.msk [vmem:[%s252 + $0xa0] sm:$0x1] %vm424, %v404
        %436 = vst.msk [vmem:[%s252 + $0xb0] sm:$0x1] %vm424, %v406
        %437 = vst.msk [vmem:[%s252 + $0xc0] sm:$0x1] %vm424, %v389
        %438 = vst.msk [vmem:[%s252 + $0xd0] sm:$0x1] %vm424, %v403
        %439 = vst.msk [vmem:[%s252 + $0xe0] sm:$0x1] %vm424, %v405
        %440 = vst.msk [vmem:[%s252 + $0xf0] sm:$0x1] %vm424, %v407
        %v441 = vld [vmem:[%s221 + $0x1] sm:$0x1]
        %v442 = vld [vmem:[%s221 + $0x11] sm:$0x1]
        %v445 = vrot.slane %v442, 7
        %v446 = vsel %vm271, %v445, %v441
        %s448 = scalar_lea.vmem %s246, 2 [#allocation6]
        %449 = vst.msk [vmem:[%s448] sm:$0x3] %vm274, %v446
        %450 = vxpose.xlu0.b32.start [1/16] %v446, 128
        %451 = vxpose.xlu0.b32.cont [2/16] 0.0, 128
        %452 = vxpose.xlu0.b32.cont [3/16] 0.0, 128
        %453 = vxpose.xlu0.b32.cont [4/16] 0.0, 128
        %454 = vxpose.xlu0.b32.cont [5/16] 0.0, 128
        %455 = vxpose.xlu0.b32.cont [6/16] 0.0, 128
        %456 = vxpose.xlu0.b32.cont [7/16] 0.0, 128
        %457 = vxpose.xlu0.b32.cont [8/16] 0.0, 128
        %458 = vxpose.xlu0.b32.cont [9/16] 0.0, 128
        %459 = vxpose.xlu0.b32.cont [10/16] 0.0, 128
        %460 = vxpose.xlu0.b32.cont [11/16] 0.0, 128
        %461 = vxpose.xlu0.b32.cont [12/16] 0.0, 128
        %462 = vxpose.xlu0.b32.cont [13/16] 0.0, 128
        %463 = vxpose.xlu0.b32.cont [14/16] 0.0, 128
        %464 = vxpose.xlu0.b32.cont [15/16] 0.0, 128
        %465 = vxpose.xlu0.b32.end [16/16] 0.0, 128
        %v466 = vpop.trf.xlu0
        %v467 = vpop.trf.xlu0
        %v468 = vpop.trf.xlu0
        %v469 = vpop.trf.xlu0
        %v470 = vpop.trf.xlu0
        %v471 = vpop.trf.xlu0
        %v472 = vpop.trf.xlu0
        %v473 = vpop.trf.xlu0
        %v474 = vpop.trf.xlu0
        %v475 = vpop.trf.xlu0
        %v476 = vpop.trf.xlu0
        %v477 = vpop.trf.xlu0
        %v478 = vpop.trf.xlu0
        %v479 = vpop.trf.xlu0
        %v480 = vpop.trf.xlu0
        %v481 = vpop.trf.xlu0
        %v484 = vcombine.high %v466, %v466
        %v486 = vunpack.c.l.s4 1966171168
        %v487 = vunpack.c.0.s8 %v486
        %v488 = vlaneseq
        %v489 = vshrl.u32 %v488, 7
        %v490 = vsub.s32 %v487, %v489
        %v491 = vrot.slane %v466, %v490
        %v493 = vunpack.c.l.s4 1966171168
        %v494 = vunpack.c.0.s8 %v493
        %v495 = vlaneseq
        %v496 = vshrl.u32 %v495, 7
        %v497 = vsub.s32 %v494, %v496
        %v498 = vrot.slane %v484, %v497
        %v499 = vcombine.high %v491, %v491
        %v500 = vcombine.high %v498, %v498
        %v502 = vunpack.c.l.s4 1966171168
        %v503 = vunpack.c.0.s8 %v502
        %v504 = vlaneseq
        %v505 = vshrl.u32 %v504, 7
        %v506 = vsub.s32 %v503, %v505
        %v507 = vrot.slane %v491, %v506
        %v509 = vunpack.c.l.s4 1966171168
        %v510 = vunpack.c.0.s8 %v509
        %v511 = vlaneseq
        %v512 = vshrl.u32 %v511, 7
        %v513 = vsub.s32 %v510, %v512
        %v514 = vrot.slane %v498, %v513
        %v516 = vunpack.c.l.s4 1966171168
        %v517 = vunpack.c.0.s8 %v516
        %v518 = vlaneseq
        %v519 = vshrl.u32 %v518, 7
        %v520 = vsub.s32 %v517, %v519
        %v521 = vrot.slane %v499, %v520
        %v523 = vunpack.c.l.s4 1966171168
        %v524 = vunpack.c.0.s8 %v523
        %v525 = vlaneseq
        %v526 = vshrl.u32 %v525, 7
        %v527 = vsub.s32 %v524, %v526
        %v528 = vrot.slane %v500, %v527
        %v529 = vcombine.high %v507, %v507
        %v530 = vcombine.high %v514, %v514
        %v531 = vcombine.high %v521, %v521
        %v532 = vcombine.high %v528, %v528
        %v533 = vcombine.high %v467, %v467
        %v535 = vunpack.c.l.s4 1966171168
        %v536 = vunpack.c.0.s8 %v535
        %v537 = vlaneseq
        %v538 = vshrl.u32 %v537, 7
        %v539 = vsub.s32 %v536, %v538
        %v540 = vrot.slane %v467, %v539
        %v542 = vunpack.c.l.s4 1966171168
        %v543 = vunpack.c.0.s8 %v542
        %v544 = vlaneseq
        %v545 = vshrl.u32 %v544, 7
        %v546 = vsub.s32 %v543, %v545
        %v547 = vrot.slane %v533, %v546
        %v548 = vcombine.high %v540, %v540
        %v549 = vcombine.high %v547, %v547
        %v551 = vunpack.c.l.s4 1966171168
        %v552 = vunpack.c.0.s8 %v551
        %v553 = vlaneseq
        %v554 = vshrl.u32 %v553, 7
        %v555 = vsub.s32 %v552, %v554
        %v556 = vrot.slane %v540, %v555
        %v558 = vunpack.c.l.s4 1966171168
        %v559 = vunpack.c.0.s8 %v558
        %v560 = vlaneseq
        %v561 = vshrl.u32 %v560, 7
        %v562 = vsub.s32 %v559, %v561
        %v563 = vrot.slane %v547, %v562
        %v565 = vunpack.c.l.s4 1966171168
        %v566 = vunpack.c.0.s8 %v565
        %v567 = vlaneseq
        %v568 = vshrl.u32 %v567, 7
        %v569 = vsub.s32 %v566, %v568
        %v570 = vrot.slane %v548, %v569
        %v572 = vunpack.c.l.s4 1966171168
        %v573 = vunpack.c.0.s8 %v572
        %v574 = vlaneseq
        %v575 = vshrl.u32 %v574, 7
        %v576 = vsub.s32 %v573, %v575
        %v577 = vrot.slane %v549, %v576
        %v578 = vcombine.high %v556, %v556
        %v579 = vcombine.high %v563, %v563
        %v580 = vcombine.high %v570, %v570
        %v581 = vcombine.high %v577, %v577
        %598 = vst.msk [vmem:[%s252 + $0x1] sm:$0x1] %vm424, %v507
        %599 = vst.msk [vmem:[%s252 + $0x11] sm:$0x1] %vm424, %v521
        %600 = vst.msk [vmem:[%s252 + $0x21] sm:$0x1] %vm424, %v529
        %601 = vst.msk [vmem:[%s252 + $0x31] sm:$0x1] %vm424, %v531
        %602 = vst.msk [vmem:[%s252 + $0x41] sm:$0x1] %vm424, %v514
        %603 = vst.msk [vmem:[%s252 + $0x51] sm:$0x1] %vm424, %v528
        %604 = vst.msk [vmem:[%s252 + $0x61] sm:$0x1] %vm424, %v530
        %605 = vst.msk [vmem:[%s252 + $0x71] sm:$0x1] %vm424, %v532
        %606 = vst.msk [vmem:[%s252 + $0x81] sm:$0x1] %vm424, %v556
        %607 = vst.msk [vmem:[%s252 + $0x91] sm:$0x1] %vm424, %v570
        %608 = vst.msk [vmem:[%s252 + $0xa1] sm:$0x1] %vm424, %v578
        %609 = vst.msk [vmem:[%s252 + $0xb1] sm:$0x1] %vm424, %v580
        %610 = vst.msk [vmem:[%s252 + $0xc1] sm:$0x1] %vm424, %v563
        %611 = vst.msk [vmem:[%s252 + $0xd1] sm:$0x1] %vm424, %v577
        %612 = vst.msk [vmem:[%s252 + $0xe1] sm:$0x1] %vm424, %v579
        %613 = vst.msk [vmem:[%s252 + $0xf1] sm:$0x1] %vm424, %v581
        %v614 = vld [vmem:[%s221 + $0x2] sm:$0x1]
        %v615 = vld [vmem:[%s221 + $0x12] sm:$0x1]
        %v618 = vrot.slane %v615, 7
        %v619 = vsel %vm271, %v618, %v614
        %s621 = scalar_lea.vmem %s246, 4 [#allocation6]
        %622 = vst.msk [vmem:[%s621] sm:$0x3] %vm274, %v619
        %623 = vxpose.xlu0.b32.start [1/16] %v619, 128
        %624 = vxpose.xlu0.b32.cont [2/16] 0.0, 128
        %625 = vxpose.xlu0.b32.cont [3/16] 0.0, 128
        %626 = vxpose.xlu0.b32.cont [4/16] 0.0, 128
        %627 = vxpose.xlu0.b32.cont [5/16] 0.0, 128
        %628 = vxpose.xlu0.b32.cont [6/16] 0.0, 128
        %629 = vxpose.xlu0.b32.cont [7/16] 0.0, 128
        %630 = vxpose.xlu0.b32.cont [8/16] 0.0, 128
        %631 = vxpose.xlu0.b32.cont [9/16] 0.0, 128
        %632 = vxpose.xlu0.b32.cont [10/16] 0.0, 128
        %633 = vxpose.xlu0.b32.cont [11/16] 0.0, 128
        %634 = vxpose.xlu0.b32.cont [12/16] 0.0, 128
        %635 = vxpose.xlu0.b32.cont [13/16] 0.0, 128
        %636 = vxpose.xlu0.b32.cont [14/16] 0.0, 128
        %637 = vxpose.xlu0.b32.cont [15/16] 0.0, 128
        %638 = vxpose.xlu0.b32.end [16/16] 0.0, 128
        %v639 = vpop.trf.xlu0
        %v640 = vpop.trf.xlu0
        %v641 = vpop.trf.xlu0
        %v642 = vpop.trf.xlu0
        %v643 = vpop.trf.xlu0
        %v644 = vpop.trf.xlu0
        %v645 = vpop.trf.xlu0
        %v646 = vpop.trf.xlu0
        %v647 = vpop.trf.xlu0
        %v648 = vpop.trf.xlu0
        %v649 = vpop.trf.xlu0
        %v650 = vpop.trf.xlu0
        %v651 = vpop.trf.xlu0
        %v652 = vpop.trf.xlu0
        %v653 = vpop.trf.xlu0
        %v654 = vpop.trf.xlu0
        %v657 = vcombine.high %v639, %v639
        %v659 = vunpack.c.l.s4 1966171168
        %v660 = vunpack.c.0.s8 %v659
        %v661 = vlaneseq
        %v662 = vshrl.u32 %v661, 7
        %v663 = vsub.s32 %v660, %v662
        %v664 = vrot.slane %v639, %v663
        %v666 = vunpack.c.l.s4 1966171168
        %v667 = vunpack.c.0.s8 %v666
        %v668 = vlaneseq
        %v669 = vshrl.u32 %v668, 7
        %v670 = vsub.s32 %v667, %v669
        %v671 = vrot.slane %v657, %v670
        %v672 = vcombine.high %v664, %v664
        %v673 = vcombine.high %v671, %v671
        %v675 = vunpack.c.l.s4 1966171168
        %v676 = vunpack.c.0.s8 %v675
        %v677 = vlaneseq
        %v678 = vshrl.u32 %v677, 7
        %v679 = vsub.s32 %v676, %v678
        %v680 = vrot.slane %v664, %v679
        %v682 = vunpack.c.l.s4 1966171168
        %v683 = vunpack.c.0.s8 %v682
        %v684 = vlaneseq
        %v685 = vshrl.u32 %v684, 7
        %v686 = vsub.s32 %v683, %v685
        %v687 = vrot.slane %v671, %v686
        %v689 = vunpack.c.l.s4 1966171168
        %v690 = vunpack.c.0.s8 %v689
        %v691 = vlaneseq
        %v692 = vshrl.u32 %v691, 7
        %v693 = vsub.s32 %v690, %v692
        %v694 = vrot.slane %v672, %v693
        %v696 = vunpack.c.l.s4 1966171168
        %v697 = vunpack.c.0.s8 %v696
        %v698 = vlaneseq
        %v699 = vshrl.u32 %v698, 7
        %v700 = vsub.s32 %v697, %v699
        %v701 = vrot.slane %v673, %v700
        %v702 = vcombine.high %v680, %v680
        %v703 = vcombine.high %v687, %v687
        %v704 = vcombine.high %v694, %v694
        %v705 = vcombine.high %v701, %v701
        %v706 = vcombine.high %v640, %v640
        %v708 = vunpack.c.l.s4 1966171168
        %v709 = vunpack.c.0.s8 %v708
        %v710 = vlaneseq
        %v711 = vshrl.u32 %v710, 7
        %v712 = vsub.s32 %v709, %v711
        %v713 = vrot.slane %v640, %v712
        %v715 = vunpack.c.l.s4 1966171168
        %v716 = vunpack.c.0.s8 %v715
        %v717 = vlaneseq
        %v718 = vshrl.u32 %v717, 7
        %v719 = vsub.s32 %v716, %v718
        %v720 = vrot.slane %v706, %v719
        %v721 = vcombine.high %v713, %v713
        %v722 = vcombine.high %v720, %v720
        %v724 = vunpack.c.l.s4 1966171168
        %v725 = vunpack.c.0.s8 %v724
        %v726 = vlaneseq
        %v727 = vshrl.u32 %v726, 7
        %v728 = vsub.s32 %v725, %v727
        %v729 = vrot.slane %v713, %v728
        %v731 = vunpack.c.l.s4 1966171168
        %v732 = vunpack.c.0.s8 %v731
        %v733 = vlaneseq
        %v734 = vshrl.u32 %v733, 7
        %v735 = vsub.s32 %v732, %v734
        %v736 = vrot.slane %v720, %v735
        %v738 = vunpack.c.l.s4 1966171168
        %v739 = vunpack.c.0.s8 %v738
        %v740 = vlaneseq
        %v741 = vshrl.u32 %v740, 7
        %v742 = vsub.s32 %v739, %v741
        %v743 = vrot.slane %v721, %v742
        %v745 = vunpack.c.l.s4 1966171168
        %v746 = vunpack.c.0.s8 %v745
        %v747 = vlaneseq
        %v748 = vshrl.u32 %v747, 7
        %v749 = vsub.s32 %v746, %v748
        %v750 = vrot.slane %v722, %v749
        %v751 = vcombine.high %v729, %v729
        %v752 = vcombine.high %v736, %v736
        %v753 = vcombine.high %v743, %v743
        %v754 = vcombine.high %v750, %v750
        %771 = vst.msk [vmem:[%s252 + $0x2] sm:$0x1] %vm424, %v680
        %772 = vst.msk [vmem:[%s252 + $0x12] sm:$0x1] %vm424, %v694
        %773 = vst.msk [vmem:[%s252 + $0x22] sm:$0x1] %vm424, %v702
        %774 = vst.msk [vmem:[%s252 + $0x32] sm:$0x1] %vm424, %v704
        %775 = vst.msk [vmem:[%s252 + $0x42] sm:$0x1] %vm424, %v687
        %776 = vst.msk [vmem:[%s252 + $0x52] sm:$0x1] %vm424, %v701
        %777 = vst.msk [vmem:[%s252 + $0x62] sm:$0x1] %vm424, %v703
        %778 = vst.msk [vmem:[%s252 + $0x72] sm:$0x1] %vm424, %v705
        %779 = vst.msk [vmem:[%s252 + $0x82] sm:$0x1] %vm424, %v729
        %780 = vst.msk [vmem:[%s252 + $0x92] sm:$0x1] %vm424, %v743
        %781 = vst.msk [vmem:[%s252 + $0xa2] sm:$0x1] %vm424, %v751
        %782 = vst.msk [vmem:[%s252 + $0xb2] sm:$0x1] %vm424, %v753
        %783 = vst.msk [vmem:[%s252 + $0xc2] sm:$0x1] %vm424, %v736
        %784 = vst.msk [vmem:[%s252 + $0xd2] sm:$0x1] %vm424, %v750
        %785 = vst.msk [vmem:[%s252 + $0xe2] sm:$0x1] %vm424, %v752
        %786 = vst.msk [vmem:[%s252 + $0xf2] sm:$0x1] %vm424, %v754
        %v787 = vld [vmem:[%s221 + $0x3] sm:$0x1]
        %v788 = vld [vmem:[%s221 + $0x13] sm:$0x1]
        %v791 = vrot.slane %v788, 7
        %v792 = vsel %vm271, %v791, %v787
        %s794 = scalar_lea.vmem %s246, 6 [#allocation6]
        %795 = vst.msk [vmem:[%s794] sm:$0x3] %vm274, %v792
        %796 = vxpose.xlu0.b32.start [1/16] %v792, 128
        %797 = vxpose.xlu0.b32.cont [2/16] 0.0, 128
        %798 = vxpose.xlu0.b32.cont [3/16] 0.0, 128
        %799 = vxpose.xlu0.b32.cont [4/16] 0.0, 128
        %800 = vxpose.xlu0.b32.cont [5/16] 0.0, 128
        %801 = vxpose.xlu0.b32.cont [6/16] 0.0, 128
        %802 = vxpose.xlu0.b32.cont [7/16] 0.0, 128
        %803 = vxpose.xlu0.b32.cont [8/16] 0.0, 128
        %804 = vxpose.xlu0.b32.cont [9/16] 0.0, 128
        %805 = vxpose.xlu0.b32.cont [10/16] 0.0, 128
        %806 = vxpose.xlu0.b32.cont [11/16] 0.0, 128
        %807 = vxpose.xlu0.b32.cont [12/16] 0.0, 128
        %808 = vxpose.xlu0.b32.cont [13/16] 0.0, 128
        %809 = vxpose.xlu0.b32.cont [14/16] 0.0, 128
        %810 = vxpose.xlu0.b32.cont [15/16] 0.0, 128
        %811 = vxpose.xlu0.b32.end [16/16] 0.0, 128
        %v812 = vpop.trf.xlu0
        %v813 = vpop.trf.xlu0
        %v814 = vpop.trf.xlu0
        %v815 = vpop.trf.xlu0
        %v816 = vpop.trf.xlu0
        %v817 = vpop.trf.xlu0
        %v818 = vpop.trf.xlu0
        %v819 = vpop.trf.xlu0
        %v820 = vpop.trf.xlu0
        %v821 = vpop.trf.xlu0
        %v822 = vpop.trf.xlu0
        %v823 = vpop.trf.xlu0
        %v824 = vpop.trf.xlu0
        %v825 = vpop.trf.xlu0
        %v826 = vpop.trf.xlu0
        %v827 = vpop.trf.xlu0
        %v830 = vcombine.high %v812, %v812
        %v832 = vunpack.c.l.s4 1966171168
        %v833 = vunpack.c.0.s8 %v832
        %v834 = vlaneseq
        %v835 = vshrl.u32 %v834, 7
        %v836 = vsub.s32 %v833, %v835
        %v837 = vrot.slane %v812, %v836
        %v839 = vunpack.c.l.s4 1966171168
        %v840 = vunpack.c.0.s8 %v839
        %v841 = vlaneseq
        %v842 = vshrl.u32 %v841, 7
        %v843 = vsub.s32 %v840, %v842
        %v844 = vrot.slane %v830, %v843
        %v845 = vcombine.high %v837, %v837
        %v846 = vcombine.high %v844, %v844
        %v848 = vunpack.c.l.s4 1966171168
        %v849 = vunpack.c.0.s8 %v848
        %v850 = vlaneseq
        %v851 = vshrl.u32 %v850, 7
        %v852 = vsub.s32 %v849, %v851
        %v853 = vrot.slane %v837, %v852
        %v855 = vunpack.c.l.s4 1966171168
        %v856 = vunpack.c.0.s8 %v855
        %v857 = vlaneseq
        %v858 = vshrl.u32 %v857, 7
        %v859 = vsub.s32 %v856, %v858
        %v860 = vrot.slane %v844, %v859
        %v862 = vunpack.c.l.s4 1966171168
        %v863 = vunpack.c.0.s8 %v862
        %v864 = vlaneseq
        %v865 = vshrl.u32 %v864, 7
        %v866 = vsub.s32 %v863, %v865
        %v867 = vrot.slane %v845, %v866
        %v869 = vunpack.c.l.s4 1966171168
        %v870 = vunpack.c.0.s8 %v869
        %v871 = vlaneseq
        %v872 = vshrl.u32 %v871, 7
        %v873 = vsub.s32 %v870, %v872
        %v874 = vrot.slane %v846, %v873
        %v875 = vcombine.high %v853, %v853
        %v876 = vcombine.high %v860, %v860
        %v877 = vcombine.high %v867, %v867
        %v878 = vcombine.high %v874, %v874
        %v879 = vcombine.high %v813, %v813
        %v881 = vunpack.c.l.s4 1966171168
        %v882 = vunpack.c.0.s8 %v881
        %v883 = vlaneseq
        %v884 = vshrl.u32 %v883, 7
        %v885 = vsub.s32 %v882, %v884
        %v886 = vrot.slane %v813, %v885
        %v888 = vunpack.c.l.s4 1966171168
        %v889 = vunpack.c.0.s8 %v888
        %v890 = vlaneseq
        %v891 = vshrl.u32 %v890, 7
        %v892 = vsub.s32 %v889, %v891
        %v893 = vrot.slane %v879, %v892
        %v894 = vcombine.high %v886, %v886
        %v895 = vcombine.high %v893, %v893
        %v897 = vunpack.c.l.s4 1966171168
        %v898 = vunpack.c.0.s8 %v897
        %v899 = vlaneseq
        %v900 = vshrl.u32 %v899, 7
        %v901 = vsub.s32 %v898, %v900
        %v902 = vrot.slane %v886, %v901
        %v904 = vunpack.c.l.s4 1966171168
        %v905 = vunpack.c.0.s8 %v904
        %v906 = vlaneseq
        %v907 = vshrl.u32 %v906, 7
        %v908 = vsub.s32 %v905, %v907
        %v909 = vrot.slane %v893, %v908
        %v911 = vunpack.c.l.s4 1966171168
        %v912 = vunpack.c.0.s8 %v911
        %v913 = vlaneseq
        %v914 = vshrl.u32 %v913, 7
        %v915 = vsub.s32 %v912, %v914
        %v916 = vrot.slane %v894, %v915
        %v918 = vunpack.c.l.s4 1966171168
        %v919 = vunpack.c.0.s8 %v918
        %v920 = vlaneseq
        %v921 = vshrl.u32 %v920, 7
        %v922 = vsub.s32 %v919, %v921
        %v923 = vrot.slane %v895, %v922
        %v924 = vcombine.high %v902, %v902
        %v925 = vcombine.high %v909, %v909
        %v926 = vcombine.high %v916, %v916
        %v927 = vcombine.high %v923, %v923
        %944 = vst.msk [vmem:[%s252 + $0x3] sm:$0x1] %vm424, %v853
        %945 = vst.msk [vmem:[%s252 + $0x13] sm:$0x1] %vm424, %v867
        %946 = vst.msk [vmem:[%s252 + $0x23] sm:$0x1] %vm424, %v875
        %947 = vst.msk [vmem:[%s252 + $0x33] sm:$0x1] %vm424, %v877
        %948 = vst.msk [vmem:[%s252 + $0x43] sm:$0x1] %vm424, %v860
        %949 = vst.msk [vmem:[%s252 + $0x53] sm:$0x1] %vm424, %v874
        %950 = vst.msk [vmem:[%s252 + $0x63] sm:$0x1] %vm424, %v876
        %951 = vst.msk [vmem:[%s252 + $0x73] sm:$0x1] %vm424, %v878
        %952 = vst.msk [vmem:[%s252 + $0x83] sm:$0x1] %vm424, %v902
        %953 = vst.msk [vmem:[%s252 + $0x93] sm:$0x1] %vm424, %v916
        %954 = vst.msk [vmem:[%s252 + $0xa3] sm:$0x1] %vm424, %v924
        %955 = vst.msk [vmem:[%s252 + $0xb3] sm:$0x1] %vm424, %v926
        %956 = vst.msk [vmem:[%s252 + $0xc3] sm:$0x1] %vm424, %v909
        %957 = vst.msk [vmem:[%s252 + $0xd3] sm:$0x1] %vm424, %v923
        %958 = vst.msk [vmem:[%s252 + $0xe3] sm:$0x1] %vm424, %v925
        %959 = vst.msk [vmem:[%s252 + $0xf3] sm:$0x1] %vm424, %v927
        %v960 = vld [vmem:[%s221 + $0x4] sm:$0x1]
        %v961 = vld [vmem:[%s221 + $0x14] sm:$0x1]
        %v964 = vrot.slane %v961, 7
        %v965 = vsel %vm271, %v964, %v960
        %s967 = scalar_lea.vmem %s246, 8 [#allocation6]
        %968 = vst.msk [vmem:[%s967] sm:$0x3] %vm274, %v965
        %969 = vxpose.xlu0.b32.start [1/16] %v965, 128
        %970 = vxpose.xlu0.b32.cont [2/16] 0.0, 128
        %971 = vxpose.xlu0.b32.cont [3/16] 0.0, 128
        %972 = vxpose.xlu0.b32.cont [4/16] 0.0, 128
        %973 = vxpose.xlu0.b32.cont [5/16] 0.0, 128
        %974 = vxpose.xlu0.b32.cont [6/16] 0.0, 128
        %975 = vxpose.xlu0.b32.cont [7/16] 0.0, 128
        %976 = vxpose.xlu0.b32.cont [8/16] 0.0, 128
        %977 = vxpose.xlu0.b32.cont [9/16] 0.0, 128
        %978 = vxpose.xlu0.b32.cont [10/16] 0.0, 128
        %979 = vxpose.xlu0.b32.cont [11/16] 0.0, 128
        %980 = vxpose.xlu0.b32.cont [12/16] 0.0, 128
        %981 = vxpose.xlu0.b32.cont [13/16] 0.0, 128
        %982 = vxpose.xlu0.b32.cont [14/16] 0.0, 128
        %983 = vxpose.xlu0.b32.cont [15/16] 0.0, 128
        %984 = vxpose.xlu0.b32.end [16/16] 0.0, 128
        %v985 = vpop.trf.xlu0
        %v986 = vpop.trf.xlu0
        %v987 = vpop.trf.xlu0
        %v988 = vpop.trf.xlu0
        %v989 = vpop.trf.xlu0
        %v990 = vpop.trf.xlu0
        %v991 = vpop.trf.xlu0
        %v992 = vpop.trf.xlu0
        %v993 = vpop.trf.xlu0
        %v994 = vpop.trf.xlu0
        %v995 = vpop.trf.xlu0
        %v996 = vpop.trf.xlu0
        %v997 = vpop.trf.xlu0
        %v998 = vpop.trf.xlu0
        %v999 = vpop.trf.xlu0
        %v1000 = vpop.trf.xlu0
        %v1003 = vcombine.high %v985, %v985
        %v1005 = vunpack.c.l.s4 1966171168
        %v1006 = vunpack.c.0.s8 %v1005
        %v1007 = vlaneseq
        %v1008 = vshrl.u32 %v1007, 7
        %v1009 = vsub.s32 %v1006, %v1008
        %v1010 = vrot.slane %v985, %v1009
        %v1012 = vunpack.c.l.s4 1966171168
        %v1013 = vunpack.c.0.s8 %v1012
        %v1014 = vlaneseq
        %v1015 = vshrl.u32 %v1014, 7
        %v1016 = vsub.s32 %v1013, %v1015
        %v1017 = vrot.slane %v1003, %v1016
        %v1018 = vcombine.high %v1010, %v1010
        %v1019 = vcombine.high %v1017, %v1017
        %v1021 = vunpack.c.l.s4 1966171168
        %v1022 = vunpack.c.0.s8 %v1021
        %v1023 = vlaneseq
        %v1024 = vshrl.u32 %v1023, 7
        %v1025 = vsub.s32 %v1022, %v1024
        %v1026 = vrot.slane %v1010, %v1025
        %v1028 = vunpack.c.l.s4 1966171168
        %v1029 = vunpack.c.0.s8 %v1028
        %v1030 = vlaneseq
        %v1031 = vshrl.u32 %v1030, 7
        %v1032 = vsub.s32 %v1029, %v1031
        %v1033 = vrot.slane %v1017, %v1032
        %v1035 = vunpack.c.l.s4 1966171168
        %v1036 = vunpack.c.0.s8 %v1035
        %v1037 = vlaneseq
        %v1038 = vshrl.u32 %v1037, 7
        %v1039 = vsub.s32 %v1036, %v1038
        %v1040 = vrot.slane %v1018, %v1039
        %v1042 = vunpack.c.l.s4 1966171168
        %v1043 = vunpack.c.0.s8 %v1042
        %v1044 = vlaneseq
        %v1045 = vshrl.u32 %v1044, 7
        %v1046 = vsub.s32 %v1043, %v1045
        %v1047 = vrot.slane %v1019, %v1046
        %v1048 = vcombine.high %v1026, %v1026
        %v1049 = vcombine.high %v1033, %v1033
        %v1050 = vcombine.high %v1040, %v1040
        %v1051 = vcombine.high %v1047, %v1047
        %v1052 = vcombine.high %v986, %v986
        %v1054 = vunpack.c.l.s4 1966171168
        %v1055 = vunpack.c.0.s8 %v1054
        %v1056 = vlaneseq
        %v1057 = vshrl.u32 %v1056, 7
        %v1058 = vsub.s32 %v1055, %v1057
        %v1059 = vrot.slane %v986, %v1058
        %v1061 = vunpack.c.l.s4 1966171168
        %v1062 = vunpack.c.0.s8 %v1061
        %v1063 = vlaneseq
        %v1064 = vshrl.u32 %v1063, 7
        %v1065 = vsub.s32 %v1062, %v1064
        %v1066 = vrot.slane %v1052, %v1065
        %v1067 = vcombine.high %v1059, %v1059
        %v1068 = vcombine.high %v1066, %v1066
        %v1070 = vunpack.c.l.s4 1966171168
        %v1071 = vunpack.c.0.s8 %v1070
        %v1072 = vlaneseq
        %v1073 = vshrl.u32 %v1072, 7
        %v1074 = vsub.s32 %v1071, %v1073
        %v1075 = vrot.slane %v1059, %v1074
        %v1077 = vunpack.c.l.s4 1966171168
        %v1078 = vunpack.c.0.s8 %v1077
        %v1079 = vlaneseq
        %v1080 = vshrl.u32 %v1079, 7
        %v1081 = vsub.s32 %v1078, %v1080
        %v1082 = vrot.slane %v1066, %v1081
        %v1084 = vunpack.c.l.s4 1966171168
        %v1085 = vunpack.c.0.s8 %v1084
        %v1086 = vlaneseq
        %v1087 = vshrl.u32 %v1086, 7
        %v1088 = vsub.s32 %v1085, %v1087
        %v1089 = vrot.slane %v1067, %v1088
        %v1091 = vunpack.c.l.s4 1966171168
        %v1092 = vunpack.c.0.s8 %v1091
        %v1093 = vlaneseq
        %v1094 = vshrl.u32 %v1093, 7
        %v1095 = vsub.s32 %v1092, %v1094
        %v1096 = vrot.slane %v1068, %v1095
        %v1097 = vcombine.high %v1075, %v1075
        %v1098 = vcombine.high %v1082, %v1082
        %v1099 = vcombine.high %v1089, %v1089
        %v1100 = vcombine.high %v1096, %v1096
        %1117 = vst.msk [vmem:[%s252 + $0x4] sm:$0x1] %vm424, %v1026
        %1118 = vst.msk [vmem:[%s252 + $0x14] sm:$0x1] %vm424, %v1040
        %1119 = vst.msk [vmem:[%s252 + $0x24] sm:$0x1] %vm424, %v1048
        %1120 = vst.msk [vmem:[%s252 + $0x34] sm:$0x1] %vm424, %v1050
        %1121 = vst.msk [vmem:[%s252 + $0x44] sm:$0x1] %vm424, %v1033
        %1122 = vst.msk [vmem:[%s252 + $0x54] sm:$0x1] %vm424, %v1047
        %1123 = vst.msk [vmem:[%s252 + $0x64] sm:$0x1] %vm424, %v1049
        %1124 = vst.msk [vmem:[%s252 + $0x74] sm:$0x1] %vm424, %v1051
        %1125 = vst.msk [vmem:[%s252 + $0x84] sm:$0x1] %vm424, %v1075
        %1126 = vst.msk [vmem:[%s252 + $0x94] sm:$0x1] %vm424, %v1089
        %1127 = vst.msk [vmem:[%s252 + $0xa4] sm:$0x1] %vm424, %v1097
        %1128 = vst.msk [vmem:[%s252 + $0xb4] sm:$0x1] %vm424, %v1099
        %1129 = vst.msk [vmem:[%s252 + $0xc4] sm:$0x1] %vm424, %v1082
        %1130 = vst.msk [vmem:[%s252 + $0xd4] sm:$0x1] %vm424, %v1096
        %1131 = vst.msk [vmem:[%s252 + $0xe4] sm:$0x1] %vm424, %v1098
        %1132 = vst.msk [vmem:[%s252 + $0xf4] sm:$0x1] %vm424, %v1100
        %v1133 = vld [vmem:[%s221 + $0x5] sm:$0x1]
        %v1134 = vld [vmem:[%s221 + $0x15] sm:$0x1]
        %v1137 = vrot.slane %v1134, 7
        %v1138 = vsel %vm271, %v1137, %v1133
        %s1140 = scalar_lea.vmem %s246, 10 [#allocation6]
        %1141 = vst.msk [vmem:[%s1140] sm:$0x3] %vm274, %v1138
        %1142 = vxpose.xlu0.b32.start [1/16] %v1138, 128
        %1143 = vxpose.xlu0.b32.cont [2/16] 0.0, 128
        %1144 = vxpose.xlu0.b32.cont [3/16] 0.0, 128
        %1145 = vxpose.xlu0.b32.cont [4/16] 0.0, 128
        %1146 = vxpose.xlu0.b32.cont [5/16] 0.0, 128
        %1147 = vxpose.xlu0.b32.cont [6/16] 0.0, 128
        %1148 = vxpose.xlu0.b32.cont [7/16] 0.0, 128
        %1149 = vxpose.xlu0.b32.cont [8/16] 0.0, 128
        %1150 = vxpose.xlu0.b32.cont [9/16] 0.0, 128
        %1151 = vxpose.xlu0.b32.cont [10/16] 0.0, 128
        %1152 = vxpose.xlu0.b32.cont [11/16] 0.0, 128
        %1153 = vxpose.xlu0.b32.cont [12/16] 0.0, 128
        %1154 = vxpose.xlu0.b32.cont [13/16] 0.0, 128
        %1155 = vxpose.xlu0.b32.cont [14/16] 0.0, 128
        %1156 = vxpose.xlu0.b32.cont [15/16] 0.0, 128
        %1157 = vxpose.xlu0.b32.end [16/16] 0.0, 128
        %v1158 = vpop.trf.xlu0
        %v1159 = vpop.trf.xlu0
        %v1160 = vpop.trf.xlu0
        %v1161 = vpop.trf.xlu0
        %v1162 = vpop.trf.xlu0
        %v1163 = vpop.trf.xlu0
        %v1164 = vpop.trf.xlu0
        %v1165 = vpop.trf.xlu0
        %v1166 = vpop.trf.xlu0
        %v1167 = vpop.trf.xlu0
        %v1168 = vpop.trf.xlu0
        %v1169 = vpop.trf.xlu0
        %v1170 = vpop.trf.xlu0
        %v1171 = vpop.trf.xlu0
        %v1172 = vpop.trf.xlu0
        %v1173 = vpop.trf.xlu0
        %v1176 = vcombine.high %v1158, %v1158
        %v1178 = vunpack.c.l.s4 1966171168
        %v1179 = vunpack.c.0.s8 %v1178
        %v1180 = vlaneseq
        %v1181 = vshrl.u32 %v1180, 7
        %v1182 = vsub.s32 %v1179, %v1181
        %v1183 = vrot.slane %v1158, %v1182
        %v1185 = vunpack.c.l.s4 1966171168
        %v1186 = vunpack.c.0.s8 %v1185
        %v1187 = vlaneseq
        %v1188 = vshrl.u32 %v1187, 7
        %v1189 = vsub.s32 %v1186, %v1188
        %v1190 = vrot.slane %v1176, %v1189
        %v1191 = vcombine.high %v1183, %v1183
        %v1192 = vcombine.high %v1190, %v1190
        %v1194 = vunpack.c.l.s4 1966171168
        %v1195 = vunpack.c.0.s8 %v1194
        %v1196 = vlaneseq
        %v1197 = vshrl.u32 %v1196, 7
        %v1198 = vsub.s32 %v1195, %v1197
        %v1199 = vrot.slane %v1183, %v1198
        %v1201 = vunpack.c.l.s4 1966171168
        %v1202 = vunpack.c.0.s8 %v1201
        %v1203 = vlaneseq
        %v1204 = vshrl.u32 %v1203, 7
        %v1205 = vsub.s32 %v1202, %v1204
        %v1206 = vrot.slane %v1190, %v1205
        %v1208 = vunpack.c.l.s4 1966171168
        %v1209 = vunpack.c.0.s8 %v1208
        %v1210 = vlaneseq
        %v1211 = vshrl.u32 %v1210, 7
        %v1212 = vsub.s32 %v1209, %v1211
        %v1213 = vrot.slane %v1191, %v1212
        %v1215 = vunpack.c.l.s4 1966171168
        %v1216 = vunpack.c.0.s8 %v1215
        %v1217 = vlaneseq
        %v1218 = vshrl.u32 %v1217, 7
        %v1219 = vsub.s32 %v1216, %v1218
        %v1220 = vrot.slane %v1192, %v1219
        %v1221 = vcombine.high %v1199, %v1199
        %v1222 = vcombine.high %v1206, %v1206
        %v1223 = vcombine.high %v1213, %v1213
        %v1224 = vcombine.high %v1220, %v1220
        %v1225 = vcombine.high %v1159, %v1159
        %v1227 = vunpack.c.l.s4 1966171168
        %v1228 = vunpack.c.0.s8 %v1227
        %v1229 = vlaneseq
        %v1230 = vshrl.u32 %v1229, 7
        %v1231 = vsub.s32 %v1228, %v1230
        %v1232 = vrot.slane %v1159, %v1231
        %v1234 = vunpack.c.l.s4 1966171168
        %v1235 = vunpack.c.0.s8 %v1234
        %v1236 = vlaneseq
        %v1237 = vshrl.u32 %v1236, 7
        %v1238 = vsub.s32 %v1235, %v1237
        %v1239 = vrot.slane %v1225, %v1238
        %v1240 = vcombine.high %v1232, %v1232
        %v1241 = vcombine.high %v1239, %v1239
        %v1243 = vunpack.c.l.s4 1966171168
        %v1244 = vunpack.c.0.s8 %v1243
        %v1245 = vlaneseq
        %v1246 = vshrl.u32 %v1245, 7
        %v1247 = vsub.s32 %v1244, %v1246
        %v1248 = vrot.slane %v1232, %v1247
        %v1250 = vunpack.c.l.s4 1966171168
        %v1251 = vunpack.c.0.s8 %v1250
        %v1252 = vlaneseq
        %v1253 = vshrl.u32 %v1252, 7
        %v1254 = vsub.s32 %v1251, %v1253
        %v1255 = vrot.slane %v1239, %v1254
        %v1257 = vunpack.c.l.s4 1966171168
        %v1258 = vunpack.c.0.s8 %v1257
        %v1259 = vlaneseq
        %v1260 = vshrl.u32 %v1259, 7
        %v1261 = vsub.s32 %v1258, %v1260
        %v1262 = vrot.slane %v1240, %v1261
        %v1264 = vunpack.c.l.s4 1966171168
        %v1265 = vunpack.c.0.s8 %v1264
        %v1266 = vlaneseq
        %v1267 = vshrl.u32 %v1266, 7
        %v1268 = vsub.s32 %v1265, %v1267
        %v1269 = vrot.slane %v1241, %v1268
        %v1270 = vcombine.high %v1248, %v1248
        %v1271 = vcombine.high %v1255, %v1255
        %v1272 = vcombine.high %v1262, %v1262
        %v1273 = vcombine.high %v1269, %v1269
        %1290 = vst.msk [vmem:[%s252 + $0x5] sm:$0x1] %vm424, %v1199
        %1291 = vst.msk [vmem:[%s252 + $0x15] sm:$0x1] %vm424, %v1213
        %1292 = vst.msk [vmem:[%s252 + $0x25] sm:$0x1] %vm424, %v1221
        %1293 = vst.msk [vmem:[%s252 + $0x35] sm:$0x1] %vm424, %v1223
        %1294 = vst.msk [vmem:[%s252 + $0x45] sm:$0x1] %vm424, %v1206
        %1295 = vst.msk [vmem:[%s252 + $0x55] sm:$0x1] %vm424, %v1220
        %1296 = vst.msk [vmem:[%s252 + $0x65] sm:$0x1] %vm424, %v1222
        %1297 = vst.msk [vmem:[%s252 + $0x75] sm:$0x1] %vm424, %v1224
        %1298 = vst.msk [vmem:[%s252 + $0x85] sm:$0x1] %vm424, %v1248
        %1299 = vst.msk [vmem:[%s252 + $0x95] sm:$0x1] %vm424, %v1262
        %1300 = vst.msk [vmem:[%s252 + $0xa5] sm:$0x1] %vm424, %v1270
        %1301 = vst.msk [vmem:[%s252 + $0xb5] sm:$0x1] %vm424, %v1272
        %1302 = vst.msk [vmem:[%s252 + $0xc5] sm:$0x1] %vm424, %v1255
        %1303 = vst.msk [vmem:[%s252 + $0xd5] sm:$0x1] %vm424, %v1269
        %1304 = vst.msk [vmem:[%s252 + $0xe5] sm:$0x1] %vm424, %v1271
        %1305 = vst.msk [vmem:[%s252 + $0xf5] sm:$0x1] %vm424, %v1273
        %v1306 = vld [vmem:[%s221 + $0x6] sm:$0x1]
        %v1307 = vld [vmem:[%s221 + $0x16] sm:$0x1]
        %v1310 = vrot.slane %v1307, 7
        %v1311 = vsel %vm271, %v1310, %v1306
        %s1313 = scalar_lea.vmem %s246, 12 [#allocation6]
        %1314 = vst.msk [vmem:[%s1313] sm:$0x3] %vm274, %v1311
        %1315 = vxpose.xlu0.b32.start [1/16] %v1311, 128
        %1316 = vxpose.xlu0.b32.cont [2/16] 0.0, 128
        %1317 = vxpose.xlu0.b32.cont [3/16] 0.0, 128
        %1318 = vxpose.xlu0.b32.cont [4/16] 0.0, 128
        %1319 = vxpose.xlu0.b32.cont [5/16] 0.0, 128
        %1320 = vxpose.xlu0.b32.cont [6/16] 0.0, 128
        %1321 = vxpose.xlu0.b32.cont [7/16] 0.0, 128
        %1322 = vxpose.xlu0.b32.cont [8/16] 0.0, 128
        %1323 = vxpose.xlu0.b32.cont [9/16] 0.0, 128
        %1324 = vxpose.xlu0.b32.cont [10/16] 0.0, 128
        %1325 = vxpose.xlu0.b32.cont [11/16] 0.0, 128
        %1326 = vxpose.xlu0.b32.cont [12/16] 0.0, 128
        %1327 = vxpose.xlu0.b32.cont [13/16] 0.0, 128
        %1328 = vxpose.xlu0.b32.cont [14/16] 0.0, 128
        %1329 = vxpose.xlu0.b32.cont [15/16] 0.0, 128
        %1330 = vxpose.xlu0.b32.end [16/16] 0.0, 128
        %v1331 = vpop.trf.xlu0
        %v1332 = vpop.trf.xlu0
        %v1333 = vpop.trf.xlu0
        %v1334 = vpop.trf.xlu0
        %v1335 = vpop.trf.xlu0
        %v1336 = vpop.trf.xlu0
        %v1337 = vpop.trf.xlu0
        %v1338 = vpop.trf.xlu0
        %v1339 = vpop.trf.xlu0
        %v1340 = vpop.trf.xlu0
        %v1341 = vpop.trf.xlu0
        %v1342 = vpop.trf.xlu0
        %v1343 = vpop.trf.xlu0
        %v1344 = vpop.trf.xlu0
        %v1345 = vpop.trf.xlu0
        %v1346 = vpop.trf.xlu0
        %v1349 = vcombine.high %v1331, %v1331
        %v1351 = vunpack.c.l.s4 1966171168
        %v1352 = vunpack.c.0.s8 %v1351
        %v1353 = vlaneseq
        %v1354 = vshrl.u32 %v1353, 7
        %v1355 = vsub.s32 %v1352, %v1354
        %v1356 = vrot.slane %v1331, %v1355
        %v1358 = vunpack.c.l.s4 1966171168
        %v1359 = vunpack.c.0.s8 %v1358
        %v1360 = vlaneseq
        %v1361 = vshrl.u32 %v1360, 7
        %v1362 = vsub.s32 %v1359, %v1361
        %v1363 = vrot.slane %v1349, %v1362
        %v1364 = vcombine.high %v1356, %v1356
        %v1365 = vcombine.high %v1363, %v1363
        %v1367 = vunpack.c.l.s4 1966171168
        %v1368 = vunpack.c.0.s8 %v1367
        %v1369 = vlaneseq
        %v1370 = vshrl.u32 %v1369, 7
        %v1371 = vsub.s32 %v1368, %v1370
        %v1372 = vrot.slane %v1356, %v1371
        %v1374 = vunpack.c.l.s4 1966171168
        %v1375 = vunpack.c.0.s8 %v1374
        %v1376 = vlaneseq
        %v1377 = vshrl.u32 %v1376, 7
        %v1378 = vsub.s32 %v1375, %v1377
        %v1379 = vrot.slane %v1363, %v1378
        %v1381 = vunpack.c.l.s4 1966171168
        %v1382 = vunpack.c.0.s8 %v1381
        %v1383 = vlaneseq
        %v1384 = vshrl.u32 %v1383, 7
        %v1385 = vsub.s32 %v1382, %v1384
        %v1386 = vrot.slane %v1364, %v1385
        %v1388 = vunpack.c.l.s4 1966171168
        %v1389 = vunpack.c.0.s8 %v1388
        %v1390 = vlaneseq
        %v1391 = vshrl.u32 %v1390, 7
        %v1392 = vsub.s32 %v1389, %v1391
        %v1393 = vrot.slane %v1365, %v1392
        %v1394 = vcombine.high %v1372, %v1372
        %v1395 = vcombine.high %v1379, %v1379
        %v1396 = vcombine.high %v1386, %v1386
        %v1397 = vcombine.high %v1393, %v1393
        %v1398 = vcombine.high %v1332, %v1332
        %v1400 = vunpack.c.l.s4 1966171168
        %v1401 = vunpack.c.0.s8 %v1400
        %v1402 = vlaneseq
        %v1403 = vshrl.u32 %v1402, 7
        %v1404 = vsub.s32 %v1401, %v1403
        %v1405 = vrot.slane %v1332, %v1404
        %v1407 = vunpack.c.l.s4 1966171168
        %v1408 = vunpack.c.0.s8 %v1407
        %v1409 = vlaneseq
        %v1410 = vshrl.u32 %v1409, 7
        %v1411 = vsub.s32 %v1408, %v1410
        %v1412 = vrot.slane %v1398, %v1411
        %v1413 = vcombine.high %v1405, %v1405
        %v1414 = vcombine.high %v1412, %v1412
        %v1416 = vunpack.c.l.s4 1966171168
        %v1417 = vunpack.c.0.s8 %v1416
        %v1418 = vlaneseq
        %v1419 = vshrl.u32 %v1418, 7
        %v1420 = vsub.s32 %v1417, %v1419
        %v1421 = vrot.slane %v1405, %v1420
        %v1423 = vunpack.c.l.s4 1966171168
        %v1424 = vunpack.c.0.s8 %v1423
        %v1425 = vlaneseq
        %v1426 = vshrl.u32 %v1425, 7
        %v1427 = vsub.s32 %v1424, %v1426
        %v1428 = vrot.slane %v1412, %v1427
        %v1430 = vunpack.c.l.s4 1966171168
        %v1431 = vunpack.c.0.s8 %v1430
        %v1432 = vlaneseq
        %v1433 = vshrl.u32 %v1432, 7
        %v1434 = vsub.s32 %v1431, %v1433
        %v1435 = vrot.slane %v1413, %v1434
        %v1437 = vunpack.c.l.s4 1966171168
        %v1438 = vunpack.c.0.s8 %v1437
        %v1439 = vlaneseq
        %v1440 = vshrl.u32 %v1439, 7
        %v1441 = vsub.s32 %v1438, %v1440
        %v1442 = vrot.slane %v1414, %v1441
        %v1443 = vcombine.high %v1421, %v1421
        %v1444 = vcombine.high %v1428, %v1428
        %v1445 = vcombine.high %v1435, %v1435
        %v1446 = vcombine.high %v1442, %v1442
        %1463 = vst.msk [vmem:[%s252 + $0x6] sm:$0x1] %vm424, %v1372
        %1464 = vst.msk [vmem:[%s252 + $0x16] sm:$0x1] %vm424, %v1386
        %1465 = vst.msk [vmem:[%s252 + $0x26] sm:$0x1] %vm424, %v1394
        %1466 = vst.msk [vmem:[%s252 + $0x36] sm:$0x1] %vm424, %v1396
        %1467 = vst.msk [vmem:[%s252 + $0x46] sm:$0x1] %vm424, %v1379
        %1468 = vst.msk [vmem:[%s252 + $0x56] sm:$0x1] %vm424, %v1393
        %1469 = vst.msk [vmem:[%s252 + $0x66] sm:$0x1] %vm424, %v1395
        %1470 = vst.msk [vmem:[%s252 + $0x76] sm:$0x1] %vm424, %v1397
        %1471 = vst.msk [vmem:[%s252 + $0x86] sm:$0x1] %vm424, %v1421
        %1472 = vst.msk [vmem:[%s252 + $0x96] sm:$0x1] %vm424, %v1435
        %1473 = vst.msk [vmem:[%s252 + $0xa6] sm:$0x1] %vm424, %v1443
        %1474 = vst.msk [vmem:[%s252 + $0xb6] sm:$0x1] %vm424, %v1445
        %1475 = vst.msk [vmem:[%s252 + $0xc6] sm:$0x1] %vm424, %v1428
        %1476 = vst.msk [vmem:[%s252 + $0xd6] sm:$0x1] %vm424, %v1442
        %1477 = vst.msk [vmem:[%s252 + $0xe6] sm:$0x1] %vm424, %v1444
        %1478 = vst.msk [vmem:[%s252 + $0xf6] sm:$0x1] %vm424, %v1446
        %v1479 = vld [vmem:[%s221 + $0x7] sm:$0x1]
        %v1480 = vld [vmem:[%s221 + $0x17] sm:$0x1]
        %v1483 = vrot.slane %v1480, 7
        %v1484 = vsel %vm271, %v1483, %v1479
        %s1486 = scalar_lea.vmem %s246, 14 [#allocation6]
        %1487 = vst.msk [vmem:[%s1486] sm:$0x3] %vm274, %v1484
        %1488 = vxpose.xlu0.b32.start [1/16] %v1484, 128
        %1489 = vxpose.xlu0.b32.cont [2/16] 0.0, 128
        %1490 = vxpose.xlu0.b32.cont [3/16] 0.0, 128
        %1491 = vxpose.xlu0.b32.cont [4/16] 0.0, 128
        %1492 = vxpose.xlu0.b32.cont [5/16] 0.0, 128
        %1493 = vxpose.xlu0.b32.cont [6/16] 0.0, 128
        %1494 = vxpose.xlu0.b32.cont [7/16] 0.0, 128
        %1495 = vxpose.xlu0.b32.cont [8/16] 0.0, 128
        %1496 = vxpose.xlu0.b32.cont [9/16] 0.0, 128
        %1497 = vxpose.xlu0.b32.cont [10/16] 0.0, 128
        %1498 = vxpose.xlu0.b32.cont [11/16] 0.0, 128
        %1499 = vxpose.xlu0.b32.cont [12/16] 0.0, 128
        %1500 = vxpose.xlu0.b32.cont [13/16] 0.0, 128
        %1501 = vxpose.xlu0.b32.cont [14/16] 0.0, 128
        %1502 = vxpose.xlu0.b32.cont [15/16] 0.0, 128
        %1503 = vxpose.xlu0.b32.end [16/16] 0.0, 128
        %v1504 = vpop.trf.xlu0
        %v1505 = vpop.trf.xlu0
        %v1506 = vpop.trf.xlu0
        %v1507 = vpop.trf.xlu0
        %v1508 = vpop.trf.xlu0
        %v1509 = vpop.trf.xlu0
        %v1510 = vpop.trf.xlu0
        %v1511 = vpop.trf.xlu0
        %v1512 = vpop.trf.xlu0
        %v1513 = vpop.trf.xlu0
        %v1514 = vpop.trf.xlu0
        %v1515 = vpop.trf.xlu0
        %v1516 = vpop.trf.xlu0
        %v1517 = vpop.trf.xlu0
        %v1518 = vpop.trf.xlu0
        %v1519 = vpop.trf.xlu0
        %v1522 = vcombine.high %v1504, %v1504
        %v1524 = vunpack.c.l.s4 1966171168
        %v1525 = vunpack.c.0.s8 %v1524
        %v1526 = vlaneseq
        %v1527 = vshrl.u32 %v1526, 7
        %v1528 = vsub.s32 %v1525, %v1527
        %v1529 = vrot.slane %v1504, %v1528
        %v1531 = vunpack.c.l.s4 1966171168
        %v1532 = vunpack.c.0.s8 %v1531
        %v1533 = vlaneseq
        %v1534 = vshrl.u32 %v1533, 7
        %v1535 = vsub.s32 %v1532, %v1534
        %v1536 = vrot.slane %v1522, %v1535
        %v1537 = vcombine.high %v1529, %v1529
        %v1538 = vcombine.high %v1536, %v1536
        %v1540 = vunpack.c.l.s4 1966171168
        %v1541 = vunpack.c.0.s8 %v1540
        %v1542 = vlaneseq
        %v1543 = vshrl.u32 %v1542, 7
        %v1544 = vsub.s32 %v1541, %v1543
        %v1545 = vrot.slane %v1529, %v1544
        %v1547 = vunpack.c.l.s4 1966171168
        %v1548 = vunpack.c.0.s8 %v1547
        %v1549 = vlaneseq
        %v1550 = vshrl.u32 %v1549, 7
        %v1551 = vsub.s32 %v1548, %v1550
        %v1552 = vrot.slane %v1536, %v1551
        %v1554 = vunpack.c.l.s4 1966171168
        %v1555 = vunpack.c.0.s8 %v1554
        %v1556 = vlaneseq
        %v1557 = vshrl.u32 %v1556, 7
        %v1558 = vsub.s32 %v1555, %v1557
        %v1559 = vrot.slane %v1537, %v1558
        %v1561 = vunpack.c.l.s4 1966171168
        %v1562 = vunpack.c.0.s8 %v1561
        %v1563 = vlaneseq
        %v1564 = vshrl.u32 %v1563, 7
        %v1565 = vsub.s32 %v1562, %v1564
        %v1566 = vrot.slane %v1538, %v1565
        %v1567 = vcombine.high %v1545, %v1545
        %v1568 = vcombine.high %v1552, %v1552
        %v1569 = vcombine.high %v1559, %v1559
        %v1570 = vcombine.high %v1566, %v1566
        %v1571 = vcombine.high %v1505, %v1505
        %v1573 = vunpack.c.l.s4 1966171168
        %v1574 = vunpack.c.0.s8 %v1573
        %v1575 = vlaneseq
        %v1576 = vshrl.u32 %v1575, 7
        %v1577 = vsub.s32 %v1574, %v1576
        %v1578 = vrot.slane %v1505, %v1577
        %v1580 = vunpack.c.l.s4 1966171168
        %v1581 = vunpack.c.0.s8 %v1580
        %v1582 = vlaneseq
        %v1583 = vshrl.u32 %v1582, 7
        %v1584 = vsub.s32 %v1581, %v1583
        %v1585 = vrot.slane %v1571, %v1584
        %v1586 = vcombine.high %v1578, %v1578
        %v1587 = vcombine.high %v1585, %v1585
        %v1589 = vunpack.c.l.s4 1966171168
        %v1590 = vunpack.c.0.s8 %v1589
        %v1591 = vlaneseq
        %v1592 = vshrl.u32 %v1591, 7
        %v1593 = vsub.s32 %v1590, %v1592
        %v1594 = vrot.slane %v1578, %v1593
        %v1596 = vunpack.c.l.s4 1966171168
        %v1597 = vunpack.c.0.s8 %v1596
        %v1598 = vlaneseq
        %v1599 = vshrl.u32 %v1598, 7
        %v1600 = vsub.s32 %v1597, %v1599
        %v1601 = vrot.slane %v1585, %v1600
        %v1603 = vunpack.c.l.s4 1966171168
        %v1604 = vunpack.c.0.s8 %v1603
        %v1605 = vlaneseq
        %v1606 = vshrl.u32 %v1605, 7
        %v1607 = vsub.s32 %v1604, %v1606
        %v1608 = vrot.slane %v1586, %v1607
        %v1610 = vunpack.c.l.s4 1966171168
        %v1611 = vunpack.c.0.s8 %v1610
        %v1612 = vlaneseq
        %v1613 = vshrl.u32 %v1612, 7
        %v1614 = vsub.s32 %v1611, %v1613
        %v1615 = vrot.slane %v1587, %v1614
        %v1616 = vcombine.high %v1594, %v1594
        %v1617 = vcombine.high %v1601, %v1601
        %v1618 = vcombine.high %v1608, %v1608
        %v1619 = vcombine.high %v1615, %v1615
        %1636 = vst.msk [vmem:[%s252 + $0x7] sm:$0x1] %vm424, %v1545
        %1637 = vst.msk [vmem:[%s252 + $0x17] sm:$0x1] %vm424, %v1559
        %1638 = vst.msk [vmem:[%s252 + $0x27] sm:$0x1] %vm424, %v1567
        %1639 = vst.msk [vmem:[%s252 + $0x37] sm:$0x1] %vm424, %v1569
        %1640 = vst.msk [vmem:[%s252 + $0x47] sm:$0x1] %vm424, %v1552
        %1641 = vst.msk [vmem:[%s252 + $0x57] sm:$0x1] %vm424, %v1566
        %1642 = vst.msk [vmem:[%s252 + $0x67] sm:$0x1] %vm424, %v1568
        %1643 = vst.msk [vmem:[%s252 + $0x77] sm:$0x1] %vm424, %v1570
        %1644 = vst.msk [vmem:[%s252 + $0x87] sm:$0x1] %vm424, %v1594
        %1645 = vst.msk [vmem:[%s252 + $0x97] sm:$0x1] %vm424, %v1608
        %1646 = vst.msk [vmem:[%s252 + $0xa7] sm:$0x1] %vm424, %v1616
        %1647 = vst.msk [vmem:[%s252 + $0xb7] sm:$0x1] %vm424, %v1618
        %1648 = vst.msk [vmem:[%s252 + $0xc7] sm:$0x1] %vm424, %v1601
        %1649 = vst.msk [vmem:[%s252 + $0xd7] sm:$0x1] %vm424, %v1615
        %1650 = vst.msk [vmem:[%s252 + $0xe7] sm:$0x1] %vm424, %v1617
        %1651 = vst.msk [vmem:[%s252 + $0xf7] sm:$0x1] %vm424, %v1619
        %v1652 = vld [vmem:[%s221 + $0x8] sm:$0x1]
        %v1653 = vld [vmem:[%s221 + $0x18] sm:$0x1]
        %v1656 = vrot.slane %v1653, 7
        %v1657 = vsel %vm271, %v1656, %v1652
        %s1659 = scalar_lea.vmem %s246, 16 [#allocation6]
        %1660 = vst.msk [vmem:[%s1659] sm:$0x3] %vm274, %v1657
        %1661 = vxpose.xlu0.b32.start [1/16] %v1657, 128
        %1662 = vxpose.xlu0.b32.cont [2/16] 0.0, 128
        %1663 = vxpose.xlu0.b32.cont [3/16] 0.0, 128
        %1664 = vxpose.xlu0.b32.cont [4/16] 0.0, 128
        %1665 = vxpose.xlu0.b32.cont [5/16] 0.0, 128
        %1666 = vxpose.xlu0.b32.cont [6/16] 0.0, 128
        %1667 = vxpose.xlu0.b32.cont [7/16] 0.0, 128
        %1668 = vxpose.xlu0.b32.cont [8/16] 0.0, 128
        %1669 = vxpose.xlu0.b32.cont [9/16] 0.0, 128
        %1670 = vxpose.xlu0.b32.cont [10/16] 0.0, 128
        %1671 = vxpose.xlu0.b32.cont [11/16] 0.0, 128
        %1672 = vxpose.xlu0.b32.cont [12/16] 0.0, 128
        %1673 = vxpose.xlu0.b32.cont [13/16] 0.0, 128
        %1674 = vxpose.xlu0.b32.cont [14/16] 0.0, 128
        %1675 = vxpose.xlu0.b32.cont [15/16] 0.0, 128
        %1676 = vxpose.xlu0.b32.end [16/16] 0.0, 128
        %v1677 = vpop.trf.xlu0
        %v1678 = vpop.trf.xlu0
        %v1679 = vpop.trf.xlu0
        %v1680 = vpop.trf.xlu0
        %v1681 = vpop.trf.xlu0
        %v1682 = vpop.trf.xlu0
        %v1683 = vpop.trf.xlu0
        %v1684 = vpop.trf.xlu0
        %v1685 = vpop.trf.xlu0
        %v1686 = vpop.trf.xlu0
        %v1687 = vpop.trf.xlu0
        %v1688 = vpop.trf.xlu0
        %v1689 = vpop.trf.xlu0
        %v1690 = vpop.trf.xlu0
        %v1691 = vpop.trf.xlu0
        %v1692 = vpop.trf.xlu0
        %v1695 = vcombine.high %v1677, %v1677
        %v1697 = vunpack.c.l.s4 1966171168
        %v1698 = vunpack.c.0.s8 %v1697
        %v1699 = vlaneseq
        %v1700 = vshrl.u32 %v1699, 7
        %v1701 = vsub.s32 %v1698, %v1700
        %v1702 = vrot.slane %v1677, %v1701
        %v1704 = vunpack.c.l.s4 1966171168
        %v1705 = vunpack.c.0.s8 %v1704
        %v1706 = vlaneseq
        %v1707 = vshrl.u32 %v1706, 7
        %v1708 = vsub.s32 %v1705, %v1707
        %v1709 = vrot.slane %v1695, %v1708
        %v1710 = vcombine.high %v1702, %v1702
        %v1711 = vcombine.high %v1709, %v1709
        %v1713 = vunpack.c.l.s4 1966171168
        %v1714 = vunpack.c.0.s8 %v1713
        %v1715 = vlaneseq
        %v1716 = vshrl.u32 %v1715, 7
        %v1717 = vsub.s32 %v1714, %v1716
        %v1718 = vrot.slane %v1702, %v1717
        %v1720 = vunpack.c.l.s4 1966171168
        %v1721 = vunpack.c.0.s8 %v1720
        %v1722 = vlaneseq
        %v1723 = vshrl.u32 %v1722, 7
        %v1724 = vsub.s32 %v1721, %v1723
        %v1725 = vrot.slane %v1709, %v1724
        %v1727 = vunpack.c.l.s4 1966171168
        %v1728 = vunpack.c.0.s8 %v1727
        %v1729 = vlaneseq
        %v1730 = vshrl.u32 %v1729, 7
        %v1731 = vsub.s32 %v1728, %v1730
        %v1732 = vrot.slane %v1710, %v1731
        %v1734 = vunpack.c.l.s4 1966171168
        %v1735 = vunpack.c.0.s8 %v1734
        %v1736 = vlaneseq
        %v1737 = vshrl.u32 %v1736, 7
        %v1738 = vsub.s32 %v1735, %v1737
        %v1739 = vrot.slane %v1711, %v1738
        %v1740 = vcombine.high %v1718, %v1718
        %v1741 = vcombine.high %v1725, %v1725
        %v1742 = vcombine.high %v1732, %v1732
        %v1743 = vcombine.high %v1739, %v1739
        %v1744 = vcombine.high %v1678, %v1678
        %v1746 = vunpack.c.l.s4 1966171168
        %v1747 = vunpack.c.0.s8 %v1746
        %v1748 = vlaneseq
        %v1749 = vshrl.u32 %v1748, 7
        %v1750 = vsub.s32 %v1747, %v1749
        %v1751 = vrot.slane %v1678, %v1750
        %v1753 = vunpack.c.l.s4 1966171168
        %v1754 = vunpack.c.0.s8 %v1753
        %v1755 = vlaneseq
        %v1756 = vshrl.u32 %v1755, 7
        %v1757 = vsub.s32 %v1754, %v1756
        %v1758 = vrot.slane %v1744, %v1757
        %v1759 = vcombine.high %v1751, %v1751
        %v1760 = vcombine.high %v1758, %v1758
        %v1762 = vunpack.c.l.s4 1966171168
        %v1763 = vunpack.c.0.s8 %v1762
        %v1764 = vlaneseq
        %v1765 = vshrl.u32 %v1764, 7
        %v1766 = vsub.s32 %v1763, %v1765
        %v1767 = vrot.slane %v1751, %v1766
        %v1769 = vunpack.c.l.s4 1966171168
        %v1770 = vunpack.c.0.s8 %v1769
        %v1771 = vlaneseq
        %v1772 = vshrl.u32 %v1771, 7
        %v1773 = vsub.s32 %v1770, %v1772
        %v1774 = vrot.slane %v1758, %v1773
        %v1776 = vunpack.c.l.s4 1966171168
        %v1777 = vunpack.c.0.s8 %v1776
        %v1778 = vlaneseq
        %v1779 = vshrl.u32 %v1778, 7
        %v1780 = vsub.s32 %v1777, %v1779
        %v1781 = vrot.slane %v1759, %v1780
        %v1783 = vunpack.c.l.s4 1966171168
        %v1784 = vunpack.c.0.s8 %v1783
        %v1785 = vlaneseq
        %v1786 = vshrl.u32 %v1785, 7
        %v1787 = vsub.s32 %v1784, %v1786
        %v1788 = vrot.slane %v1760, %v1787
        %v1789 = vcombine.high %v1767, %v1767
        %v1790 = vcombine.high %v1774, %v1774
        %v1791 = vcombine.high %v1781, %v1781
        %v1792 = vcombine.high %v1788, %v1788
        %1809 = vst.msk [vmem:[%s252 + $0x8] sm:$0x1] %vm424, %v1718
        %1810 = vst.msk [vmem:[%s252 + $0x18] sm:$0x1] %vm424, %v1732
        %1811 = vst.msk [vmem:[%s252 + $0x28] sm:$0x1] %vm424, %v1740
        %1812 = vst.msk [vmem:[%s252 + $0x38] sm:$0x1] %vm424, %v1742
        %1813 = vst.msk [vmem:[%s252 + $0x48] sm:$0x1] %vm424, %v1725
        %1814 = vst.msk [vmem:[%s252 + $0x58] sm:$0x1] %vm424, %v1739
        %1815 = vst.msk [vmem:[%s252 + $0x68] sm:$0x1] %vm424, %v1741
        %1816 = vst.msk [vmem:[%s252 + $0x78] sm:$0x1] %vm424, %v1743
        %1817 = vst.msk [vmem:[%s252 + $0x88] sm:$0x1] %vm424, %v1767
        %1818 = vst.msk [vmem:[%s252 + $0x98] sm:$0x1] %vm424, %v1781
        %1819 = vst.msk [vmem:[%s252 + $0xa8] sm:$0x1] %vm424, %v1789
        %1820 = vst.msk [vmem:[%s252 + $0xb8] sm:$0x1] %vm424, %v1791
        %1821 = vst.msk [vmem:[%s252 + $0xc8] sm:$0x1] %vm424, %v1774
        %1822 = vst.msk [vmem:[%s252 + $0xd8] sm:$0x1] %vm424, %v1788
        %1823 = vst.msk [vmem:[%s252 + $0xe8] sm:$0x1] %vm424, %v1790
        %1824 = vst.msk [vmem:[%s252 + $0xf8] sm:$0x1] %vm424, %v1792
        %v1825 = vld [vmem:[%s221 + $0x9] sm:$0x1]
        %v1826 = vld [vmem:[%s221 + $0x19] sm:$0x1]
        %v1829 = vrot.slane %v1826, 7
        %v1830 = vsel %vm271, %v1829, %v1825
        %s1832 = scalar_lea.vmem %s246, 18 [#allocation6]
        %1833 = vst.msk [vmem:[%s1832] sm:$0x3] %vm274, %v1830
        %1834 = vxpose.xlu0.b32.start [1/16] %v1830, 128
        %1835 = vxpose.xlu0.b32.cont [2/16] 0.0, 128
        %1836 = vxpose.xlu0.b32.cont [3/16] 0.0, 128
        %1837 = vxpose.xlu0.b32.cont [4/16] 0.0, 128
        %1838 = vxpose.xlu0.b32.cont [5/16] 0.0, 128
        %1839 = vxpose.xlu0.b32.cont [6/16] 0.0, 128
        %1840 = vxpose.xlu0.b32.cont [7/16] 0.0, 128
        %1841 = vxpose.xlu0.b32.cont [8/16] 0.0, 128
        %1842 = vxpose.xlu0.b32.cont [9/16] 0.0, 128
        %1843 = vxpose.xlu0.b32.cont [10/16] 0.0, 128
        %1844 = vxpose.xlu0.b32.cont [11/16] 0.0, 128
        %1845 = vxpose.xlu0.b32.cont [12/16] 0.0, 128
        %1846 = vxpose.xlu0.b32.cont [13/16] 0.0, 128
        %1847 = vxpose.xlu0.b32.cont [14/16] 0.0, 128
        %1848 = vxpose.xlu0.b32.cont [15/16] 0.0, 128
        %1849 = vxpose.xlu0.b32.end [16/16] 0.0, 128
        %v1850 = vpop.trf.xlu0
        %v1851 = vpop.trf.xlu0
        %v1852 = vpop.trf.xlu0
        %v1853 = vpop.trf.xlu0
        %v1854 = vpop.trf.xlu0
        %v1855 = vpop.trf.xlu0
        %v1856 = vpop.trf.xlu0
        %v1857 = vpop.trf.xlu0
        %v1858 = vpop.trf.xlu0
        %v1859 = vpop.trf.xlu0
        %v1860 = vpop.trf.xlu0
        %v1861 = vpop.trf.xlu0
        %v1862 = vpop.trf.xlu0
        %v1863 = vpop.trf.xlu0
        %v1864 = vpop.trf.xlu0
        %v1865 = vpop.trf.xlu0
        %v1868 = vcombine.high %v1850, %v1850
        %v1870 = vunpack.c.l.s4 1966171168
        %v1871 = vunpack.c.0.s8 %v1870
        %v1872 = vlaneseq
        %v1873 = vshrl.u32 %v1872, 7
        %v1874 = vsub.s32 %v1871, %v1873
        %v1875 = vrot.slane %v1850, %v1874
        %v1877 = vunpack.c.l.s4 1966171168
        %v1878 = vunpack.c.0.s8 %v1877
        %v1879 = vlaneseq
        %v1880 = vshrl.u32 %v1879, 7
        %v1881 = vsub.s32 %v1878, %v1880
        %v1882 = vrot.slane %v1868, %v1881
        %v1883 = vcombine.high %v1875, %v1875
        %v1884 = vcombine.high %v1882, %v1882
        %v1886 = vunpack.c.l.s4 1966171168
        %v1887 = vunpack.c.0.s8 %v1886
        %v1888 = vlaneseq
        %v1889 = vshrl.u32 %v1888, 7
        %v1890 = vsub.s32 %v1887, %v1889
        %v1891 = vrot.slane %v1875, %v1890
        %v1893 = vunpack.c.l.s4 1966171168
        %v1894 = vunpack.c.0.s8 %v1893
        %v1895 = vlaneseq
        %v1896 = vshrl.u32 %v1895, 7
        %v1897 = vsub.s32 %v1894, %v1896
        %v1898 = vrot.slane %v1882, %v1897
        %v1900 = vunpack.c.l.s4 1966171168
        %v1901 = vunpack.c.0.s8 %v1900
        %v1902 = vlaneseq
        %v1903 = vshrl.u32 %v1902, 7
        %v1904 = vsub.s32 %v1901, %v1903
        %v1905 = vrot.slane %v1883, %v1904
        %v1907 = vunpack.c.l.s4 1966171168
        %v1908 = vunpack.c.0.s8 %v1907
        %v1909 = vlaneseq
        %v1910 = vshrl.u32 %v1909, 7
        %v1911 = vsub.s32 %v1908, %v1910
        %v1912 = vrot.slane %v1884, %v1911
        %v1913 = vcombine.high %v1891, %v1891
        %v1914 = vcombine.high %v1898, %v1898
        %v1915 = vcombine.high %v1905, %v1905
        %v1916 = vcombine.high %v1912, %v1912
        %v1917 = vcombine.high %v1851, %v1851
        %v1919 = vunpack.c.l.s4 1966171168
        %v1920 = vunpack.c.0.s8 %v1919
        %v1921 = vlaneseq
        %v1922 = vshrl.u32 %v1921, 7
        %v1923 = vsub.s32 %v1920, %v1922
        %v1924 = vrot.slane %v1851, %v1923
        %v1926 = vunpack.c.l.s4 1966171168
        %v1927 = vunpack.c.0.s8 %v1926
        %v1928 = vlaneseq
        %v1929 = vshrl.u32 %v1928, 7
        %v1930 = vsub.s32 %v1927, %v1929
        %v1931 = vrot.slane %v1917, %v1930
        %v1932 = vcombine.high %v1924, %v1924
        %v1933 = vcombine.high %v1931, %v1931
        %v1935 = vunpack.c.l.s4 1966171168
        %v1936 = vunpack.c.0.s8 %v1935
        %v1937 = vlaneseq
        %v1938 = vshrl.u32 %v1937, 7
        %v1939 = vsub.s32 %v1936, %v1938
        %v1940 = vrot.slane %v1924, %v1939
        %v1942 = vunpack.c.l.s4 1966171168
        %v1943 = vunpack.c.0.s8 %v1942
        %v1944 = vlaneseq
        %v1945 = vshrl.u32 %v1944, 7
        %v1946 = vsub.s32 %v1943, %v1945
        %v1947 = vrot.slane %v1931, %v1946
        %v1949 = vunpack.c.l.s4 1966171168
        %v1950 = vunpack.c.0.s8 %v1949
        %v1951 = vlaneseq
        %v1952 = vshrl.u32 %v1951, 7
        %v1953 = vsub.s32 %v1950, %v1952
        %v1954 = vrot.slane %v1932, %v1953
        %v1956 = vunpack.c.l.s4 1966171168
        %v1957 = vunpack.c.0.s8 %v1956
        %v1958 = vlaneseq
        %v1959 = vshrl.u32 %v1958, 7
        %v1960 = vsub.s32 %v1957, %v1959
        %v1961 = vrot.slane %v1933, %v1960
        %v1962 = vcombine.high %v1940, %v1940
        %v1963 = vcombine.high %v1947, %v1947
        %v1964 = vcombine.high %v1954, %v1954
        %v1965 = vcombine.high %v1961, %v1961
        %1982 = vst.msk [vmem:[%s252 + $0x9] sm:$0x1] %vm424, %v1891
        %1983 = vst.msk [vmem:[%s252 + $0x19] sm:$0x1] %vm424, %v1905
        %1984 = vst.msk [vmem:[%s252 + $0x29] sm:$0x1] %vm424, %v1913
        %1985 = vst.msk [vmem:[%s252 + $0x39] sm:$0x1] %vm424, %v1915
        %1986 = vst.msk [vmem:[%s252 + $0x49] sm:$0x1] %vm424, %v1898
        %1987 = vst.msk [vmem:[%s252 + $0x59] sm:$0x1] %vm424, %v1912
        %1988 = vst.msk [vmem:[%s252 + $0x69] sm:$0x1] %vm424, %v1914
        %1989 = vst.msk [vmem:[%s252 + $0x79] sm:$0x1] %vm424, %v1916
        %1990 = vst.msk [vmem:[%s252 + $0x89] sm:$0x1] %vm424, %v1940
        %1991 = vst.msk [vmem:[%s252 + $0x99] sm:$0x1] %vm424, %v1954
        %1992 = vst.msk [vmem:[%s252 + $0xa9] sm:$0x1] %vm424, %v1962
        %1993 = vst.msk [vmem:[%s252 + $0xb9] sm:$0x1] %vm424, %v1964
        %1994 = vst.msk [vmem:[%s252 + $0xc9] sm:$0x1] %vm424, %v1947
        %1995 = vst.msk [vmem:[%s252 + $0xd9] sm:$0x1] %vm424, %v1961
        %1996 = vst.msk [vmem:[%s252 + $0xe9] sm:$0x1] %vm424, %v1963
        %1997 = vst.msk [vmem:[%s252 + $0xf9] sm:$0x1] %vm424, %v1965
        %v1998 = vld [vmem:[%s221 + $0xa] sm:$0x1]
        %v1999 = vld [vmem:[%s221 + $0x1a] sm:$0x1]
        %v2002 = vrot.slane %v1999, 7
        %v2003 = vsel %vm271, %v2002, %v1998
        %s2005 = scalar_lea.vmem %s246, 20 [#allocation6]
        %2006 = vst.msk [vmem:[%s2005] sm:$0x3] %vm274, %v2003
        %2007 = vxpose.xlu0.b32.start [1/16] %v2003, 128
        %2008 = vxpose.xlu0.b32.cont [2/16] 0.0, 128
        %2009 = vxpose.xlu0.b32.cont [3/16] 0.0, 128
        %2010 = vxpose.xlu0.b32.cont [4/16] 0.0, 128
        %2011 = vxpose.xlu0.b32.cont [5/16] 0.0, 128
        %2012 = vxpose.xlu0.b32.cont [6/16] 0.0, 128
        %2013 = vxpose.xlu0.b32.cont [7/16] 0.0, 128
        %2014 = vxpose.xlu0.b32.cont [8/16] 0.0, 128
        %2015 = vxpose.xlu0.b32.cont [9/16] 0.0, 128
        %2016 = vxpose.xlu0.b32.cont [10/16] 0.0, 128
        %2017 = vxpose.xlu0.b32.cont [11/16] 0.0, 128
        %2018 = vxpose.xlu0.b32.cont [12/16] 0.0, 128
        %2019 = vxpose.xlu0.b32.cont [13/16] 0.0, 128
        %2020 = vxpose.xlu0.b32.cont [14/16] 0.0, 128
        %2021 = vxpose.xlu0.b32.cont [15/16] 0.0, 128
        %2022 = vxpose.xlu0.b32.end [16/16] 0.0, 128
        %v2023 = vpop.trf.xlu0
        %v2024 = vpop.trf.xlu0
        %v2025 = vpop.trf.xlu0
        %v2026 = vpop.trf.xlu0
        %v2027 = vpop.trf.xlu0
        %v2028 = vpop.trf.xlu0
        %v2029 = vpop.trf.xlu0
        %v2030 = vpop.trf.xlu0
        %v2031 = vpop.trf.xlu0
        %v2032 = vpop.trf.xlu0
        %v2033 = vpop.trf.xlu0
        %v2034 = vpop.trf.xlu0
        %v2035 = vpop.trf.xlu0
        %v2036 = vpop.trf.xlu0
        %v2037 = vpop.trf.xlu0
        %v2038 = vpop.trf.xlu0
        %v2041 = vcombine.high %v2023, %v2023
        %v2043 = vunpack.c.l.s4 1966171168
        %v2044 = vunpack.c.0.s8 %v2043
        %v2045 = vlaneseq
        %v2046 = vshrl.u32 %v2045, 7
        %v2047 = vsub.s32 %v2044, %v2046
        %v2048 = vrot.slane %v2023, %v2047
        %v2050 = vunpack.c.l.s4 1966171168
        %v2051 = vunpack.c.0.s8 %v2050
        %v2052 = vlaneseq
        %v2053 = vshrl.u32 %v2052, 7
        %v2054 = vsub.s32 %v2051, %v2053
        %v2055 = vrot.slane %v2041, %v2054
        %v2056 = vcombine.high %v2048, %v2048
        %v2057 = vcombine.high %v2055, %v2055
        %v2059 = vunpack.c.l.s4 1966171168
        %v2060 = vunpack.c.0.s8 %v2059
        %v2061 = vlaneseq
        %v2062 = vshrl.u32 %v2061, 7
        %v2063 = vsub.s32 %v2060, %v2062
        %v2064 = vrot.slane %v2048, %v2063
        %v2066 = vunpack.c.l.s4 1966171168
        %v2067 = vunpack.c.0.s8 %v2066
        %v2068 = vlaneseq
        %v2069 = vshrl.u32 %v2068, 7
        %v2070 = vsub.s32 %v2067, %v2069
        %v2071 = vrot.slane %v2055, %v2070
        %v2073 = vunpack.c.l.s4 1966171168
        %v2074 = vunpack.c.0.s8 %v2073
        %v2075 = vlaneseq
        %v2076 = vshrl.u32 %v2075, 7
        %v2077 = vsub.s32 %v2074, %v2076
        %v2078 = vrot.slane %v2056, %v2077
        %v2080 = vunpack.c.l.s4 1966171168
        %v2081 = vunpack.c.0.s8 %v2080
        %v2082 = vlaneseq
        %v2083 = vshrl.u32 %v2082, 7
        %v2084 = vsub.s32 %v2081, %v2083
        %v2085 = vrot.slane %v2057, %v2084
        %v2086 = vcombine.high %v2064, %v2064
        %v2087 = vcombine.high %v2071, %v2071
        %v2088 = vcombine.high %v2078, %v2078
        %v2089 = vcombine.high %v2085, %v2085
        %v2090 = vcombine.high %v2024, %v2024
        %v2092 = vunpack.c.l.s4 1966171168
        %v2093 = vunpack.c.0.s8 %v2092
        %v2094 = vlaneseq
        %v2095 = vshrl.u32 %v2094, 7
        %v2096 = vsub.s32 %v2093, %v2095
        %v2097 = vrot.slane %v2024, %v2096
        %v2099 = vunpack.c.l.s4 1966171168
        %v2100 = vunpack.c.0.s8 %v2099
        %v2101 = vlaneseq
        %v2102 = vshrl.u32 %v2101, 7
        %v2103 = vsub.s32 %v2100, %v2102
        %v2104 = vrot.slane %v2090, %v2103
        %v2105 = vcombine.high %v2097, %v2097
        %v2106 = vcombine.high %v2104, %v2104
        %v2108 = vunpack.c.l.s4 1966171168
        %v2109 = vunpack.c.0.s8 %v2108
        %v2110 = vlaneseq
        %v2111 = vshrl.u32 %v2110, 7
        %v2112 = vsub.s32 %v2109, %v2111
        %v2113 = vrot.slane %v2097, %v2112
        %v2115 = vunpack.c.l.s4 1966171168
        %v2116 = vunpack.c.0.s8 %v2115
        %v2117 = vlaneseq
        %v2118 = vshrl.u32 %v2117, 7
        %v2119 = vsub.s32 %v2116, %v2118
        %v2120 = vrot.slane %v2104, %v2119
        %v2122 = vunpack.c.l.s4 1966171168
        %v2123 = vunpack.c.0.s8 %v2122
        %v2124 = vlaneseq
        %v2125 = vshrl.u32 %v2124, 7
        %v2126 = vsub.s32 %v2123, %v2125
        %v2127 = vrot.slane %v2105, %v2126
        %v2129 = vunpack.c.l.s4 1966171168
        %v2130 = vunpack.c.0.s8 %v2129
        %v2131 = vlaneseq
        %v2132 = vshrl.u32 %v2131, 7
        %v2133 = vsub.s32 %v2130, %v2132
        %v2134 = vrot.slane %v2106, %v2133
        %v2135 = vcombine.high %v2113, %v2113
        %v2136 = vcombine.high %v2120, %v2120
        %v2137 = vcombine.high %v2127, %v2127
        %v2138 = vcombine.high %v2134, %v2134
        %2155 = vst.msk [vmem:[%s252 + $0xa] sm:$0x1] %vm424, %v2064
        %2156 = vst.msk [vmem:[%s252 + $0x1a] sm:$0x1] %vm424, %v2078
        %2157 = vst.msk [vmem:[%s252 + $0x2a] sm:$0x1] %vm424, %v2086
        %2158 = vst.msk [vmem:[%s252 + $0x3a] sm:$0x1] %vm424, %v2088
        %2159 = vst.msk [vmem:[%s252 + $0x4a] sm:$0x1] %vm424, %v2071
        %2160 = vst.msk [vmem:[%s252 + $0x5a] sm:$0x1] %vm424, %v2085
        %2161 = vst.msk [vmem:[%s252 + $0x6a] sm:$0x1] %vm424, %v2087
        %2162 = vst.msk [vmem:[%s252 + $0x7a] sm:$0x1] %vm424, %v2089
        %2163 = vst.msk [vmem:[%s252 + $0x8a] sm:$0x1] %vm424, %v2113
        %2164 = vst.msk [vmem:[%s252 + $0x9a] sm:$0x1] %vm424, %v2127
        %2165 = vst.msk [vmem:[%s252 + $0xaa] sm:$0x1] %vm424, %v2135
        %2166 = vst.msk [vmem:[%s252 + $0xba] sm:$0x1] %vm424, %v2137
        %2167 = vst.msk [vmem:[%s252 + $0xca] sm:$0x1] %vm424, %v2120
        %2168 = vst.msk [vmem:[%s252 + $0xda] sm:$0x1] %vm424, %v2134
        %2169 = vst.msk [vmem:[%s252 + $0xea] sm:$0x1] %vm424, %v2136
        %2170 = vst.msk [vmem:[%s252 + $0xfa] sm:$0x1] %vm424, %v2138
        %v2171 = vld [vmem:[%s221 + $0xb] sm:$0x1]
        %v2172 = vld [vmem:[%s221 + $0x1b] sm:$0x1]
        %v2175 = vrot.slane %v2172, 7
        %v2176 = vsel %vm271, %v2175, %v2171
        %s2178 = scalar_lea.vmem %s246, 22 [#allocation6]
        %2179 = vst.msk [vmem:[%s2178] sm:$0x3] %vm274, %v2176
        %2180 = vxpose.xlu0.b32.start [1/16] %v2176, 128
        %2181 = vxpose.xlu0.b32.cont [2/16] 0.0, 128
        %2182 = vxpose.xlu0.b32.cont [3/16] 0.0, 128
        %2183 = vxpose.xlu0.b32.cont [4/16] 0.0, 128
        %2184 = vxpose.xlu0.b32.cont [5/16] 0.0, 128
        %2185 = vxpose.xlu0.b32.cont [6/16] 0.0, 128
        %2186 = vxpose.xlu0.b32.cont [7/16] 0.0, 128
        %2187 = vxpose.xlu0.b32.cont [8/16] 0.0, 128
        %2188 = vxpose.xlu0.b32.cont [9/16] 0.0, 128
        %2189 = vxpose.xlu0.b32.cont [10/16] 0.0, 128
        %2190 = vxpose.xlu0.b32.cont [11/16] 0.0, 128
        %2191 = vxpose.xlu0.b32.cont [12/16] 0.0, 128
        %2192 = vxpose.xlu0.b32.cont [13/16] 0.0, 128
        %2193 = vxpose.xlu0.b32.cont [14/16] 0.0, 128
        %2194 = vxpose.xlu0.b32.cont [15/16] 0.0, 128
        %2195 = vxpose.xlu0.b32.end [16/16] 0.0, 128
        %v2196 = vpop.trf.xlu0
        %v2197 = vpop.trf.xlu0
        %v2198 = vpop.trf.xlu0
        %v2199 = vpop.trf.xlu0
        %v2200 = vpop.trf.xlu0
        %v2201 = vpop.trf.xlu0
        %v2202 = vpop.trf.xlu0
        %v2203 = vpop.trf.xlu0
        %v2204 = vpop.trf.xlu0
        %v2205 = vpop.trf.xlu0
        %v2206 = vpop.trf.xlu0
        %v2207 = vpop.trf.xlu0
        %v2208 = vpop.trf.xlu0
        %v2209 = vpop.trf.xlu0
        %v2210 = vpop.trf.xlu0
        %v2211 = vpop.trf.xlu0
        %v2214 = vcombine.high %v2196, %v2196
        %v2216 = vunpack.c.l.s4 1966171168
        %v2217 = vunpack.c.0.s8 %v2216
        %v2218 = vlaneseq
        %v2219 = vshrl.u32 %v2218, 7
        %v2220 = vsub.s32 %v2217, %v2219
        %v2221 = vrot.slane %v2196, %v2220
        %v2223 = vunpack.c.l.s4 1966171168
        %v2224 = vunpack.c.0.s8 %v2223
        %v2225 = vlaneseq
        %v2226 = vshrl.u32 %v2225, 7
        %v2227 = vsub.s32 %v2224, %v2226
        %v2228 = vrot.slane %v2214, %v2227
        %v2229 = vcombine.high %v2221, %v2221
        %v2230 = vcombine.high %v2228, %v2228
        %v2232 = vunpack.c.l.s4 1966171168
        %v2233 = vunpack.c.0.s8 %v2232
        %v2234 = vlaneseq
        %v2235 = vshrl.u32 %v2234, 7
        %v2236 = vsub.s32 %v2233, %v2235
        %v2237 = vrot.slane %v2221, %v2236
        %v2239 = vunpack.c.l.s4 1966171168
        %v2240 = vunpack.c.0.s8 %v2239
        %v2241 = vlaneseq
        %v2242 = vshrl.u32 %v2241, 7
        %v2243 = vsub.s32 %v2240, %v2242
        %v2244 = vrot.slane %v2228, %v2243
        %v2246 = vunpack.c.l.s4 1966171168
        %v2247 = vunpack.c.0.s8 %v2246
        %v2248 = vlaneseq
        %v2249 = vshrl.u32 %v2248, 7
        %v2250 = vsub.s32 %v2247, %v2249
        %v2251 = vrot.slane %v2229, %v2250
        %v2253 = vunpack.c.l.s4 1966171168
        %v2254 = vunpack.c.0.s8 %v2253
        %v2255 = vlaneseq
        %v2256 = vshrl.u32 %v2255, 7
        %v2257 = vsub.s32 %v2254, %v2256
        %v2258 = vrot.slane %v2230, %v2257
        %v2259 = vcombine.high %v2237, %v2237
        %v2260 = vcombine.high %v2244, %v2244
        %v2261 = vcombine.high %v2251, %v2251
        %v2262 = vcombine.high %v2258, %v2258
        %v2263 = vcombine.high %v2197, %v2197
        %v2265 = vunpack.c.l.s4 1966171168
        %v2266 = vunpack.c.0.s8 %v2265
        %v2267 = vlaneseq
        %v2268 = vshrl.u32 %v2267, 7
        %v2269 = vsub.s32 %v2266, %v2268
        %v2270 = vrot.slane %v2197, %v2269
        %v2272 = vunpack.c.l.s4 1966171168
        %v2273 = vunpack.c.0.s8 %v2272
        %v2274 = vlaneseq
        %v2275 = vshrl.u32 %v2274, 7
        %v2276 = vsub.s32 %v2273, %v2275
        %v2277 = vrot.slane %v2263, %v2276
        %v2278 = vcombine.high %v2270, %v2270
        %v2279 = vcombine.high %v2277, %v2277
        %v2281 = vunpack.c.l.s4 1966171168
        %v2282 = vunpack.c.0.s8 %v2281
        %v2283 = vlaneseq
        %v2284 = vshrl.u32 %v2283, 7
        %v2285 = vsub.s32 %v2282, %v2284
        %v2286 = vrot.slane %v2270, %v2285
        %v2288 = vunpack.c.l.s4 1966171168
        %v2289 = vunpack.c.0.s8 %v2288
        %v2290 = vlaneseq
        %v2291 = vshrl.u32 %v2290, 7
        %v2292 = vsub.s32 %v2289, %v2291
        %v2293 = vrot.slane %v2277, %v2292
        %v2295 = vunpack.c.l.s4 1966171168
        %v2296 = vunpack.c.0.s8 %v2295
        %v2297 = vlaneseq
        %v2298 = vshrl.u32 %v2297, 7
        %v2299 = vsub.s32 %v2296, %v2298
        %v2300 = vrot.slane %v2278, %v2299
        %v2302 = vunpack.c.l.s4 1966171168
        %v2303 = vunpack.c.0.s8 %v2302
        %v2304 = vlaneseq
        %v2305 = vshrl.u32 %v2304, 7
        %v2306 = vsub.s32 %v2303, %v2305
        %v2307 = vrot.slane %v2279, %v2306
        %v2308 = vcombine.high %v2286, %v2286
        %v2309 = vcombine.high %v2293, %v2293
        %v2310 = vcombine.high %v2300, %v2300
        %v2311 = vcombine.high %v2307, %v2307
        %2328 = vst.msk [vmem:[%s252 + $0xb] sm:$0x1] %vm424, %v2237
        %2329 = vst.msk [vmem:[%s252 + $0x1b] sm:$0x1] %vm424, %v2251
        %2330 = vst.msk [vmem:[%s252 + $0x2b] sm:$0x1] %vm424, %v2259
        %2331 = vst.msk [vmem:[%s252 + $0x3b] sm:$0x1] %vm424, %v2261
        %2332 = vst.msk [vmem:[%s252 + $0x4b] sm:$0x1] %vm424, %v2244
        %2333 = vst.msk [vmem:[%s252 + $0x5b] sm:$0x1] %vm424, %v2258
        %2334 = vst.msk [vmem:[%s252 + $0x6b] sm:$0x1] %vm424, %v2260
        %2335 = vst.msk [vmem:[%s252 + $0x7b] sm:$0x1] %vm424, %v2262
        %2336 = vst.msk [vmem:[%s252 + $0x8b] sm:$0x1] %vm424, %v2286
        %2337 = vst.msk [vmem:[%s252 + $0x9b] sm:$0x1] %vm424, %v2300
        %2338 = vst.msk [vmem:[%s252 + $0xab] sm:$0x1] %vm424, %v2308
        %2339 = vst.msk [vmem:[%s252 + $0xbb] sm:$0x1] %vm424, %v2310
        %2340 = vst.msk [vmem:[%s252 + $0xcb] sm:$0x1] %vm424, %v2293
        %2341 = vst.msk [vmem:[%s252 + $0xdb] sm:$0x1] %vm424, %v2307
        %2342 = vst.msk [vmem:[%s252 + $0xeb] sm:$0x1] %vm424, %v2309
        %2343 = vst.msk [vmem:[%s252 + $0xfb] sm:$0x1] %vm424, %v2311
        %v2344 = vld [vmem:[%s221 + $0xc] sm:$0x1]
        %v2345 = vld [vmem:[%s221 + $0x1c] sm:$0x1]
        %v2348 = vrot.slane %v2345, 7
        %v2349 = vsel %vm271, %v2348, %v2344
        %s2351 = scalar_lea.vmem %s246, 24 [#allocation6]
        %2352 = vst.msk [vmem:[%s2351] sm:$0x3] %vm274, %v2349
        %2353 = vxpose.xlu0.b32.start [1/16] %v2349, 128
        %2354 = vxpose.xlu0.b32.cont [2/16] 0.0, 128
        %2355 = vxpose.xlu0.b32.cont [3/16] 0.0, 128
        %2356 = vxpose.xlu0.b32.cont [4/16] 0.0, 128
        %2357 = vxpose.xlu0.b32.cont [5/16] 0.0, 128
        %2358 = vxpose.xlu0.b32.cont [6/16] 0.0, 128
        %2359 = vxpose.xlu0.b32.cont [7/16] 0.0, 128
        %2360 = vxpose.xlu0.b32.cont [8/16] 0.0, 128
        %2361 = vxpose.xlu0.b32.cont [9/16] 0.0, 128
        %2362 = vxpose.xlu0.b32.cont [10/16] 0.0, 128
        %2363 = vxpose.xlu0.b32.cont [11/16] 0.0, 128
        %2364 = vxpose.xlu0.b32.cont [12/16] 0.0, 128
        %2365 = vxpose.xlu0.b32.cont [13/16] 0.0, 128
        %2366 = vxpose.xlu0.b32.cont [14/16] 0.0, 128
        %2367 = vxpose.xlu0.b32.cont [15/16] 0.0, 128
        %2368 = vxpose.xlu0.b32.end [16/16] 0.0, 128
        %v2369 = vpop.trf.xlu0
        %v2370 = vpop.trf.xlu0
        %v2371 = vpop.trf.xlu0
        %v2372 = vpop.trf.xlu0
        %v2373 = vpop.trf.xlu0
        %v2374 = vpop.trf.xlu0
        %v2375 = vpop.trf.xlu0
        %v2376 = vpop.trf.xlu0
        %v2377 = vpop.trf.xlu0
        %v2378 = vpop.trf.xlu0
        %v2379 = vpop.trf.xlu0
        %v2380 = vpop.trf.xlu0
        %v2381 = vpop.trf.xlu0
        %v2382 = vpop.trf.xlu0
        %v2383 = vpop.trf.xlu0
        %v2384 = vpop.trf.xlu0
        %v2387 = vcombine.high %v2369, %v2369
        %v2389 = vunpack.c.l.s4 1966171168
        %v2390 = vunpack.c.0.s8 %v2389
        %v2391 = vlaneseq
        %v2392 = vshrl.u32 %v2391, 7
        %v2393 = vsub.s32 %v2390, %v2392
        %v2394 = vrot.slane %v2369, %v2393
        %v2396 = vunpack.c.l.s4 1966171168
        %v2397 = vunpack.c.0.s8 %v2396
        %v2398 = vlaneseq
        %v2399 = vshrl.u32 %v2398, 7
        %v2400 = vsub.s32 %v2397, %v2399
        %v2401 = vrot.slane %v2387, %v2400
        %v2402 = vcombine.high %v2394, %v2394
        %v2403 = vcombine.high %v2401, %v2401
        %v2405 = vunpack.c.l.s4 1966171168
        %v2406 = vunpack.c.0.s8 %v2405
        %v2407 = vlaneseq
        %v2408 = vshrl.u32 %v2407, 7
        %v2409 = vsub.s32 %v2406, %v2408
        %v2410 = vrot.slane %v2394, %v2409
        %v2412 = vunpack.c.l.s4 1966171168
        %v2413 = vunpack.c.0.s8 %v2412
        %v2414 = vlaneseq
        %v2415 = vshrl.u32 %v2414, 7
        %v2416 = vsub.s32 %v2413, %v2415
        %v2417 = vrot.slane %v2401, %v2416
        %v2419 = vunpack.c.l.s4 1966171168
        %v2420 = vunpack.c.0.s8 %v2419
        %v2421 = vlaneseq
        %v2422 = vshrl.u32 %v2421, 7
        %v2423 = vsub.s32 %v2420, %v2422
        %v2424 = vrot.slane %v2402, %v2423
        %v2426 = vunpack.c.l.s4 1966171168
        %v2427 = vunpack.c.0.s8 %v2426
        %v2428 = vlaneseq
        %v2429 = vshrl.u32 %v2428, 7
        %v2430 = vsub.s32 %v2427, %v2429
        %v2431 = vrot.slane %v2403, %v2430
        %v2432 = vcombine.high %v2410, %v2410
        %v2433 = vcombine.high %v2417, %v2417
        %v2434 = vcombine.high %v2424, %v2424
        %v2435 = vcombine.high %v2431, %v2431
        %v2436 = vcombine.high %v2370, %v2370
        %v2438 = vunpack.c.l.s4 1966171168
        %v2439 = vunpack.c.0.s8 %v2438
        %v2440 = vlaneseq
        %v2441 = vshrl.u32 %v2440, 7
        %v2442 = vsub.s32 %v2439, %v2441
        %v2443 = vrot.slane %v2370, %v2442
        %v2445 = vunpack.c.l.s4 1966171168
        %v2446 = vunpack.c.0.s8 %v2445
        %v2447 = vlaneseq
        %v2448 = vshrl.u32 %v2447, 7
        %v2449 = vsub.s32 %v2446, %v2448
        %v2450 = vrot.slane %v2436, %v2449
        %v2451 = vcombine.high %v2443, %v2443
        %v2452 = vcombine.high %v2450, %v2450
        %v2454 = vunpack.c.l.s4 1966171168
        %v2455 = vunpack.c.0.s8 %v2454
        %v2456 = vlaneseq
        %v2457 = vshrl.u32 %v2456, 7
        %v2458 = vsub.s32 %v2455, %v2457
        %v2459 = vrot.slane %v2443, %v2458
        %v2461 = vunpack.c.l.s4 1966171168
        %v2462 = vunpack.c.0.s8 %v2461
        %v2463 = vlaneseq
        %v2464 = vshrl.u32 %v2463, 7
        %v2465 = vsub.s32 %v2462, %v2464
        %v2466 = vrot.slane %v2450, %v2465
        %v2468 = vunpack.c.l.s4 1966171168
        %v2469 = vunpack.c.0.s8 %v2468
        %v2470 = vlaneseq
        %v2471 = vshrl.u32 %v2470, 7
        %v2472 = vsub.s32 %v2469, %v2471
        %v2473 = vrot.slane %v2451, %v2472
        %v2475 = vunpack.c.l.s4 1966171168
        %v2476 = vunpack.c.0.s8 %v2475
        %v2477 = vlaneseq
        %v2478 = vshrl.u32 %v2477, 7
        %v2479 = vsub.s32 %v2476, %v2478
        %v2480 = vrot.slane %v2452, %v2479
        %v2481 = vcombine.high %v2459, %v2459
        %v2482 = vcombine.high %v2466, %v2466
        %v2483 = vcombine.high %v2473, %v2473
        %v2484 = vcombine.high %v2480, %v2480
        %2501 = vst.msk [vmem:[%s252 + $0xc] sm:$0x1] %vm424, %v2410
        %2502 = vst.msk [vmem:[%s252 + $0x1c] sm:$0x1] %vm424, %v2424
        %2503 = vst.msk [vmem:[%s252 + $0x2c] sm:$0x1] %vm424, %v2432
        %2504 = vst.msk [vmem:[%s252 + $0x3c] sm:$0x1] %vm424, %v2434
        %2505 = vst.msk [vmem:[%s252 + $0x4c] sm:$0x1] %vm424, %v2417
        %2506 = vst.msk [vmem:[%s252 + $0x5c] sm:$0x1] %vm424, %v2431
        %2507 = vst.msk [vmem:[%s252 + $0x6c] sm:$0x1] %vm424, %v2433
        %2508 = vst.msk [vmem:[%s252 + $0x7c] sm:$0x1] %vm424, %v2435
        %2509 = vst.msk [vmem:[%s252 + $0x8c] sm:$0x1] %vm424, %v2459
        %2510 = vst.msk [vmem:[%s252 + $0x9c] sm:$0x1] %vm424, %v2473
        %2511 = vst.msk [vmem:[%s252 + $0xac] sm:$0x1] %vm424, %v2481
        %2512 = vst.msk [vmem:[%s252 + $0xbc] sm:$0x1] %vm424, %v2483
        %2513 = vst.msk [vmem:[%s252 + $0xcc] sm:$0x1] %vm424, %v2466
        %2514 = vst.msk [vmem:[%s252 + $0xdc] sm:$0x1] %vm424, %v2480
        %2515 = vst.msk [vmem:[%s252 + $0xec] sm:$0x1] %vm424, %v2482
        %2516 = vst.msk [vmem:[%s252 + $0xfc] sm:$0x1] %vm424, %v2484
        %v2517 = vld [vmem:[%s221 + $0xd] sm:$0x1]
        %v2518 = vld [vmem:[%s221 + $0x1d] sm:$0x1]
        %v2521 = vrot.slane %v2518, 7
        %v2522 = vsel %vm271, %v2521, %v2517
        %s2524 = scalar_lea.vmem %s246, 26 [#allocation6]
        %2525 = vst.msk [vmem:[%s2524] sm:$0x3] %vm274, %v2522
        %2526 = vxpose.xlu0.b32.start [1/16] %v2522, 128
        %2527 = vxpose.xlu0.b32.cont [2/16] 0.0, 128
        %2528 = vxpose.xlu0.b32.cont [3/16] 0.0, 128
        %2529 = vxpose.xlu0.b32.cont [4/16] 0.0, 128
        %2530 = vxpose.xlu0.b32.cont [5/16] 0.0, 128
        %2531 = vxpose.xlu0.b32.cont [6/16] 0.0, 128
        %2532 = vxpose.xlu0.b32.cont [7/16] 0.0, 128
        %2533 = vxpose.xlu0.b32.cont [8/16] 0.0, 128
        %2534 = vxpose.xlu0.b32.cont [9/16] 0.0, 128
        %2535 = vxpose.xlu0.b32.cont [10/16] 0.0, 128
        %2536 = vxpose.xlu0.b32.cont [11/16] 0.0, 128
        %2537 = vxpose.xlu0.b32.cont [12/16] 0.0, 128
        %2538 = vxpose.xlu0.b32.cont [13/16] 0.0, 128
        %2539 = vxpose.xlu0.b32.cont [14/16] 0.0, 128
        %2540 = vxpose.xlu0.b32.cont [15/16] 0.0, 128
        %2541 = vxpose.xlu0.b32.end [16/16] 0.0, 128
        %v2542 = vpop.trf.xlu0
        %v2543 = vpop.trf.xlu0
        %v2544 = vpop.trf.xlu0
        %v2545 = vpop.trf.xlu0
        %v2546 = vpop.trf.xlu0
        %v2547 = vpop.trf.xlu0
        %v2548 = vpop.trf.xlu0
        %v2549 = vpop.trf.xlu0
        %v2550 = vpop.trf.xlu0
        %v2551 = vpop.trf.xlu0
        %v2552 = vpop.trf.xlu0
        %v2553 = vpop.trf.xlu0
        %v2554 = vpop.trf.xlu0
        %v2555 = vpop.trf.xlu0
        %v2556 = vpop.trf.xlu0
        %v2557 = vpop.trf.xlu0
        %v2560 = vcombine.high %v2542, %v2542
        %v2562 = vunpack.c.l.s4 1966171168
        %v2563 = vunpack.c.0.s8 %v2562
        %v2564 = vlaneseq
        %v2565 = vshrl.u32 %v2564, 7
        %v2566 = vsub.s32 %v2563, %v2565
        %v2567 = vrot.slane %v2542, %v2566
        %v2569 = vunpack.c.l.s4 1966171168
        %v2570 = vunpack.c.0.s8 %v2569
        %v2571 = vlaneseq
        %v2572 = vshrl.u32 %v2571, 7
        %v2573 = vsub.s32 %v2570, %v2572
        %v2574 = vrot.slane %v2560, %v2573
        %v2575 = vcombine.high %v2567, %v2567
        %v2576 = vcombine.high %v2574, %v2574
        %v2578 = vunpack.c.l.s4 1966171168
        %v2579 = vunpack.c.0.s8 %v2578
        %v2580 = vlaneseq
        %v2581 = vshrl.u32 %v2580, 7
        %v2582 = vsub.s32 %v2579, %v2581
        %v2583 = vrot.slane %v2567, %v2582
        %v2585 = vunpack.c.l.s4 1966171168
        %v2586 = vunpack.c.0.s8 %v2585
        %v2587 = vlaneseq
        %v2588 = vshrl.u32 %v2587, 7
        %v2589 = vsub.s32 %v2586, %v2588
        %v2590 = vrot.slane %v2574, %v2589
        %v2592 = vunpack.c.l.s4 1966171168
        %v2593 = vunpack.c.0.s8 %v2592
        %v2594 = vlaneseq
        %v2595 = vshrl.u32 %v2594, 7
        %v2596 = vsub.s32 %v2593, %v2595
        %v2597 = vrot.slane %v2575, %v2596
        %v2599 = vunpack.c.l.s4 1966171168
        %v2600 = vunpack.c.0.s8 %v2599
        %v2601 = vlaneseq
        %v2602 = vshrl.u32 %v2601, 7
        %v2603 = vsub.s32 %v2600, %v2602
        %v2604 = vrot.slane %v2576, %v2603
        %v2605 = vcombine.high %v2583, %v2583
        %v2606 = vcombine.high %v2590, %v2590
        %v2607 = vcombine.high %v2597, %v2597
        %v2608 = vcombine.high %v2604, %v2604
        %v2609 = vcombine.high %v2543, %v2543
        %v2611 = vunpack.c.l.s4 1966171168
        %v2612 = vunpack.c.0.s8 %v2611
        %v2613 = vlaneseq
        %v2614 = vshrl.u32 %v2613, 7
        %v2615 = vsub.s32 %v2612, %v2614
        %v2616 = vrot.slane %v2543, %v2615
        %v2618 = vunpack.c.l.s4 1966171168
        %v2619 = vunpack.c.0.s8 %v2618
        %v2620 = vlaneseq
        %v2621 = vshrl.u32 %v2620, 7
        %v2622 = vsub.s32 %v2619, %v2621
        %v2623 = vrot.slane %v2609, %v2622
        %v2624 = vcombine.high %v2616, %v2616
        %v2625 = vcombine.high %v2623, %v2623
        %v2627 = vunpack.c.l.s4 1966171168
        %v2628 = vunpack.c.0.s8 %v2627
        %v2629 = vlaneseq
        %v2630 = vshrl.u32 %v2629, 7
        %v2631 = vsub.s32 %v2628, %v2630
        %v2632 = vrot.slane %v2616, %v2631
        %v2634 = vunpack.c.l.s4 1966171168
        %v2635 = vunpack.c.0.s8 %v2634
        %v2636 = vlaneseq
        %v2637 = vshrl.u32 %v2636, 7
        %v2638 = vsub.s32 %v2635, %v2637
        %v2639 = vrot.slane %v2623, %v2638
        %v2641 = vunpack.c.l.s4 1966171168
        %v2642 = vunpack.c.0.s8 %v2641
        %v2643 = vlaneseq
        %v2644 = vshrl.u32 %v2643, 7
        %v2645 = vsub.s32 %v2642, %v2644
        %v2646 = vrot.slane %v2624, %v2645
        %v2648 = vunpack.c.l.s4 1966171168
        %v2649 = vunpack.c.0.s8 %v2648
        %v2650 = vlaneseq
        %v2651 = vshrl.u32 %v2650, 7
        %v2652 = vsub.s32 %v2649, %v2651
        %v2653 = vrot.slane %v2625, %v2652
        %v2654 = vcombine.high %v2632, %v2632
        %v2655 = vcombine.high %v2639, %v2639
        %v2656 = vcombine.high %v2646, %v2646
        %v2657 = vcombine.high %v2653, %v2653
        %2674 = vst.msk [vmem:[%s252 + $0xd] sm:$0x1] %vm424, %v2583
        %2675 = vst.msk [vmem:[%s252 + $0x1d] sm:$0x1] %vm424, %v2597
        %2676 = vst.msk [vmem:[%s252 + $0x2d] sm:$0x1] %vm424, %v2605
        %2677 = vst.msk [vmem:[%s252 + $0x3d] sm:$0x1] %vm424, %v2607
        %2678 = vst.msk [vmem:[%s252 + $0x4d] sm:$0x1] %vm424, %v2590
        %2679 = vst.msk [vmem:[%s252 + $0x5d] sm:$0x1] %vm424, %v2604
        %2680 = vst.msk [vmem:[%s252 + $0x6d] sm:$0x1] %vm424, %v2606
        %2681 = vst.msk [vmem:[%s252 + $0x7d] sm:$0x1] %vm424, %v2608
        %2682 = vst.msk [vmem:[%s252 + $0x8d] sm:$0x1] %vm424, %v2632
        %2683 = vst.msk [vmem:[%s252 + $0x9d] sm:$0x1] %vm424, %v2646
        %2684 = vst.msk [vmem:[%s252 + $0xad] sm:$0x1] %vm424, %v2654
        %2685 = vst.msk [vmem:[%s252 + $0xbd] sm:$0x1] %vm424, %v2656
        %2686 = vst.msk [vmem:[%s252 + $0xcd] sm:$0x1] %vm424, %v2639
        %2687 = vst.msk [vmem:[%s252 + $0xdd] sm:$0x1] %vm424, %v2653
        %2688 = vst.msk [vmem:[%s252 + $0xed] sm:$0x1] %vm424, %v2655
        %2689 = vst.msk [vmem:[%s252 + $0xfd] sm:$0x1] %vm424, %v2657
        %v2690 = vld [vmem:[%s221 + $0xe] sm:$0x1]
        %v2691 = vld [vmem:[%s221 + $0x1e] sm:$0x1]
        %v2694 = vrot.slane %v2691, 7
        %v2695 = vsel %vm271, %v2694, %v2690
        %s2697 = scalar_lea.vmem %s246, 28 [#allocation6]
        %2698 = vst.msk [vmem:[%s2697] sm:$0x3] %vm274, %v2695
        %2699 = vxpose.xlu0.b32.start [1/16] %v2695, 128
        %2700 = vxpose.xlu0.b32.cont [2/16] 0.0, 128
        %2701 = vxpose.xlu0.b32.cont [3/16] 0.0, 128
        %2702 = vxpose.xlu0.b32.cont [4/16] 0.0, 128
        %2703 = vxpose.xlu0.b32.cont [5/16] 0.0, 128
        %2704 = vxpose.xlu0.b32.cont [6/16] 0.0, 128
        %2705 = vxpose.xlu0.b32.cont [7/16] 0.0, 128
        %2706 = vxpose.xlu0.b32.cont [8/16] 0.0, 128
        %2707 = vxpose.xlu0.b32.cont [9/16] 0.0, 128
        %2708 = vxpose.xlu0.b32.cont [10/16] 0.0, 128
        %2709 = vxpose.xlu0.b32.cont [11/16] 0.0, 128
        %2710 = vxpose.xlu0.b32.cont [12/16] 0.0, 128
        %2711 = vxpose.xlu0.b32.cont [13/16] 0.0, 128
        %2712 = vxpose.xlu0.b32.cont [14/16] 0.0, 128
        %2713 = vxpose.xlu0.b32.cont [15/16] 0.0, 128
        %2714 = vxpose.xlu0.b32.end [16/16] 0.0, 128
        %v2715 = vpop.trf.xlu0
        %v2716 = vpop.trf.xlu0
        %v2717 = vpop.trf.xlu0
        %v2718 = vpop.trf.xlu0
        %v2719 = vpop.trf.xlu0
        %v2720 = vpop.trf.xlu0
        %v2721 = vpop.trf.xlu0
        %v2722 = vpop.trf.xlu0
        %v2723 = vpop.trf.xlu0
        %v2724 = vpop.trf.xlu0
        %v2725 = vpop.trf.xlu0
        %v2726 = vpop.trf.xlu0
        %v2727 = vpop.trf.xlu0
        %v2728 = vpop.trf.xlu0
        %v2729 = vpop.trf.xlu0
        %v2730 = vpop.trf.xlu0
        %v2733 = vcombine.high %v2715, %v2715
        %v2735 = vunpack.c.l.s4 1966171168
        %v2736 = vunpack.c.0.s8 %v2735
        %v2737 = vlaneseq
        %v2738 = vshrl.u32 %v2737, 7
        %v2739 = vsub.s32 %v2736, %v2738
        %v2740 = vrot.slane %v2715, %v2739
        %v2742 = vunpack.c.l.s4 1966171168
        %v2743 = vunpack.c.0.s8 %v2742
        %v2744 = vlaneseq
        %v2745 = vshrl.u32 %v2744, 7
        %v2746 = vsub.s32 %v2743, %v2745
        %v2747 = vrot.slane %v2733, %v2746
        %v2748 = vcombine.high %v2740, %v2740
        %v2749 = vcombine.high %v2747, %v2747
        %v2751 = vunpack.c.l.s4 1966171168
        %v2752 = vunpack.c.0.s8 %v2751
        %v2753 = vlaneseq
        %v2754 = vshrl.u32 %v2753, 7
        %v2755 = vsub.s32 %v2752, %v2754
        %v2756 = vrot.slane %v2740, %v2755
        %v2758 = vunpack.c.l.s4 1966171168
        %v2759 = vunpack.c.0.s8 %v2758
        %v2760 = vlaneseq
        %v2761 = vshrl.u32 %v2760, 7
        %v2762 = vsub.s32 %v2759, %v2761
        %v2763 = vrot.slane %v2747, %v2762
        %v2765 = vunpack.c.l.s4 1966171168
        %v2766 = vunpack.c.0.s8 %v2765
        %v2767 = vlaneseq
        %v2768 = vshrl.u32 %v2767, 7
        %v2769 = vsub.s32 %v2766, %v2768
        %v2770 = vrot.slane %v2748, %v2769
        %v2772 = vunpack.c.l.s4 1966171168
        %v2773 = vunpack.c.0.s8 %v2772
        %v2774 = vlaneseq
        %v2775 = vshrl.u32 %v2774, 7
        %v2776 = vsub.s32 %v2773, %v2775
        %v2777 = vrot.slane %v2749, %v2776
        %v2778 = vcombine.high %v2756, %v2756
        %v2779 = vcombine.high %v2763, %v2763
        %v2780 = vcombine.high %v2770, %v2770
        %v2781 = vcombine.high %v2777, %v2777
        %v2782 = vcombine.high %v2716, %v2716
        %v2784 = vunpack.c.l.s4 1966171168
        %v2785 = vunpack.c.0.s8 %v2784
        %v2786 = vlaneseq
        %v2787 = vshrl.u32 %v2786, 7
        %v2788 = vsub.s32 %v2785, %v2787
        %v2789 = vrot.slane %v2716, %v2788
        %v2791 = vunpack.c.l.s4 1966171168
        %v2792 = vunpack.c.0.s8 %v2791
        %v2793 = vlaneseq
        %v2794 = vshrl.u32 %v2793, 7
        %v2795 = vsub.s32 %v2792, %v2794
        %v2796 = vrot.slane %v2782, %v2795
        %v2797 = vcombine.high %v2789, %v2789
        %v2798 = vcombine.high %v2796, %v2796
        %v2800 = vunpack.c.l.s4 1966171168
        %v2801 = vunpack.c.0.s8 %v2800
        %v2802 = vlaneseq
        %v2803 = vshrl.u32 %v2802, 7
        %v2804 = vsub.s32 %v2801, %v2803
        %v2805 = vrot.slane %v2789, %v2804
        %v2807 = vunpack.c.l.s4 1966171168
        %v2808 = vunpack.c.0.s8 %v2807
        %v2809 = vlaneseq
        %v2810 = vshrl.u32 %v2809, 7
        %v2811 = vsub.s32 %v2808, %v2810
        %v2812 = vrot.slane %v2796, %v2811
        %v2814 = vunpack.c.l.s4 1966171168
        %v2815 = vunpack.c.0.s8 %v2814
        %v2816 = vlaneseq
        %v2817 = vshrl.u32 %v2816, 7
        %v2818 = vsub.s32 %v2815, %v2817
        %v2819 = vrot.slane %v2797, %v2818
        %v2821 = vunpack.c.l.s4 1966171168
        %v2822 = vunpack.c.0.s8 %v2821
        %v2823 = vlaneseq
        %v2824 = vshrl.u32 %v2823, 7
        %v2825 = vsub.s32 %v2822, %v2824
        %v2826 = vrot.slane %v2798, %v2825
        %v2827 = vcombine.high %v2805, %v2805
        %v2828 = vcombine.high %v2812, %v2812
        %v2829 = vcombine.high %v2819, %v2819
        %v2830 = vcombine.high %v2826, %v2826
        %2847 = vst.msk [vmem:[%s252 + $0xe] sm:$0x1] %vm424, %v2756
        %2848 = vst.msk [vmem:[%s252 + $0x1e] sm:$0x1] %vm424, %v2770
        %2849 = vst.msk [vmem:[%s252 + $0x2e] sm:$0x1] %vm424, %v2778
        %2850 = vst.msk [vmem:[%s252 + $0x3e] sm:$0x1] %vm424, %v2780
        %2851 = vst.msk [vmem:[%s252 + $0x4e] sm:$0x1] %vm424, %v2763
        %2852 = vst.msk [vmem:[%s252 + $0x5e] sm:$0x1] %vm424, %v2777
        %2853 = vst.msk [vmem:[%s252 + $0x6e] sm:$0x1] %vm424, %v2779
        %2854 = vst.msk [vmem:[%s252 + $0x7e] sm:$0x1] %vm424, %v2781
        %2855 = vst.msk [vmem:[%s252 + $0x8e] sm:$0x1] %vm424, %v2805
        %2856 = vst.msk [vmem:[%s252 + $0x9e] sm:$0x1] %vm424, %v2819
        %2857 = vst.msk [vmem:[%s252 + $0xae] sm:$0x1] %vm424, %v2827
        %2858 = vst.msk [vmem:[%s252 + $0xbe] sm:$0x1] %vm424, %v2829
        %2859 = vst.msk [vmem:[%s252 + $0xce] sm:$0x1] %vm424, %v2812
        %2860 = vst.msk [vmem:[%s252 + $0xde] sm:$0x1] %vm424, %v2826
        %2861 = vst.msk [vmem:[%s252 + $0xee] sm:$0x1] %vm424, %v2828
        %2862 = vst.msk [vmem:[%s252 + $0xfe] sm:$0x1] %vm424, %v2830
        %v2863 = vld [vmem:[%s221 + $0xf] sm:$0x1]
        %v2864 = vld [vmem:[%s221 + $0x1f] sm:$0x1]
        %v2867 = vrot.slane %v2864, 7
        %v2868 = vsel %vm271, %v2867, %v2863
        %s2870 = scalar_lea.vmem %s246, 30 [#allocation6]
        %2871 = vst.msk [vmem:[%s2870] sm:$0x3] %vm274, %v2868
        %2872 = vxpose.xlu0.b32.start [1/16] %v2868, 128
        %2873 = vxpose.xlu0.b32.cont [2/16] 0.0, 128
        %2874 = vxpose.xlu0.b32.cont [3/16] 0.0, 128
        %2875 = vxpose.xlu0.b32.cont [4/16] 0.0, 128
        %2876 = vxpose.xlu0.b32.cont [5/16] 0.0, 128
        %2877 = vxpose.xlu0.b32.cont [6/16] 0.0, 128
        %2878 = vxpose.xlu0.b32.cont [7/16] 0.0, 128
        %2879 = vxpose.xlu0.b32.cont [8/16] 0.0, 128
        %2880 = vxpose.xlu0.b32.cont [9/16] 0.0, 128
        %2881 = vxpose.xlu0.b32.cont [10/16] 0.0, 128
        %2882 = vxpose.xlu0.b32.cont [11/16] 0.0, 128
        %2883 = vxpose.xlu0.b32.cont [12/16] 0.0, 128
        %2884 = vxpose.xlu0.b32.cont [13/16] 0.0, 128
        %2885 = vxpose.xlu0.b32.cont [14/16] 0.0, 128
        %2886 = vxpose.xlu0.b32.cont [15/16] 0.0, 128
        %2887 = vxpose.xlu0.b32.end [16/16] 0.0, 128
        %v2888 = vpop.trf.xlu0
        %v2889 = vpop.trf.xlu0
        %v2890 = vpop.trf.xlu0
        %v2891 = vpop.trf.xlu0
        %v2892 = vpop.trf.xlu0
        %v2893 = vpop.trf.xlu0
        %v2894 = vpop.trf.xlu0
        %v2895 = vpop.trf.xlu0
        %v2896 = vpop.trf.xlu0
        %v2897 = vpop.trf.xlu0
        %v2898 = vpop.trf.xlu0
        %v2899 = vpop.trf.xlu0
        %v2900 = vpop.trf.xlu0
        %v2901 = vpop.trf.xlu0
        %v2902 = vpop.trf.xlu0
        %v2903 = vpop.trf.xlu0
        %v2906 = vcombine.high %v2888, %v2888
        %v2908 = vunpack.c.l.s4 1966171168
        %v2909 = vunpack.c.0.s8 %v2908
        %v2910 = vlaneseq
        %v2911 = vshrl.u32 %v2910, 7
        %v2912 = vsub.s32 %v2909, %v2911
        %v2913 = vrot.slane %v2888, %v2912
        %v2915 = vunpack.c.l.s4 1966171168
        %v2916 = vunpack.c.0.s8 %v2915
        %v2917 = vlaneseq
        %v2918 = vshrl.u32 %v2917, 7
        %v2919 = vsub.s32 %v2916, %v2918
        %v2920 = vrot.slane %v2906, %v2919
        %v2921 = vcombine.high %v2913, %v2913
        %v2922 = vcombine.high %v2920, %v2920
        %v2924 = vunpack.c.l.s4 1966171168
        %v2925 = vunpack.c.0.s8 %v2924
        %v2926 = vlaneseq
        %v2927 = vshrl.u32 %v2926, 7
        %v2928 = vsub.s32 %v2925, %v2927
        %v2929 = vrot.slane %v2913, %v2928
        %v2931 = vunpack.c.l.s4 1966171168
        %v2932 = vunpack.c.0.s8 %v2931
        %v2933 = vlaneseq
        %v2934 = vshrl.u32 %v2933, 7
        %v2935 = vsub.s32 %v2932, %v2934
        %v2936 = vrot.slane %v2920, %v2935
        %v2938 = vunpack.c.l.s4 1966171168
        %v2939 = vunpack.c.0.s8 %v2938
        %v2940 = vlaneseq
        %v2941 = vshrl.u32 %v2940, 7
        %v2942 = vsub.s32 %v2939, %v2941
        %v2943 = vrot.slane %v2921, %v2942
        %v2945 = vunpack.c.l.s4 1966171168
        %v2946 = vunpack.c.0.s8 %v2945
        %v2947 = vlaneseq
        %v2948 = vshrl.u32 %v2947, 7
        %v2949 = vsub.s32 %v2946, %v2948
        %v2950 = vrot.slane %v2922, %v2949
        %v2951 = vcombine.high %v2929, %v2929
        %v2952 = vcombine.high %v2936, %v2936
        %v2953 = vcombine.high %v2943, %v2943
        %v2954 = vcombine.high %v2950, %v2950
        %v2955 = vcombine.high %v2889, %v2889
        %v2957 = vunpack.c.l.s4 1966171168
        %v2958 = vunpack.c.0.s8 %v2957
        %v2959 = vlaneseq
        %v2960 = vshrl.u32 %v2959, 7
        %v2961 = vsub.s32 %v2958, %v2960
        %v2962 = vrot.slane %v2889, %v2961
        %v2964 = vunpack.c.l.s4 1966171168
        %v2965 = vunpack.c.0.s8 %v2964
        %v2966 = vlaneseq
        %v2967 = vshrl.u32 %v2966, 7
        %v2968 = vsub.s32 %v2965, %v2967
        %v2969 = vrot.slane %v2955, %v2968
        %v2970 = vcombine.high %v2962, %v2962
        %v2971 = vcombine.high %v2969, %v2969
        %v2973 = vunpack.c.l.s4 1966171168
        %v2974 = vunpack.c.0.s8 %v2973
        %v2975 = vlaneseq
        %v2976 = vshrl.u32 %v2975, 7
        %v2977 = vsub.s32 %v2974, %v2976
        %v2978 = vrot.slane %v2962, %v2977
        %v2980 = vunpack.c.l.s4 1966171168
        %v2981 = vunpack.c.0.s8 %v2980
        %v2982 = vlaneseq
        %v2983 = vshrl.u32 %v2982, 7
        %v2984 = vsub.s32 %v2981, %v2983
        %v2985 = vrot.slane %v2969, %v2984
        %v2987 = vunpack.c.l.s4 1966171168
        %v2988 = vunpack.c.0.s8 %v2987
        %v2989 = vlaneseq
        %v2990 = vshrl.u32 %v2989, 7
        %v2991 = vsub.s32 %v2988, %v2990
        %v2992 = vrot.slane %v2970, %v2991
        %v2994 = vunpack.c.l.s4 1966171168
        %v2995 = vunpack.c.0.s8 %v2994
        %v2996 = vlaneseq
        %v2997 = vshrl.u32 %v2996, 7
        %v2998 = vsub.s32 %v2995, %v2997
        %v2999 = vrot.slane %v2971, %v2998
        %v3000 = vcombine.high %v2978, %v2978
        %v3001 = vcombine.high %v2985, %v2985
        %v3002 = vcombine.high %v2992, %v2992
        %v3003 = vcombine.high %v2999, %v2999
        %3020 = vst.msk [vmem:[%s252 + $0xf] sm:$0x1] %vm424, %v2929
        %3021 = vst.msk [vmem:[%s252 + $0x1f] sm:$0x1] %vm424, %v2943
        %3022 = vst.msk [vmem:[%s252 + $0x2f] sm:$0x1] %vm424, %v2951
        %3023 = vst.msk [vmem:[%s252 + $0x3f] sm:$0x1] %vm424, %v2953
        %3024 = vst.msk [vmem:[%s252 + $0x4f] sm:$0x1] %vm424, %v2936
        %3025 = vst.msk [vmem:[%s252 + $0x5f] sm:$0x1] %vm424, %v2950
        %3026 = vst.msk [vmem:[%s252 + $0x6f] sm:$0x1] %vm424, %v2952
        %3027 = vst.msk [vmem:[%s252 + $0x7f] sm:$0x1] %vm424, %v2954
        %3028 = vst.msk [vmem:[%s252 + $0x8f] sm:$0x1] %vm424, %v2978
        %3029 = vst.msk [vmem:[%s252 + $0x9f] sm:$0x1] %vm424, %v2992
        %3030 = vst.msk [vmem:[%s252 + $0xaf] sm:$0x1] %vm424, %v3000
        %3031 = vst.msk [vmem:[%s252 + $0xbf] sm:$0x1] %vm424, %v3002
        %3032 = vst.msk [vmem:[%s252 + $0xcf] sm:$0x1] %vm424, %v2985
        %3033 = vst.msk [vmem:[%s252 + $0xdf] sm:$0x1] %vm424, %v2999
        %3034 = vst.msk [vmem:[%s252 + $0xef] sm:$0x1] %vm424, %v3001
        %3035 = vst.msk [vmem:[%s252 + $0xff] sm:$0x1] %vm424, %v3003
        %s3036 = sand.u32 %s74, 1
        %s3037 = scalar_lea.sflag [#allocation4], %s3036
        %s3038 = sand.u32 %s74, 1
        %s3039 = smul.addr %s3038, 32
        %s3040 = scalar_lea.vmem [#allocation5], %s3039
        %s3041 = sand.u32 %s102, 1
        %s3042 = scalar_lea.sflag [#allocation7], %s3041
        %s3043 = sand.u32 %s102, 1
        %s3044 = smul.addr %s3043, 32
        %s3045 = scalar_lea.vmem [#allocation6], %s3044
        %s3046 = sand.u32 %s130, 1
        %s3047 = sand.u32 %s130, 1
        %s3048 = smul.addr %s3047, 256
        %s3049 = scalar_lea.vmem [#allocation8], %s3048
        // Predicated region
        $region29: #{tpu_custom_call.1} parent=23 // pred_check
          %p3050 = pneg %p84
        $region30: #{tpu_custom_call.1} parent=23 // pred_check_branch
          %3052 = sbr.rel (%p3050) target = $region32
        $region31: #{tpu_custom_call.1} parent=23 // pred_region
          %s3053 = smul.u32 2, %s29
          %s3055 = ssub.s32 512, 512
          %3056 = vsyncadd %s3037, %s3055
          %s3057 = smul.addr %s28, 4
          %s3058 = sadd.s32 %s3053, %s3057
          %s3059 = smul.addr %s3058, 128
          %s3060 = scalar_lea.hbm %s1, %s3059
          %s3061 = sshll.u32 %s3040, 4
          %s3062 = int_to_ptr.vmem [resolvable:$true] %s3061
          %3067 = dma.vmem_to_hbm [thread:$0]  %s3062, 512, %s3060, %s3037, 128, 128, 8
        $region32: #{tpu_custom_call.1} parent=23 // pred_fallthru
          _
        // Predicated region
        $region33: #{tpu_custom_call.1} parent=23 // pred_check
          %p3068 = pneg %p112
        $region34: #{tpu_custom_call.1} parent=23 // pred_check_branch
          %3070 = sbr.rel (%p3068) target = $region36
        $region35: #{tpu_custom_call.1} parent=23 // pred_region
          %s3071 = smul.u32 16, %s29
          %s3073 = ssub.s32 512, 512
          %3074 = vsyncadd %s3042, %s3073
          %s3075 = smul.addr %s3071, 4
          %s3076 = sadd.s32 %s28, %s3075
          %s3077 = smul.addr %s3076, 32
          %s3078 = scalar_lea.hbm %s2, %s3077
          %s3079 = sshll.u32 %s3045, 4
          %s3080 = int_to_ptr.vmem [resolvable:$true] %s3079
          %3085 = dma.vmem_to_hbm [thread:$0]  %s3080, 512, %s3078, %s3042, 32, 128, 2
        $region36: #{tpu_custom_call.1} parent=23 // pred_fallthru
          _
        // Predicated region
        $region37: #{tpu_custom_call.1} parent=23 // pred_check
          %p3086 = pneg %p140
        $region38: #{tpu_custom_call.1} parent=23 // pred_check_branch
          %3088 = sbr.rel (%p3086) target = $region40
        $region39: #{tpu_custom_call.1} parent=23 // pred_region
          %s3089 = smul.u32 2, %s29
          %s3090 = smul.addr %s28, 2
          %s3091 = sadd.s32 %s3089, %s3090
          %s3092 = smul.addr %s3091, 8
          %s3093 = scalar_lea.vmem %s3, %s3092
          // Predicated region
          $region41: #{tpu_custom_call.1} parent=39 // pred_check
            _
          $region42: #{tpu_custom_call.1} parent=39 // pred_check_branch
            %3095 = sbr.rel (0) target = $region44
          $region43: #{tpu_custom_call.1} parent=39 // pred_region
            // Predicated region
            $region45: #{tpu_custom_call.1} parent=43 // pred_check
              _
            $region46: #{tpu_custom_call.1} parent=43 // pred_check_branch
              %3097 = sbr.rel (0) target = $region48
            $region47: #{tpu_custom_call.1} parent=43 // pred_region
              // Predicated region
              $region60: #{tpu_custom_call.1} parent=47 // pred_check
                _
              $region61: #{tpu_custom_call.1} parent=47 // pred_check_branch
                %3175 = sbr.rel (0) target = $region63
              $region62: #{tpu_custom_call.1} parent=47 // pred_region
                loop: start=0, step=1, limit=1
                $region64: #{tpu_custom_call.1} parent=62 // loop_pre_header
                  _
                $region65: #{tpu_custom_call.1} parent=62 // loop_header
                  %s3177 = sphi 0, %s3181
                  %p3178 = scmp.ge.s32.totalorder %s3177, 1
                  %s3182 = sphi %s3049, %s3049
                  %s3183 = sphi %s3093, %s3093
                $region66: #{tpu_custom_call.1} parent=62 // loop_header_branch
                  %3180 = sbr.rel (%p3178) target = $region70
                $region67: #{tpu_custom_call.1} parent=62 // loop_body
                  %v3184 = vld [vmem:[%s3182] sm:$0xff]
                  %3185 = vst [vmem:[%s3183] sm:$0xff] %v3184
                  %v3186 = vld [vmem:[%s3182 + $0x8] sm:$0xff]
                  %3187 = vst [vmem:[%s3183 + $0x8] sm:$0xff] %v3186
                  %v3188 = vld [vmem:[%s3182 + $0x10] sm:$0xff]
                  %3189 = vst [vmem:[%s3183 + $0x40] sm:$0xff] %v3188
                  %v3190 = vld [vmem:[%s3182 + $0x18] sm:$0xff]
                  %3191 = vst [vmem:[%s3183 + $0x48] sm:$0xff] %v3190
                  %v3192 = vld [vmem:[%s3182 + $0x20] sm:$0xff]
                  %3193 = vst [vmem:[%s3183 + $0x80] sm:$0xff] %v3192
                  %v3194 = vld [vmem:[%s3182 + $0x28] sm:$0xff]
                  %3195 = vst [vmem:[%s3183 + $0x88] sm:$0xff] %v3194
                  %v3196 = vld [vmem:[%s3182 + $0x30] sm:$0xff]
                  %3197 = vst [vmem:[%s3183 + $0xc0] sm:$0xff] %v3196
                  %v3198 = vld [vmem:[%s3182 + $0x38] sm:$0xff]
                  %3199 = vst [vmem:[%s3183 + $0xc8] sm:$0xff] %v3198
                  %v3200 = vld [vmem:[%s3182 + $0x40] sm:$0xff]
                  %3201 = vst [vmem:[%s3183 + $0x100] sm:$0xff] %v3200
                  %v3202 = vld [vmem:[%s3182 + $0x48] sm:$0xff]
                  %3203 = vst [vmem:[%s3183 + $0x108] sm:$0xff] %v3202
                  %v3204 = vld [vmem:[%s3182 + $0x50] sm:$0xff]
                  %3205 = vst [vmem:[%s3183 + $0x140] sm:$0xff] %v3204
                  %v3206 = vld [vmem:[%s3182 + $0x58] sm:$0xff]
                  %3207 = vst [vmem:[%s3183 + $0x148] sm:$0xff] %v3206
                  %v3208 = vld [vmem:[%s3182 + $0x60] sm:$0xff]
                  %3209 = vst [vmem:[%s3183 + $0x180] sm:$0xff] %v3208
                  %v3210 = vld [vmem:[%s3182 + $0x68] sm:$0xff]
                  %3211 = vst [vmem:[%s3183 + $0x188] sm:$0xff] %v3210
                  %v3212 = vld [vmem:[%s3182 + $0x70] sm:$0xff]
                  %3213 = vst [vmem:[%s3183 + $0x1c0] sm:$0xff] %v3212
                  %v3214 = vld [vmem:[%s3182 + $0x78] sm:$0xff]
                  %3215 = vst [vmem:[%s3183 + $0x1c8] sm:$0xff] %v3214
                  %v3216 = vld [vmem:[%s3182 + $0x80] sm:$0xff]
                  %3217 = vst [vmem:[%s3183 + $0x200] sm:$0xff] %v3216
                  %v3218 = vld [vmem:[%s3182 + $0x88] sm:$0xff]
                  %3219 = vst [vmem:[%s3183 + $0x208] sm:$0xff] %v3218
                  %v3220 = vld [vmem:[%s3182 + $0x90] sm:$0xff]
                  %3221 = vst [vmem:[%s3183 + $0x240] sm:$0xff] %v3220
                  %v3222 = vld [vmem:[%s3182 + $0x98] sm:$0xff]
                  %3223 = vst [vmem:[%s3183 + $0x248] sm:$0xff] %v3222
                  %v3224 = vld [vmem:[%s3182 + $0xa0] sm:$0xff]
                  %3225 = vst [vmem:[%s3183 + $0x280] sm:$0xff] %v3224
                  %v3226 = vld [vmem:[%s3182 + $0xa8] sm:$0xff]
                  %3227 = vst [vmem:[%s3183 + $0x288] sm:$0xff] %v3226
                  %v3228 = vld [vmem:[%s3182 + $0xb0] sm:$0xff]
                  %3229 = vst [vmem:[%s3183 + $0x2c0] sm:$0xff] %v3228
                  %v3230 = vld [vmem:[%s3182 + $0xb8] sm:$0xff]
                  %3231 = vst [vmem:[%s3183 + $0x2c8] sm:$0xff] %v3230
                  %v3232 = vld [vmem:[%s3182 + $0xc0] sm:$0xff]
                  %3233 = vst [vmem:[%s3183 + $0x300] sm:$0xff] %v3232
                  %v3234 = vld [vmem:[%s3182 + $0xc8] sm:$0xff]
                  %3235 = vst [vmem:[%s3183 + $0x308] sm:$0xff] %v3234
                  %v3236 = vld [vmem:[%s3182 + $0xd0] sm:$0xff]
                  %3237 = vst [vmem:[%s3183 + $0x340] sm:$0xff] %v3236
                  %v3238 = vld [vmem:[%s3182 + $0xd8] sm:$0xff]
                  %3239 = vst [vmem:[%s3183 + $0x348] sm:$0xff] %v3238
                  %v3240 = vld [vmem:[%s3182 + $0xe0] sm:$0xff]
                  %3241 = vst [vmem:[%s3183 + $0x380] sm:$0xff] %v3240
                  %v3242 = vld [vmem:[%s3182 + $0xe8] sm:$0xff]
                  %3243 = vst [vmem:[%s3183 + $0x388] sm:$0xff] %v3242
                  %v3244 = vld [vmem:[%s3182 + $0xf0] sm:$0xff]
                  %3245 = vst [vmem:[%s3183 + $0x3c0] sm:$0xff] %v3244
                  %v3246 = vld [vmem:[%s3182 + $0xf8] sm:$0xff]
                  %3247 = vst [vmem:[%s3183 + $0x3c8] sm:$0xff] %v3246
                $region68: #{tpu_custom_call.1} parent=62 // loop_footer
                  %s3181 = sadd.s32 1, %s3177
                $region69: #{tpu_custom_call.1} parent=62 // loop_footer_branch
                  %3176 = sbr.rel target = $region65
                $region70: #{tpu_custom_call.1} parent=62 // loop_exit
                  _
              $region63: #{tpu_custom_call.1} parent=47 // pred_fallthru
                _
              // Predicated region
              $region71: #{tpu_custom_call.1} parent=47 // pred_check
                _
              $region72: #{tpu_custom_call.1} parent=47 // pred_check_branch
                %3249 = sbr.rel target = $region74
              $region73: #{tpu_custom_call.1} parent=47 // pred_region
                _
              $region74: #{tpu_custom_call.1} parent=47 // pred_fallthru
                _
            $region48: #{tpu_custom_call.1} parent=43 // pred_fallthru
              _
            // Predicated region
            $region49: #{tpu_custom_call.1} parent=43 // pred_check
              _
            $region50: #{tpu_custom_call.1} parent=43 // pred_check_branch
              %3099 = sbr.rel target = $region52
            $region51: #{tpu_custom_call.1} parent=43 // pred_region
              %s3101 = ssub.s32 256, 1
              loop: start=0, step=1, limit=1
              $region53: #{tpu_custom_call.1} parent=51 // loop_pre_header
                _
              $region54: #{tpu_custom_call.1} parent=51 // loop_header
                %s3103 = sphi 0, %s3107
                %p3104 = scmp.ge.s32.totalorder %s3103, 1
                %s3108 = sphi %s3049, %s3049
                %s3109 = sphi %s3093, %s3093
              $region55: #{tpu_custom_call.1} parent=51 // loop_header_branch
                %3106 = sbr.rel (%p3104) target = $region59
              $region56: #{tpu_custom_call.1} parent=51 // loop_body
                %v3110 = vld [vmem:[%s3108] sm:%s3101]
                %3111 = vst [vmem:[%s3109] sm:%s3101] %v3110
                %v3112 = vld [vmem:[%s3108 + $0x8] sm:%s3101]
                %3113 = vst [vmem:[%s3109 + $0x8] sm:%s3101] %v3112
                %v3114 = vld [vmem:[%s3108 + $0x10] sm:%s3101]
                %3115 = vst [vmem:[%s3109 + $0x40] sm:%s3101] %v3114
                %v3116 = vld [vmem:[%s3108 + $0x18] sm:%s3101]
                %3117 = vst [vmem:[%s3109 + $0x48] sm:%s3101] %v3116
                %v3118 = vld [vmem:[%s3108 + $0x20] sm:%s3101]
                %3119 = vst [vmem:[%s3109 + $0x80] sm:%s3101] %v3118
                %v3120 = vld [vmem:[%s3108 + $0x28] sm:%s3101]
                %3121 = vst [vmem:[%s3109 + $0x88] sm:%s3101] %v3120
                %v3122 = vld [vmem:[%s3108 + $0x30] sm:%s3101]
                %3123 = vst [vmem:[%s3109 + $0xc0] sm:%s3101] %v3122
                %v3124 = vld [vmem:[%s3108 + $0x38] sm:%s3101]
                %3125 = vst [vmem:[%s3109 + $0xc8] sm:%s3101] %v3124
                %v3126 = vld [vmem:[%s3108 + $0x40] sm:%s3101]
                %3127 = vst [vmem:[%s3109 + $0x100] sm:%s3101] %v3126
                %v3128 = vld [vmem:[%s3108 + $0x48] sm:%s3101]
                %3129 = vst [vmem:[%s3109 + $0x108] sm:%s3101] %v3128
                %v3130 = vld [vmem:[%s3108 + $0x50] sm:%s3101]
                %3131 = vst [vmem:[%s3109 + $0x140] sm:%s3101] %v3130
                %v3132 = vld [vmem:[%s3108 + $0x58] sm:%s3101]
                %3133 = vst [vmem:[%s3109 + $0x148] sm:%s3101] %v3132
                %v3134 = vld [vmem:[%s3108 + $0x60] sm:%s3101]
                %3135 = vst [vmem:[%s3109 + $0x180] sm:%s3101] %v3134
                %v3136 = vld [vmem:[%s3108 + $0x68] sm:%s3101]
                %3137 = vst [vmem:[%s3109 + $0x188] sm:%s3101] %v3136
                %v3138 = vld [vmem:[%s3108 + $0x70] sm:%s3101]
                %3139 = vst [vmem:[%s3109 + $0x1c0] sm:%s3101] %v3138
                %v3140 = vld [vmem:[%s3108 + $0x78] sm:%s3101]
                %3141 = vst [vmem:[%s3109 + $0x1c8] sm:%s3101] %v3140
                %v3142 = vld [vmem:[%s3108 + $0x80] sm:%s3101]
                %3143 = vst [vmem:[%s3109 + $0x200] sm:%s3101] %v3142
                %v3144 = vld [vmem:[%s3108 + $0x88] sm:%s3101]
                %3145 = vst [vmem:[%s3109 + $0x208] sm:%s3101] %v3144
                %v3146 = vld [vmem:[%s3108 + $0x90] sm:%s3101]
                %3147 = vst [vmem:[%s3109 + $0x240] sm:%s3101] %v3146
                %v3148 = vld [vmem:[%s3108 + $0x98] sm:%s3101]
                %3149 = vst [vmem:[%s3109 + $0x248] sm:%s3101] %v3148
                %v3150 = vld [vmem:[%s3108 + $0xa0] sm:%s3101]
                %3151 = vst [vmem:[%s3109 + $0x280] sm:%s3101] %v3150
                %v3152 = vld [vmem:[%s3108 + $0xa8] sm:%s3101]
                %3153 = vst [vmem:[%s3109 + $0x288] sm:%s3101] %v3152
                %v3154 = vld [vmem:[%s3108 + $0xb0] sm:%s3101]
                %3155 = vst [vmem:[%s3109 + $0x2c0] sm:%s3101] %v3154
                %v3156 = vld [vmem:[%s3108 + $0xb8] sm:%s3101]
                %3157 = vst [vmem:[%s3109 + $0x2c8] sm:%s3101] %v3156
                %v3158 = vld [vmem:[%s3108 + $0xc0] sm:%s3101]
                %3159 = vst [vmem:[%s3109 + $0x300] sm:%s3101] %v3158
                %v3160 = vld [vmem:[%s3108 + $0xc8] sm:%s3101]
                %3161 = vst [vmem:[%s3109 + $0x308] sm:%s3101] %v3160
                %v3162 = vld [vmem:[%s3108 + $0xd0] sm:%s3101]
                %3163 = vst [vmem:[%s3109 + $0x340] sm:%s3101] %v3162
                %v3164 = vld [vmem:[%s3108 + $0xd8] sm:%s3101]
                %3165 = vst [vmem:[%s3109 + $0x348] sm:%s3101] %v3164
                %v3166 = vld [vmem:[%s3108 + $0xe0] sm:%s3101]
                %3167 = vst [vmem:[%s3109 + $0x380] sm:%s3101] %v3166
                %v3168 = vld [vmem:[%s3108 + $0xe8] sm:%s3101]
                %3169 = vst [vmem:[%s3109 + $0x388] sm:%s3101] %v3168
                %v3170 = vld [vmem:[%s3108 + $0xf0] sm:%s3101]
                %3171 = vst [vmem:[%s3109 + $0x3c0] sm:%s3101] %v3170
                %v3172 = vld [vmem:[%s3108 + $0xf8] sm:%s3101]
                %3173 = vst [vmem:[%s3109 + $0x3c8] sm:%s3101] %v3172
              $region57: #{tpu_custom_call.1} parent=51 // loop_footer
                %s3107 = sadd.s32 1, %s3103
              $region58: #{tpu_custom_call.1} parent=51 // loop_footer_branch
                %3102 = sbr.rel target = $region54
              $region59: #{tpu_custom_call.1} parent=51 // loop_exit
                _
            $region52: #{tpu_custom_call.1} parent=43 // pred_fallthru
              _
          $region44: #{tpu_custom_call.1} parent=39 // pred_fallthru
            _
          %3250 = vnop
        $region40: #{tpu_custom_call.1} parent=23 // pred_fallthru
          _
      $region24: #{tpu_custom_call.1} parent=5 // pred_fallthru
        _
      %p3251 = scmp.le.s32.totalorder 2, %s19
      // Predicated region
      $region75: #{tpu_custom_call.1} parent=5 // pred_check
        %p3252 = pneg %p3251
      $region76: #{tpu_custom_call.1} parent=5 // pred_check_branch
        %3254 = sbr.rel (%p3252) target = $region78
      $region77: #{tpu_custom_call.1} parent=5 // pred_region
        %s3255 = ssub.s32 %s19, 2
        // Predicated region
        $region79: #{tpu_custom_call.1} parent=77 // pred_check
          %p3256 = pneg %p90
        $region80: #{tpu_custom_call.1} parent=77 // pred_check_branch
          %3258 = sbr.rel (%p3256) target = $region82
        $region81: #{tpu_custom_call.1} parent=77 // pred_region
          %s3259 = sand.u32 %s75, 1
          %s3260 = scalar_lea.sflag [#allocation4], %s3259
          %s3261 = sand.u32 %s75, 1
          %s3262 = smul.addr %s3261, 32
          %s3263 = scalar_lea.vmem [#allocation5], %s3262
          %3264 = dma.done %s3260, 512
        $region82: #{tpu_custom_call.1} parent=77 // pred_fallthru
          _
        // Predicated region
        $region83: #{tpu_custom_call.1} parent=77 // pred_check
          %p3265 = pneg %p118
        $region84: #{tpu_custom_call.1} parent=77 // pred_check_branch
          %3267 = sbr.rel (%p3265) target = $region86
        $region85: #{tpu_custom_call.1} parent=77 // pred_region
          %s3268 = sand.u32 %s103, 1
          %s3269 = scalar_lea.sflag [#allocation7], %s3268
          %s3270 = sand.u32 %s103, 1
          %s3271 = smul.addr %s3270, 32
          %s3272 = scalar_lea.vmem [#allocation6], %s3271
          %3273 = dma.done %s3269, 512
        $region86: #{tpu_custom_call.1} parent=77 // pred_fallthru
          _
        // Predicated region
        $region87: #{tpu_custom_call.1} parent=77 // pred_check
          %p3274 = pneg %p146
        $region88: #{tpu_custom_call.1} parent=77 // pred_check_branch
          %3276 = sbr.rel (%p3274) target = $region90
        $region89: #{tpu_custom_call.1} parent=77 // pred_region
          %s3277 = sand.u32 %s131, 1
          %s3278 = sand.u32 %s131, 1
          %s3279 = smul.addr %s3278, 256
          %s3280 = scalar_lea.vmem [#allocation8], %s3279
        $region90: #{tpu_custom_call.1} parent=77 // pred_fallthru
          _
      $region78: #{tpu_custom_call.1} parent=5 // pred_fallthru
        _
    $region6: #{tpu_custom_call.1} parent=1 // loop_footer
      %s23 = sadd.s32 1, %s19
    $region7: #{tpu_custom_call.1} parent=1 // loop_footer_branch
      %18 = sbr.rel target = $region3
    $region8: #{tpu_custom_call.1} parent=1 // loop_exit
      _
    %3281 = vsyncpa [#allocation3], 1
    %s3282 = scalar_lea.sflag [#allocation3], 1
    %3283 = vsyncpa %s3282, 1
    %3284 = vsyncpa [#allocation4], 1
    %s3285 = scalar_lea.sflag [#allocation4], 1
    %3286 = vsyncpa %s3285, 1
    %3287 = vsyncpa [#allocation7], 1
    %s3288 = scalar_lea.sflag [#allocation7], 1
    %3289 = vsyncpa %s3288, 1

</llo_original>
